<compile_context>
chip_gen: v5e
topology: v5e:2x2
jax: 0.10.0
libtpu: 0.0.40
codegen_flags: <defaults>
</compile_context>

<pallas_src>
import functools

import jax
import jax.numpy as jnp
import numpy as np
from jax.experimental import pallas as pl
from jax.experimental.pallas import tpu as pltpu


def _lstm_chunk_kernel(pre_ref, whh_ref, hout_ref, h_sc, c_sc, *,
                       hidden_dim, time_chunk, seq_len, mask_tail, unroll):
    """One grid step = `time_chunk` LSTM timesteps for one batch block.

    pre_ref : [time_chunk, Bb, 4H] f32   pre-computed x @ W_ih^T + bias
    whh_ref : [H, 4H]              bf16  recurrent weight (transposed)
    hout_ref: [Bb, H]              f32   h_T (written on the last chunk only)
    h_sc/c_sc: [Bb, H]             f32   persistent hidden / cell state
    """
    H = hidden_dim
    tc = pl.program_id(1)                       # time-chunk index (sequential)

    @pl.when(tc == 0)
    def _init():
        h_sc[...] = jnp.zeros_like(h_sc)
        c_sc[...] = jnp.zeros_like(c_sc)

    whh = whh_ref[...]                          # hoisted out of the step loop

    def step(s, carry):
        h_prev, c_prev = carry                  # f32 [Bb, H]
        # Recurrent matmul in bf16 with f32 accumulation (MXU); the rest of
        # the cell update stays in f32 (VPU/EUP).
        gates = pre_ref[s] + jnp.dot(h_prev.astype(whh.dtype), whh,
                                     preferred_element_type=jnp.float32)
        i_g = jax.nn.sigmoid(gates[:, 0 * H:1 * H])
        f_g = jax.nn.sigmoid(gates[:, 1 * H:2 * H])
        g_g = jnp.tanh(gates[:, 2 * H:3 * H])
        o_g = jax.nn.sigmoid(gates[:, 3 * H:4 * H])
        c_new = f_g * c_prev + i_g * g_g
        h_new = o_g * jnp.tanh(c_new)
        if mask_tail:
            # Padded tail of the last chunk: keep state unchanged.
            valid = (tc * time_chunk + s) < seq_len
            h_new = jnp.where(valid, h_new, h_prev)
            c_new = jnp.where(valid, c_new, c_prev)
        return h_new, c_new

    h_f, c_f = jax.lax.fori_loop(0, time_chunk, step,
                                 (h_sc[...], c_sc[...]), unroll=unroll)
    h_sc[...] = h_f
    c_sc[...] = c_f

    @pl.when(tc == pl.num_programs(1) - 1)
    def _final():
        hout_ref[...] = h_f


def map_rnn_forward(x_btd, params, *, time_chunk=128, batch_block=None):
    """Forward pass of MapRNN.  x_btd: [B, T, D] float32 (batch_first)."""
    B, T, D = x_btd.shape
    H = params["whh_t"].shape[0]

    Bb = B if batch_block is None else batch_block
    assert B % Bb == 0

    Tc = min(time_chunk, T)
    n_chunks = pl.cdiv(T, Tc)
    T_pad = n_chunks * Tc

    # ---- hoisted input projection: one big matmul, time-major output ------
    # pre_gates[t, b, :] = x[b, t, :] @ W_ih^T + (b_ih + b_hh)
    # (no explicit transpose of x is materialized; XLA fuses the layout)
    pre_gates = jnp.einsum("btd,dg->tbg", x_btd, params["wih_t"]) + params["b"]
    if T_pad != T:
        pre_gates = jnp.pad(pre_gates, ((0, T_pad - T), (0, 0), (0, 0)))

    whh_bf16 = params["whh_t"].astype(jnp.bfloat16)          # [H, 4H]

    kernel = functools.partial(
        _lstm_chunk_kernel,
        hidden_dim=H, time_chunk=Tc, seq_len=T,
        mask_tail=(T_pad != T), unroll=(Tc <= 32))

    h_last = pl.pallas_call(
        kernel,
        out_shape=jax.ShapeDtypeStruct((B, H), jnp.float32),
        grid_spec=pltpu.PrefetchScalarGridSpec(
            num_scalar_prefetch=0,
            grid=(B // Bb, n_chunks),            # sequential time axis last
            in_specs=[
                # pre-gates chunk: [Tc, Bb, 4H]
                pl.BlockSpec((Tc, Bb, 4 * H), lambda bb, tc: (tc, bb, 0)),
                # recurrent weight, constant index map (stays resident)
                pl.BlockSpec((H, 4 * H), lambda bb, tc: (0, 0)),
            ],
            out_specs=pl.BlockSpec((Bb, H), lambda bb, tc: (bb, 0)),
            scratch_shapes=[
                pltpu.VMEM((Bb, H), jnp.float32),   # h state
                pltpu.VMEM((Bb, H), jnp.float32),   # c state
            ],
        ),
        compiler_params=pltpu.CompilerParams(
            dimension_semantics=("parallel", "arbitrary")),
    )(pre_gates, whh_bf16)

    # ---- one-off output projection on the last hidden state (plain XLA) ---
    return h_last @ params["wout_t"] + params["bout"]


def init_params(key, input_dim, hidden_dim):
    """Deterministic init matching PyTorch LSTM/Linear parameter shapes."""
    k = jax.random.split(key, 6)
    s = 1.0 / np.sqrt(hidden_dim)
    w_ih = jax.random.uniform(k[0], (4 * hidden_dim, input_dim),
                              jnp.float32, -s, s)
    w_hh = jax.random.uniform(k[1], (4 * hidden_dim, hidden_dim),
                              jnp.float32, -s, s)
    b_ih = jax.random.uniform(k[2], (4 * hidden_dim,), jnp.float32, -s, s)
    b_hh = jax.random.uniform(k[3], (4 * hidden_dim,), jnp.float32, -s, s)
    w_out = jax.random.uniform(k[4], (input_dim, hidden_dim),
                               jnp.float32, -s, s)
    b_out = jax.random.uniform(k[5], (input_dim,), jnp.float32, -s, s)
    return {
        "wih_t": w_ih.T,                          # [D, 4H]
        "whh_t": w_hh.T,                          # [H, 4H]
        "b": (b_ih + b_hh)[None, :],              # [1, 4H]
        "wout_t": w_out.T,                        # [H, D]
        "bout": b_out[None, :],                   # [1, D]
    }


def map_rnn_reference(x_btd, params):
    """Pure-JAX f32 reference (PyTorch LSTM gate order i, f, g, o)."""
    B, T, D = x_btd.shape
    H = params["whh_t"].shape[0]
    h = jnp.zeros((B, H), jnp.float32)
    c = jnp.zeros((B, H), jnp.float32)

    def step(carry, x_t):
        h, c = carry
        gates = x_t @ params["wih_t"] + h @ params["whh_t"] + params["b"]
        i = jax.nn.sigmoid(gates[:, 0 * H:1 * H])
        f = jax.nn.sigmoid(gates[:, 1 * H:2 * H])
        g = jnp.tanh(gates[:, 2 * H:3 * H])
        o = jax.nn.sigmoid(gates[:, 3 * H:4 * H])
        c_new = f * c + i * g
        h_new = o * jnp.tanh(c_new)
        return (h_new, c_new), None

    (h, c), _ = jax.lax.scan(step, (h, c), jnp.transpose(x_btd, (1, 0, 2)))
    return h @ params["wout_t"] + params["bout"]


if __name__ == "__main__":
    B, T = 2, 8
    input_dim, hidden_dim = 32, 256      # module defaults (H multiple of 128)

    key = jax.random.PRNGKey(0)
    kx, kp = jax.random.split(key)
    x = jax.random.normal(kx, (B, T, input_dim), jnp.float32)
    params = init_params(kp, input_dim, hidden_dim)

    ref = map_rnn_reference(x, params)

    # Single-chunk path (Tc == T).  Relaxed tolerance: W_hh runs in bf16.
    out = jax.block_until_ready(map_rnn_forward(x, params))
    np.testing.assert_allclose(np.asarray(out), np.asarray(ref),
                               rtol=2e-2, atol=2e-2)

    # Multi-chunk path with a ragged, masked tail (Tc=3 -> 3 chunks, T_pad=9).
    out2 = jax.block_until_ready(map_rnn_forward(x, params, time_chunk=3))
    np.testing.assert_allclose(np.asarray(out2), np.asarray(ref),
                               rtol=2e-2, atol=2e-2)

    print("KERNEL_OK")
</pallas_src>

<mosaic_0001>
module attributes {stable_mosaic.version = 11 : i64} {
  func.func @_lstm_chunk_kernel(%arg0: i32, %arg1: i32, %arg2: memref<8x2x1024xf32, #tpu.memory_space<vmem>>, %arg3: memref<256x1024xbf16, #tpu.memory_space<vmem>>, %arg4: memref<2x256xf32, #tpu.memory_space<vmem>>, %arg5: memref<2x256xf32, #tpu.memory_space<vmem>>, %arg6: memref<2x256xf32, #tpu.memory_space<vmem>>) attributes {dimension_semantics = [#tpu.dimension_semantics<parallel>, #tpu.dimension_semantics<arbitrary>], iteration_bounds = array<i64: 1, 1>, scalar_prefetch = 0 : i64, scratch_operands = 2 : i64, tpu.core_type = #tpu.core_type<tc>, window_params = [{transform_indices = @transform_0, window_bounds = array<i64: 8, 2, 1024>}, {pipeline_mode = #tpu.pipeline_mode<synchronous>, transform_indices = @transform_1, window_bounds = array<i64: 256, 1024>}, {transform_indices = @transform_2, window_bounds = array<i64: 2, 256>}]} {
    %c0_i32 = arith.constant 0 : i32
    %0 = arith.cmpi eq, %arg1, %c0_i32 : i32
    %1 = arith.extui %0 : i1 to i32
    %c0_i32_0 = arith.constant 0 : i32
    %2 = arith.cmpi ne, %1, %c0_i32_0 : i32
    scf.if %2 {
      %cst_60 = arith.constant 0.000000e+00 : f32
      %259 = vector.broadcast %cst_60 : f32 to vector<2x256xf32>
      %c0_61 = arith.constant 0 : index
      %c0_62 = arith.constant 0 : index
      %260 = vector.load %arg5[%c0_61, %c0_62] : memref<2x256xf32, #tpu.memory_space<vmem>>, vector<2x256xf32>
      tpu.vector_store %arg5[%c0_61, %c0_62], %259 {strides = array<i32>} : memref<2x256xf32, #tpu.memory_space<vmem>>, vector<2x256xf32>,
      %cst_63 = arith.constant 0.000000e+00 : f32
      %261 = vector.broadcast %cst_63 : f32 to vector<2x256xf32>
      %c0_64 = arith.constant 0 : index
      %c0_65 = arith.constant 0 : index
      %262 = vector.load %arg6[%c0_64, %c0_65] : memref<2x256xf32, #tpu.memory_space<vmem>>, vector<2x256xf32>
      tpu.vector_store %arg6[%c0_64, %c0_65], %261 {strides = array<i32>} : memref<2x256xf32, #tpu.memory_space<vmem>>, vector<2x256xf32>,
    } else {
    }
    %c0 = arith.constant 0 : index
    %c0_1 = arith.constant 0 : index
    %3 = vector.load %arg3[%c0, %c0_1] : memref<256x1024xbf16, #tpu.memory_space<vmem>>, vector<256x1024xbf16>
    %c0_2 = arith.constant 0 : index
    %c0_3 = arith.constant 0 : index
    %4 = vector.load %arg5[%c0_2, %c0_3] : memref<2x256xf32, #tpu.memory_space<vmem>>, vector<2x256xf32>
    %c0_4 = arith.constant 0 : index
    %c0_5 = arith.constant 0 : index
    %5 = vector.load %arg6[%c0_4, %c0_5] : memref<2x256xf32, #tpu.memory_space<vmem>>, vector<2x256xf32>
    %c0_i32_6 = arith.constant 0 : i32
    %6 = arith.index_cast %c0_i32_6 : i32 to index
    %c0_7 = arith.constant 0 : index
    %c0_8 = arith.constant 0 : index
    %7 = vector.load %arg2[%6, %c0_7, %c0_8] : memref<8x2x1024xf32, #tpu.memory_space<vmem>>, vector<1x2x1024xf32>
    %8 = vector.shape_cast %7 : vector<1x2x1024xf32> to vector<2x1024xf32>
    %9 = arith.truncf %4 : vector<2x256xf32> to vector<2x256xbf16>
    %cst = arith.constant dense<0.000000e+00> : vector<2x1024xf32>
    %10 = tpu.matmul %9, %3, %cst {dimension_numbers = #tpu.dot_dimension_numbers<[1], [0], [0], [1], [0, 0, 1, 1], [], []>} : vector<2x256xbf16>, vector<256x1024xbf16>, vector<2x1024xf32> -> vector<2x1024xf32>
    %11 = arith.addf %8, %10 : vector<2x1024xf32>
    %12 = vector.extract_strided_slice %11 {offsets = [0, 0], sizes = [2, 256], strides = [1, 1]} : vector<2x1024xf32> to vector<2x256xf32>
    %13 = arith.negf %12 : vector<2x256xf32>
    %14 = math.exp %13 : vector<2x256xf32>
    %cst_9 = arith.constant 1.000000e+00 : f32
    %15 = vector.broadcast %cst_9 : f32 to vector<2x256xf32>
    %16 = arith.addf %15, %14 : vector<2x256xf32>
    %17 = arith.divf %15, %16 : vector<2x256xf32>
    %18 = vector.extract_strided_slice %11 {offsets = [0, 256], sizes = [2, 256], strides = [1, 1]} : vector<2x1024xf32> to vector<2x256xf32>
    %19 = arith.negf %18 : vector<2x256xf32>
    %20 = math.exp %19 : vector<2x256xf32>
    %cst_10 = arith.constant 1.000000e+00 : f32
    %21 = vector.broadcast %cst_10 : f32 to vector<2x256xf32>
    %22 = arith.addf %21, %20 : vector<2x256xf32>
    %23 = arith.divf %21, %22 : vector<2x256xf32>
    %24 = vector.extract_strided_slice %11 {offsets = [0, 512], sizes = [2, 256], strides = [1, 1]} : vector<2x1024xf32> to vector<2x256xf32>
    %25 = math.tanh %24 : vector<2x256xf32>
    %26 = vector.extract_strided_slice %11 {offsets = [0, 768], sizes = [2, 256], strides = [1, 1]} : vector<2x1024xf32> to vector<2x256xf32>
    %27 = arith.negf %26 : vector<2x256xf32>
    %28 = math.exp %27 : vector<2x256xf32>
    %cst_11 = arith.constant 1.000000e+00 : f32
    %29 = vector.broadcast %cst_11 : f32 to vector<2x256xf32>
    %30 = arith.addf %29, %28 : vector<2x256xf32>
    %31 = arith.divf %29, %30 : vector<2x256xf32>
    %32 = arith.mulf %23, %5 : vector<2x256xf32>
    %33 = arith.mulf %17, %25 : vector<2x256xf32>
    %34 = arith.addf %32, %33 : vector<2x256xf32>
    %35 = math.tanh %34 : vector<2x256xf32>
    %36 = arith.mulf %31, %35 : vector<2x256xf32>
    %c1_i32 = arith.constant 1 : i32
    %37 = arith.index_cast %c1_i32 : i32 to index
    %c0_12 = arith.constant 0 : index
    %c0_13 = arith.constant 0 : index
    %38 = vector.load %arg2[%37, %c0_12, %c0_13] : memref<8x2x1024xf32, #tpu.memory_space<vmem>>, vector<1x2x1024xf32>
    %39 = vector.shape_cast %38 : vector<1x2x1024xf32> to vector<2x1024xf32>
    %40 = arith.truncf %36 : vector<2x256xf32> to vector<2x256xbf16>
    %cst_14 = arith.constant dense<0.000000e+00> : vector<2x1024xf32>
    %41 = tpu.matmul %40, %3, %cst_14 {dimension_numbers = #tpu.dot_dimension_numbers<[1], [0], [0], [1], [0, 0, 1, 1], [], []>} : vector<2x256xbf16>, vector<256x1024xbf16>, vector<2x1024xf32> -> vector<2x1024xf32>
    %42 = arith.addf %39, %41 : vector<2x1024xf32>
    %43 = vector.extract_strided_slice %42 {offsets = [0, 0], sizes = [2, 256], strides = [1, 1]} : vector<2x1024xf32> to vector<2x256xf32>
    %44 = arith.negf %43 : vector<2x256xf32>
    %45 = math.exp %44 : vector<2x256xf32>
    %cst_15 = arith.constant 1.000000e+00 : f32
    %46 = vector.broadcast %cst_15 : f32 to vector<2x256xf32>
    %47 = arith.addf %46, %45 : vector<2x256xf32>
    %48 = arith.divf %46, %47 : vector<2x256xf32>
    %49 = vector.extract_strided_slice %42 {offsets = [0, 256], sizes = [2, 256], strides = [1, 1]} : vector<2x1024xf32> to vector<2x256xf32>
    %50 = arith.negf %49 : vector<2x256xf32>
    %51 = math.exp %50 : vector<2x256xf32>
    %cst_16 = arith.constant 1.000000e+00 : f32
    %52 = vector.broadcast %cst_16 : f32 to vector<2x256xf32>
    %53 = arith.addf %52, %51 : vector<2x256xf32>
    %54 = arith.divf %52, %53 : vector<2x256xf32>
    %55 = vector.extract_strided_slice %42 {offsets = [0, 512], sizes = [2, 256], strides = [1, 1]} : vector<2x1024xf32> to vector<2x256xf32>
    %56 = math.tanh %55 : vector<2x256xf32>
    %57 = vector.extract_strided_slice %42 {offsets = [0, 768], sizes = [2, 256], strides = [1, 1]} : vector<2x1024xf32> to vector<2x256xf32>
    %58 = arith.negf %57 : vector<2x256xf32>
    %59 = math.exp %58 : vector<2x256xf32>
    %cst_17 = arith.constant 1.000000e+00 : f32
    %60 = vector.broadcast %cst_17 : f32 to vector<2x256xf32>
    %61 = arith.addf %60, %59 : vector<2x256xf32>
    %62 = arith.divf %60, %61 : vector<2x256xf32>
    %63 = arith.mulf %54, %34 : vector<2x256xf32>
    %64 = arith.mulf %48, %56 : vector<2x256xf32>
    %65 = arith.addf %63, %64 : vector<2x256xf32>
    %66 = math.tanh %65 : vector<2x256xf32>
    %67 = arith.mulf %62, %66 : vector<2x256xf32>
    %c2_i32 = arith.constant 2 : i32
    %68 = arith.index_cast %c2_i32 : i32 to index
    %c0_18 = arith.constant 0 : index
    %c0_19 = arith.constant 0 : index
    %69 = vector.load %arg2[%68, %c0_18, %c0_19] : memref<8x2x1024xf32, #tpu.memory_space<vmem>>, vector<1x2x1024xf32>
    %70 = vector.shape_cast %69 : vector<1x2x1024xf32> to vector<2x1024xf32>
    %71 = arith.truncf %67 : vector<2x256xf32> to vector<2x256xbf16>
    %cst_20 = arith.constant dense<0.000000e+00> : vector<2x1024xf32>
    %72 = tpu.matmul %71, %3, %cst_20 {dimension_numbers = #tpu.dot_dimension_numbers<[1], [0], [0], [1], [0, 0, 1, 1], [], []>} : vector<2x256xbf16>, vector<256x1024xbf16>, vector<2x1024xf32> -> vector<2x1024xf32>
    %73 = arith.addf %70, %72 : vector<2x1024xf32>
    %74 = vector.extract_strided_slice %73 {offsets = [0, 0], sizes = [2, 256], strides = [1, 1]} : vector<2x1024xf32> to vector<2x256xf32>
    %75 = arith.negf %74 : vector<2x256xf32>
    %76 = math.exp %75 : vector<2x256xf32>
    %cst_21 = arith.constant 1.000000e+00 : f32
    %77 = vector.broadcast %cst_21 : f32 to vector<2x256xf32>
    %78 = arith.addf %77, %76 : vector<2x256xf32>
    %79 = arith.divf %77, %78 : vector<2x256xf32>
    %80 = vector.extract_strided_slice %73 {offsets = [0, 256], sizes = [2, 256], strides = [1, 1]} : vector<2x1024xf32> to vector<2x256xf32>
    %81 = arith.negf %80 : vector<2x256xf32>
    %82 = math.exp %81 : vector<2x256xf32>
    %cst_22 = arith.constant 1.000000e+00 : f32
    %83 = vector.broadcast %cst_22 : f32 to vector<2x256xf32>
    %84 = arith.addf %83, %82 : vector<2x256xf32>
    %85 = arith.divf %83, %84 : vector<2x256xf32>
    %86 = vector.extract_strided_slice %73 {offsets = [0, 512], sizes = [2, 256], strides = [1, 1]} : vector<2x1024xf32> to vector<2x256xf32>
    %87 = math.tanh %86 : vector<2x256xf32>
    %88 = vector.extract_strided_slice %73 {offsets = [0, 768], sizes = [2, 256], strides = [1, 1]} : vector<2x1024xf32> to vector<2x256xf32>
    %89 = arith.negf %88 : vector<2x256xf32>
    %90 = math.exp %89 : vector<2x256xf32>
    %cst_23 = arith.constant 1.000000e+00 : f32
    %91 = vector.broadcast %cst_23 : f32 to vector<2x256xf32>
    %92 = arith.addf %91, %90 : vector<2x256xf32>
    %93 = arith.divf %91, %92 : vector<2x256xf32>
    %94 = arith.mulf %85, %65 : vector<2x256xf32>
    %95 = arith.mulf %79, %87 : vector<2x256xf32>
    %96 = arith.addf %94, %95 : vector<2x256xf32>
    %97 = math.tanh %96 : vector<2x256xf32>
    %98 = arith.mulf %93, %97 : vector<2x256xf32>
    %c3_i32 = arith.constant 3 : i32
    %99 = arith.index_cast %c3_i32 : i32 to index
    %c0_24 = arith.constant 0 : index
    %c0_25 = arith.constant 0 : index
    %100 = vector.load %arg2[%99, %c0_24, %c0_25] : memref<8x2x1024xf32, #tpu.memory_space<vmem>>, vector<1x2x1024xf32>
    %101 = vector.shape_cast %100 : vector<1x2x1024xf32> to vector<2x1024xf32>
    %102 = arith.truncf %98 : vector<2x256xf32> to vector<2x256xbf16>
    %cst_26 = arith.constant dense<0.000000e+00> : vector<2x1024xf32>
    %103 = tpu.matmul %102, %3, %cst_26 {dimension_numbers = #tpu.dot_dimension_numbers<[1], [0], [0], [1], [0, 0, 1, 1], [], []>} : vector<2x256xbf16>, vector<256x1024xbf16>, vector<2x1024xf32> -> vector<2x1024xf32>
    %104 = arith.addf %101, %103 : vector<2x1024xf32>
    %105 = vector.extract_strided_slice %104 {offsets = [0, 0], sizes = [2, 256], strides = [1, 1]} : vector<2x1024xf32> to vector<2x256xf32>
    %106 = arith.negf %105 : vector<2x256xf32>
    %107 = math.exp %106 : vector<2x256xf32>
    %cst_27 = arith.constant 1.000000e+00 : f32
    %108 = vector.broadcast %cst_27 : f32 to vector<2x256xf32>
    %109 = arith.addf %108, %107 : vector<2x256xf32>
    %110 = arith.divf %108, %109 : vector<2x256xf32>
    %111 = vector.extract_strided_slice %104 {offsets = [0, 256], sizes = [2, 256], strides = [1, 1]} : vector<2x1024xf32> to vector<2x256xf32>
    %112 = arith.negf %111 : vector<2x256xf32>
    %113 = math.exp %112 : vector<2x256xf32>
    %cst_28 = arith.constant 1.000000e+00 : f32
    %114 = vector.broadcast %cst_28 : f32 to vector<2x256xf32>
    %115 = arith.addf %114, %113 : vector<2x256xf32>
    %116 = arith.divf %114, %115 : vector<2x256xf32>
    %117 = vector.extract_strided_slice %104 {offsets = [0, 512], sizes = [2, 256], strides = [1, 1]} : vector<2x1024xf32> to vector<2x256xf32>
    %118 = math.tanh %117 : vector<2x256xf32>
    %119 = vector.extract_strided_slice %104 {offsets = [0, 768], sizes = [2, 256], strides = [1, 1]} : vector<2x1024xf32> to vector<2x256xf32>
    %120 = arith.negf %119 : vector<2x256xf32>
    %121 = math.exp %120 : vector<2x256xf32>
    %cst_29 = arith.constant 1.000000e+00 : f32
    %122 = vector.broadcast %cst_29 : f32 to vector<2x256xf32>
    %123 = arith.addf %122, %121 : vector<2x256xf32>
    %124 = arith.divf %122, %123 : vector<2x256xf32>
    %125 = arith.mulf %116, %96 : vector<2x256xf32>
    %126 = arith.mulf %110, %118 : vector<2x256xf32>
    %127 = arith.addf %125, %126 : vector<2x256xf32>
    %128 = math.tanh %127 : vector<2x256xf32>
    %129 = arith.mulf %124, %128 : vector<2x256xf32>
    %c4_i32 = arith.constant 4 : i32
    %130 = arith.index_cast %c4_i32 : i32 to index
    %c0_30 = arith.constant 0 : index
    %c0_31 = arith.constant 0 : index
    %131 = vector.load %arg2[%130, %c0_30, %c0_31] : memref<8x2x1024xf32, #tpu.memory_space<vmem>>, vector<1x2x1024xf32>
    %132 = vector.shape_cast %131 : vector<1x2x1024xf32> to vector<2x1024xf32>
    %133 = arith.truncf %129 : vector<2x256xf32> to vector<2x256xbf16>
    %cst_32 = arith.constant dense<0.000000e+00> : vector<2x1024xf32>
    %134 = tpu.matmul %133, %3, %cst_32 {dimension_numbers = #tpu.dot_dimension_numbers<[1], [0], [0], [1], [0, 0, 1, 1], [], []>} : vector<2x256xbf16>, vector<256x1024xbf16>, vector<2x1024xf32> -> vector<2x1024xf32>
    %135 = arith.addf %132, %134 : vector<2x1024xf32>
    %136 = vector.extract_strided_slice %135 {offsets = [0, 0], sizes = [2, 256], strides = [1, 1]} : vector<2x1024xf32> to vector<2x256xf32>
    %137 = arith.negf %136 : vector<2x256xf32>
    %138 = math.exp %137 : vector<2x256xf32>
    %cst_33 = arith.constant 1.000000e+00 : f32
    %139 = vector.broadcast %cst_33 : f32 to vector<2x256xf32>
    %140 = arith.addf %139, %138 : vector<2x256xf32>
    %141 = arith.divf %139, %140 : vector<2x256xf32>
    %142 = vector.extract_strided_slice %135 {offsets = [0, 256], sizes = [2, 256], strides = [1, 1]} : vector<2x1024xf32> to vector<2x256xf32>
    %143 = arith.negf %142 : vector<2x256xf32>
    %144 = math.exp %143 : vector<2x256xf32>
    %cst_34 = arith.constant 1.000000e+00 : f32
    %145 = vector.broadcast %cst_34 : f32 to vector<2x256xf32>
    %146 = arith.addf %145, %144 : vector<2x256xf32>
    %147 = arith.divf %145, %146 : vector<2x256xf32>
    %148 = vector.extract_strided_slice %135 {offsets = [0, 512], sizes = [2, 256], strides = [1, 1]} : vector<2x1024xf32> to vector<2x256xf32>
    %149 = math.tanh %148 : vector<2x256xf32>
    %150 = vector.extract_strided_slice %135 {offsets = [0, 768], sizes = [2, 256], strides = [1, 1]} : vector<2x1024xf32> to vector<2x256xf32>
    %151 = arith.negf %150 : vector<2x256xf32>
    %152 = math.exp %151 : vector<2x256xf32>
    %cst_35 = arith.constant 1.000000e+00 : f32
    %153 = vector.broadcast %cst_35 : f32 to vector<2x256xf32>
    %154 = arith.addf %153, %152 : vector<2x256xf32>
    %155 = arith.divf %153, %154 : vector<2x256xf32>
    %156 = arith.mulf %147, %127 : vector<2x256xf32>
    %157 = arith.mulf %141, %149 : vector<2x256xf32>
    %158 = arith.addf %156, %157 : vector<2x256xf32>
    %159 = math.tanh %158 : vector<2x256xf32>
    %160 = arith.mulf %155, %159 : vector<2x256xf32>
    %c5_i32 = arith.constant 5 : i32
    %161 = arith.index_cast %c5_i32 : i32 to index
    %c0_36 = arith.constant 0 : index
    %c0_37 = arith.constant 0 : index
    %162 = vector.load %arg2[%161, %c0_36, %c0_37] : memref<8x2x1024xf32, #tpu.memory_space<vmem>>, vector<1x2x1024xf32>
    %163 = vector.shape_cast %162 : vector<1x2x1024xf32> to vector<2x1024xf32>
    %164 = arith.truncf %160 : vector<2x256xf32> to vector<2x256xbf16>
    %cst_38 = arith.constant dense<0.000000e+00> : vector<2x1024xf32>
    %165 = tpu.matmul %164, %3, %cst_38 {dimension_numbers = #tpu.dot_dimension_numbers<[1], [0], [0], [1], [0, 0, 1, 1], [], []>} : vector<2x256xbf16>, vector<256x1024xbf16>, vector<2x1024xf32> -> vector<2x1024xf32>
    %166 = arith.addf %163, %165 : vector<2x1024xf32>
    %167 = vector.extract_strided_slice %166 {offsets = [0, 0], sizes = [2, 256], strides = [1, 1]} : vector<2x1024xf32> to vector<2x256xf32>
    %168 = arith.negf %167 : vector<2x256xf32>
    %169 = math.exp %168 : vector<2x256xf32>
    %cst_39 = arith.constant 1.000000e+00 : f32
    %170 = vector.broadcast %cst_39 : f32 to vector<2x256xf32>
    %171 = arith.addf %170, %169 : vector<2x256xf32>
    %172 = arith.divf %170, %171 : vector<2x256xf32>
    %173 = vector.extract_strided_slice %166 {offsets = [0, 256], sizes = [2, 256], strides = [1, 1]} : vector<2x1024xf32> to vector<2x256xf32>
    %174 = arith.negf %173 : vector<2x256xf32>
    %175 = math.exp %174 : vector<2x256xf32>
    %cst_40 = arith.constant 1.000000e+00 : f32
    %176 = vector.broadcast %cst_40 : f32 to vector<2x256xf32>
    %177 = arith.addf %176, %175 : vector<2x256xf32>
    %178 = arith.divf %176, %177 : vector<2x256xf32>
    %179 = vector.extract_strided_slice %166 {offsets = [0, 512], sizes = [2, 256], strides = [1, 1]} : vector<2x1024xf32> to vector<2x256xf32>
    %180 = math.tanh %179 : vector<2x256xf32>
    %181 = vector.extract_strided_slice %166 {offsets = [0, 768], sizes = [2, 256], strides = [1, 1]} : vector<2x1024xf32> to vector<2x256xf32>
    %182 = arith.negf %181 : vector<2x256xf32>
    %183 = math.exp %182 : vector<2x256xf32>
    %cst_41 = arith.constant 1.000000e+00 : f32
    %184 = vector.broadcast %cst_41 : f32 to vector<2x256xf32>
    %185 = arith.addf %184, %183 : vector<2x256xf32>
    %186 = arith.divf %184, %185 : vector<2x256xf32>
    %187 = arith.mulf %178, %158 : vector<2x256xf32>
    %188 = arith.mulf %172, %180 : vector<2x256xf32>
    %189 = arith.addf %187, %188 : vector<2x256xf32>
    %190 = math.tanh %189 : vector<2x256xf32>
    %191 = arith.mulf %186, %190 : vector<2x256xf32>
    %c6_i32 = arith.constant 6 : i32
    %192 = arith.index_cast %c6_i32 : i32 to index
    %c0_42 = arith.constant 0 : index
    %c0_43 = arith.constant 0 : index
    %193 = vector.load %arg2[%192, %c0_42, %c0_43] : memref<8x2x1024xf32, #tpu.memory_space<vmem>>, vector<1x2x1024xf32>
    %194 = vector.shape_cast %193 : vector<1x2x1024xf32> to vector<2x1024xf32>
    %195 = arith.truncf %191 : vector<2x256xf32> to vector<2x256xbf16>
    %cst_44 = arith.constant dense<0.000000e+00> : vector<2x1024xf32>
    %196 = tpu.matmul %195, %3, %cst_44 {dimension_numbers = #tpu.dot_dimension_numbers<[1], [0], [0], [1], [0, 0, 1, 1], [], []>} : vector<2x256xbf16>, vector<256x1024xbf16>, vector<2x1024xf32> -> vector<2x1024xf32>
    %197 = arith.addf %194, %196 : vector<2x1024xf32>
    %198 = vector.extract_strided_slice %197 {offsets = [0, 0], sizes = [2, 256], strides = [1, 1]} : vector<2x1024xf32> to vector<2x256xf32>
    %199 = arith.negf %198 : vector<2x256xf32>
    %200 = math.exp %199 : vector<2x256xf32>
    %cst_45 = arith.constant 1.000000e+00 : f32
    %201 = vector.broadcast %cst_45 : f32 to vector<2x256xf32>
    %202 = arith.addf %201, %200 : vector<2x256xf32>
    %203 = arith.divf %201, %202 : vector<2x256xf32>
    %204 = vector.extract_strided_slice %197 {offsets = [0, 256], sizes = [2, 256], strides = [1, 1]} : vector<2x1024xf32> to vector<2x256xf32>
    %205 = arith.negf %204 : vector<2x256xf32>
    %206 = math.exp %205 : vector<2x256xf32>
    %cst_46 = arith.constant 1.000000e+00 : f32
    %207 = vector.broadcast %cst_46 : f32 to vector<2x256xf32>
    %208 = arith.addf %207, %206 : vector<2x256xf32>
    %209 = arith.divf %207, %208 : vector<2x256xf32>
    %210 = vector.extract_strided_slice %197 {offsets = [0, 512], sizes = [2, 256], strides = [1, 1]} : vector<2x1024xf32> to vector<2x256xf32>
    %211 = math.tanh %210 : vector<2x256xf32>
    %212 = vector.extract_strided_slice %197 {offsets = [0, 768], sizes = [2, 256], strides = [1, 1]} : vector<2x1024xf32> to vector<2x256xf32>
    %213 = arith.negf %212 : vector<2x256xf32>
    %214 = math.exp %213 : vector<2x256xf32>
    %cst_47 = arith.constant 1.000000e+00 : f32
    %215 = vector.broadcast %cst_47 : f32 to vector<2x256xf32>
    %216 = arith.addf %215, %214 : vector<2x256xf32>
    %217 = arith.divf %215, %216 : vector<2x256xf32>
    %218 = arith.mulf %209, %189 : vector<2x256xf32>
    %219 = arith.mulf %203, %211 : vector<2x256xf32>
    %220 = arith.addf %218, %219 : vector<2x256xf32>
    %221 = math.tanh %220 : vector<2x256xf32>
    %222 = arith.mulf %217, %221 : vector<2x256xf32>
    %c7_i32 = arith.constant 7 : i32
    %223 = arith.index_cast %c7_i32 : i32 to index
    %c0_48 = arith.constant 0 : index
    %c0_49 = arith.constant 0 : index
    %224 = vector.load %arg2[%223, %c0_48, %c0_49] : memref<8x2x1024xf32, #tpu.memory_space<vmem>>, vector<1x2x1024xf32>
    %225 = vector.shape_cast %224 : vector<1x2x1024xf32> to vector<2x1024xf32>
    %226 = arith.truncf %222 : vector<2x256xf32> to vector<2x256xbf16>
    %cst_50 = arith.constant dense<0.000000e+00> : vector<2x1024xf32>
    %227 = tpu.matmul %226, %3, %cst_50 {dimension_numbers = #tpu.dot_dimension_numbers<[1], [0], [0], [1], [0, 0, 1, 1], [], []>} : vector<2x256xbf16>, vector<256x1024xbf16>, vector<2x1024xf32> -> vector<2x1024xf32>
    %228 = arith.addf %225, %227 : vector<2x1024xf32>
    %229 = vector.extract_strided_slice %228 {offsets = [0, 0], sizes = [2, 256], strides = [1, 1]} : vector<2x1024xf32> to vector<2x256xf32>
    %230 = arith.negf %229 : vector<2x256xf32>
    %231 = math.exp %230 : vector<2x256xf32>
    %cst_51 = arith.constant 1.000000e+00 : f32
    %232 = vector.broadcast %cst_51 : f32 to vector<2x256xf32>
    %233 = arith.addf %232, %231 : vector<2x256xf32>
    %234 = arith.divf %232, %233 : vector<2x256xf32>
    %235 = vector.extract_strided_slice %228 {offsets = [0, 256], sizes = [2, 256], strides = [1, 1]} : vector<2x1024xf32> to vector<2x256xf32>
    %236 = arith.negf %235 : vector<2x256xf32>
    %237 = math.exp %236 : vector<2x256xf32>
    %cst_52 = arith.constant 1.000000e+00 : f32
    %238 = vector.broadcast %cst_52 : f32 to vector<2x256xf32>
    %239 = arith.addf %238, %237 : vector<2x256xf32>
    %240 = arith.divf %238, %239 : vector<2x256xf32>
    %241 = vector.extract_strided_slice %228 {offsets = [0, 512], sizes = [2, 256], strides = [1, 1]} : vector<2x1024xf32> to vector<2x256xf32>
    %242 = math.tanh %241 : vector<2x256xf32>
    %243 = vector.extract_strided_slice %228 {offsets = [0, 768], sizes = [2, 256], strides = [1, 1]} : vector<2x1024xf32> to vector<2x256xf32>
    %244 = arith.negf %243 : vector<2x256xf32>
    %245 = math.exp %244 : vector<2x256xf32>
    %cst_53 = arith.constant 1.000000e+00 : f32
    %246 = vector.broadcast %cst_53 : f32 to vector<2x256xf32>
    %247 = arith.addf %246, %245 : vector<2x256xf32>
    %248 = arith.divf %246, %247 : vector<2x256xf32>
    %249 = arith.mulf %240, %220 : vector<2x256xf32>
    %250 = arith.mulf %234, %242 : vector<2x256xf32>
    %251 = arith.addf %249, %250 : vector<2x256xf32>
    %252 = math.tanh %251 : vector<2x256xf32>
    %253 = arith.mulf %248, %252 : vector<2x256xf32>
    %c8_i32 = arith.constant 8 : i32
    %c0_54 = arith.constant 0 : index
    %c0_55 = arith.constant 0 : index
    %254 = vector.load %arg5[%c0_54, %c0_55] : memref<2x256xf32, #tpu.memory_space<vmem>>, vector<2x256xf32>
    tpu.vector_store %arg5[%c0_54, %c0_55], %253 {strides = array<i32>} : memref<2x256xf32, #tpu.memory_space<vmem>>, vector<2x256xf32>,
    %c0_56 = arith.constant 0 : index
    %c0_57 = arith.constant 0 : index
    %255 = vector.load %arg6[%c0_56, %c0_57] : memref<2x256xf32, #tpu.memory_space<vmem>>, vector<2x256xf32>
    tpu.vector_store %arg6[%c0_56, %c0_57], %251 {strides = array<i32>} : memref<2x256xf32, #tpu.memory_space<vmem>>, vector<2x256xf32>,
    %c0_i32_58 = arith.constant 0 : i32
    %256 = arith.cmpi eq, %arg1, %c0_i32_58 : i32
    %257 = arith.extui %256 : i1 to i32
    %c0_i32_59 = arith.constant 0 : i32
    %258 = arith.cmpi ne, %257, %c0_i32_59 : i32
    scf.if %258 {
      %c0_60 = arith.constant 0 : index
      %c0_61 = arith.constant 0 : index
      %259 = vector.load %arg4[%c0_60, %c0_61] : memref<2x256xf32, #tpu.memory_space<vmem>>, vector<2x256xf32>
      tpu.vector_store %arg4[%c0_60, %c0_61], %253 {strides = array<i32>} : memref<2x256xf32, #tpu.memory_space<vmem>>, vector<2x256xf32>,
    } else {
    }
    return
  }
  func.func @transform_0(%arg0: i32, %arg1: i32) -> (i32, i32, i32) {
    %c0_i32 = arith.constant 0 : i32
    %c0_i32_0 = arith.constant 0 : i32
    return %arg1, %arg0, %c0_i32 : i32, i32, i32
  }
  func.func @transform_1(%arg0: i32, %arg1: i32) -> (i32, i32) {
    %c0_i32 = arith.constant 0 : i32
    %c0_i32_0 = arith.constant 0 : i32
    %c0_i32_1 = arith.constant 0 : i32
    return %c0_i32, %c0_i32_0 : i32, i32
  }
  func.func @transform_2(%arg0: i32, %arg1: i32) -> (i32, i32) {
    %c0_i32 = arith.constant 0 : i32
    %c0_i32_0 = arith.constant 0 : i32
    return %arg0, %c0_i32 : i32, i32
  }
}

</mosaic_0001>

<llo_original>
// kernel: tpu_custom_call.1
$region0: #{tpu_custom_call.1}
  #allocation0 [shape = 'u32[]', space=smem, size = 0x4, offset = 0x4, fixed_abs, tag = 'smem constant byte address 0x4 - core index']
  #allocation1 [shape = 'u32[72,128]{1,0:T(1,128)}', space=vmem, size = 0x9000, scoped, tag = 'internal scratch']
  #allocation2 [shape = 'f32[2,256]{1,0:T(2,128)}', space=vmem, size = 0x800, scoped, tag = 'scratch operand']
  #allocation3 [shape = 'f32[2,256]{1,0:T(2,128)}', space=vmem, size = 0x800, scoped, tag = 'scratch operand']
  %s0 = inlined_call_operand.hbm [shape: f32[8,2,1024], index: 0, kind: input, shape index: {}]
  %s1 = inlined_call_operand.hbm [shape: bf16[256,1024], index: 1, kind: input, shape index: {}]
  %s2 = inlined_call_operand.hbm [shape: f32[2,256], index: 2, kind: output, shape index: {}]
  %s3 = sld [smem:[#allocation0]]
  $region34: #{tpu_custom_call.1} parent=0
    _
  %s5 = ssub.s32 1, %s3
  %s6 = scalar_select 0, %s5, %s3
  $region1: #{tpu_custom_call.1} parent=0
    #allocation4 [shape = 'u8[65536]{0}', space=vmem, size = 0x10000, scoped, tag = 'input window, operand 0, single buffered']
    #allocation5 [shape = 's32[1]{0}', space=sflag, size = 0x4, scoped, tag = 'scoped memory for tpu_custom_call.1']
    #allocation6 [shape = 's32[1]{0}', space=sflag, size = 0x4, scoped, tag = 'scoped memory for tpu_custom_call.1']
    #allocation7 [shape = 'u8[524288]{0}', space=vmem, size = 0x80000, scoped, tag = 'input window, operand 1, single buffered']
    #allocation8 [shape = 's32[1]{0}', space=sflag, size = 0x4, scoped, tag = 'scoped memory for tpu_custom_call.1']
    #allocation9 [shape = 'u8[2048]{0}', space=vmem, size = 0x800, scoped, tag = 'output window, operand 0, single buffered']
    %7 = vsyncpa [#allocation5], 0
    %8 = vsyncpa [#allocation8], 0
    %9 = vsyncpa [#allocation6], 0
    // Predicated region
    $region2: #{tpu_custom_call.1} parent=1 // pred_check
      _
    $region3: #{tpu_custom_call.1} parent=1 // pred_check_branch
      %11 = sbr.rel (0) target = $region5
    $region4: #{tpu_custom_call.1} parent=1 // pred_region
      %13 = vsyncadd [#allocation5], 0
      %s14 = sshll.u32 %s0, 4
      %s15 = int_to_ptr.hbm [resolvable:$true] %s14
      %s16 = sshll.u32 [#allocation4], 4
      %s17 = int_to_ptr.vmem [resolvable:$true] %s16
      %22 = dma.hbm_to_vmem [thread:$0]  %s15, 2048, %s17, [#allocation5], 256, 256, 16
    $region5: #{tpu_custom_call.1} parent=1 // pred_fallthru
      _
    // Predicated region
    $region6: #{tpu_custom_call.1} parent=1 // pred_check
      _
    $region7: #{tpu_custom_call.1} parent=1 // pred_check_branch
      %24 = sbr.rel (0) target = $region9
    $region8: #{tpu_custom_call.1} parent=1 // pred_region
      %26 = vsyncadd [#allocation8], 0
      %s27 = sshll.u32 %s1, 4
      %s28 = int_to_ptr.hbm [resolvable:$true] %s27
      %s29 = sshll.u32 [#allocation7], 4
      %s30 = int_to_ptr.vmem [resolvable:$true] %s29
      %35 = dma.hbm_to_vmem [thread:$0]  %s28, 16384, %s30, [#allocation8], 512, 512, 32
    $region9: #{tpu_custom_call.1} parent=1 // pred_fallthru
      _
    // Predicated region
    $region10: #{tpu_custom_call.1} parent=1 // pred_check
      _
    $region11: #{tpu_custom_call.1} parent=1 // pred_check_branch
      %37 = sbr.rel (0) target = $region13
    $region12: #{tpu_custom_call.1} parent=1 // pred_region
      %39 = dma.done [#allocation5], 2048
    $region13: #{tpu_custom_call.1} parent=1 // pred_fallthru
      _
    // Predicated region
    $region14: #{tpu_custom_call.1} parent=1 // pred_check
      _
    $region15: #{tpu_custom_call.1} parent=1 // pred_check_branch
      %41 = sbr.rel (0) target = $region17
    $region16: #{tpu_custom_call.1} parent=1 // pred_region
      %43 = dma.done [#allocation8], 16384
    $region17: #{tpu_custom_call.1} parent=1 // pred_fallthru
      _
    %p44 = scmp.eq.s32.totalorder 0, 0
    // Predicated region
    $region18: #{tpu_custom_call.1} parent=1 // pred_check
      %p45 = pneg %p44
    $region19: #{tpu_custom_call.1} parent=1 // pred_check_branch
      %47 = sbr.rel (%p45) target = $region21
    $region20: #{tpu_custom_call.1} parent=1 // pred_region
      %48 = vst [vmem:[#allocation2] sm:$0xf] 0.0
      %49 = vst [vmem:[#allocation3] sm:$0xf] 0.0
    $region21: #{tpu_custom_call.1} parent=1 // pred_fallthru
      _
    %v50 = vld [vmem:[#allocation7] sm:$0xff]
    %v51 = vld [vmem:[#allocation7 + $0x8] sm:$0xff]
    %v52 = vld [vmem:[#allocation7 + $0x10] sm:$0xff]
    %v53 = vld [vmem:[#allocation7 + $0x18] sm:$0xff]
    %v54 = vld [vmem:[#allocation7 + $0x20] sm:$0xff]
    %v55 = vld [vmem:[#allocation7 + $0x28] sm:$0xff]
    %v56 = vld [vmem:[#allocation7 + $0x30] sm:$0xff]
    %v57 = vld [vmem:[#allocation7 + $0x38] sm:$0xff]
    %v58 = vld [vmem:[#allocation7 + $0x40] sm:$0xff]
    %v59 = vld [vmem:[#allocation7 + $0x48] sm:$0xff]
    %v60 = vld [vmem:[#allocation7 + $0x50] sm:$0xff]
    %v61 = vld [vmem:[#allocation7 + $0x58] sm:$0xff]
    %v62 = vld [vmem:[#allocation7 + $0x60] sm:$0xff]
    %v63 = vld [vmem:[#allocation7 + $0x68] sm:$0xff]
    %v64 = vld [vmem:[#allocation7 + $0x70] sm:$0xff]
    %v65 = vld [vmem:[#allocation7 + $0x78] sm:$0xff]
    %v66 = vld [vmem:[#allocation7 + $0x80] sm:$0xff]
    %v67 = vld [vmem:[#allocation7 + $0x88] sm:$0xff]
    %v68 = vld [vmem:[#allocation7 + $0x90] sm:$0xff]
    %v69 = vld [vmem:[#allocation7 + $0x98] sm:$0xff]
    %v70 = vld [vmem:[#allocation7 + $0xa0] sm:$0xff]
    %v71 = vld [vmem:[#allocation7 + $0xa8] sm:$0xff]
    %v72 = vld [vmem:[#allocation7 + $0xb0] sm:$0xff]
    %v73 = vld [vmem:[#allocation7 + $0xb8] sm:$0xff]
    %v74 = vld [vmem:[#allocation7 + $0xc0] sm:$0xff]
    %v75 = vld [vmem:[#allocation7 + $0xc8] sm:$0xff]
    %v76 = vld [vmem:[#allocation7 + $0xd0] sm:$0xff]
    %v77 = vld [vmem:[#allocation7 + $0xd8] sm:$0xff]
    %v78 = vld [vmem:[#allocation7 + $0xe0] sm:$0xff]
    %v79 = vld [vmem:[#allocation7 + $0xe8] sm:$0xff]
    %v80 = vld [vmem:[#allocation7 + $0xf0] sm:$0xff]
    %v81 = vld [vmem:[#allocation7 + $0xf8] sm:$0xff]
    %v82 = vld [vmem:[#allocation7 + $0x100] sm:$0xff]
    %v83 = vld [vmem:[#allocation7 + $0x108] sm:$0xff]
    %v84 = vld [vmem:[#allocation7 + $0x110] sm:$0xff]
    %v85 = vld [vmem:[#allocation7 + $0x118] sm:$0xff]
    %v86 = vld [vmem:[#allocation7 + $0x120] sm:$0xff]
    %v87 = vld [vmem:[#allocation7 + $0x128] sm:$0xff]
    %v88 = vld [vmem:[#allocation7 + $0x130] sm:$0xff]
    %v89 = vld [vmem:[#allocation7 + $0x138] sm:$0xff]
    %v90 = vld [vmem:[#allocation7 + $0x140] sm:$0xff]
    %v91 = vld [vmem:[#allocation7 + $0x148] sm:$0xff]
    %v92 = vld [vmem:[#allocation7 + $0x150] sm:$0xff]
    %v93 = vld [vmem:[#allocation7 + $0x158] sm:$0xff]
    %v94 = vld [vmem:[#allocation7 + $0x160] sm:$0xff]
    %v95 = vld [vmem:[#allocation7 + $0x168] sm:$0xff]
    %v96 = vld [vmem:[#allocation7 + $0x170] sm:$0xff]
    %v97 = vld [vmem:[#allocation7 + $0x178] sm:$0xff]
    %v98 = vld [vmem:[#allocation7 + $0x180] sm:$0xff]
    %v99 = vld [vmem:[#allocation7 + $0x188] sm:$0xff]
    %v100 = vld [vmem:[#allocation7 + $0x190] sm:$0xff]
    %v101 = vld [vmem:[#allocation7 + $0x198] sm:$0xff]
    %v102 = vld [vmem:[#allocation7 + $0x1a0] sm:$0xff]
    %v103 = vld [vmem:[#allocation7 + $0x1a8] sm:$0xff]
    %v104 = vld [vmem:[#allocation7 + $0x1b0] sm:$0xff]
    %v105 = vld [vmem:[#allocation7 + $0x1b8] sm:$0xff]
    %v106 = vld [vmem:[#allocation7 + $0x1c0] sm:$0xff]
    %v107 = vld [vmem:[#allocation7 + $0x1c8] sm:$0xff]
    %v108 = vld [vmem:[#allocation7 + $0x1d0] sm:$0xff]
    %v109 = vld [vmem:[#allocation7 + $0x1d8] sm:$0xff]
    %v110 = vld [vmem:[#allocation7 + $0x1e0] sm:$0xff]
    %v111 = vld [vmem:[#allocation7 + $0x1e8] sm:$0xff]
    %v112 = vld [vmem:[#allocation7 + $0x1f0] sm:$0xff]
    %v113 = vld [vmem:[#allocation7 + $0x1f8] sm:$0xff]
    %v114 = vld [vmem:[#allocation7 + $0x200] sm:$0xff]
    %v115 = vld [vmem:[#allocation7 + $0x208] sm:$0xff]
    %v116 = vld [vmem:[#allocation7 + $0x210] sm:$0xff]
    %v117 = vld [vmem:[#allocation7 + $0x218] sm:$0xff]
    %v118 = vld [vmem:[#allocation7 + $0x220] sm:$0xff]
    %v119 = vld [vmem:[#allocation7 + $0x228] sm:$0xff]
    %v120 = vld [vmem:[#allocation7 + $0x230] sm:$0xff]
    %v121 = vld [vmem:[#allocation7 + $0x238] sm:$0xff]
    %v122 = vld [vmem:[#allocation7 + $0x240] sm:$0xff]
    %v123 = vld [vmem:[#allocation7 + $0x248] sm:$0xff]
    %v124 = vld [vmem:[#allocation7 + $0x250] sm:$0xff]
    %v125 = vld [vmem:[#allocation7 + $0x258] sm:$0xff]
    %v126 = vld [vmem:[#allocation7 + $0x260] sm:$0xff]
    %v127 = vld [vmem:[#allocation7 + $0x268] sm:$0xff]
    %v128 = vld [vmem:[#allocation7 + $0x270] sm:$0xff]
    %v129 = vld [vmem:[#allocation7 + $0x278] sm:$0xff]
    %v130 = vld [vmem:[#allocation7 + $0x280] sm:$0xff]
    %v131 = vld [vmem:[#allocation7 + $0x288] sm:$0xff]
    %v132 = vld [vmem:[#allocation7 + $0x290] sm:$0xff]
    %v133 = vld [vmem:[#allocation7 + $0x298] sm:$0xff]
    %v134 = vld [vmem:[#allocation7 + $0x2a0] sm:$0xff]
    %v135 = vld [vmem:[#allocation7 + $0x2a8] sm:$0xff]
    %v136 = vld [vmem:[#allocation7 + $0x2b0] sm:$0xff]
    %v137 = vld [vmem:[#allocation7 + $0x2b8] sm:$0xff]
    %v138 = vld [vmem:[#allocation7 + $0x2c0] sm:$0xff]
    %v139 = vld [vmem:[#allocation7 + $0x2c8] sm:$0xff]
    %v140 = vld [vmem:[#allocation7 + $0x2d0] sm:$0xff]
    %v141 = vld [vmem:[#allocation7 + $0x2d8] sm:$0xff]
    %v142 = vld [vmem:[#allocation7 + $0x2e0] sm:$0xff]
    %v143 = vld [vmem:[#allocation7 + $0x2e8] sm:$0xff]
    %v144 = vld [vmem:[#allocation7 + $0x2f0] sm:$0xff]
    %v145 = vld [vmem:[#allocation7 + $0x2f8] sm:$0xff]
    %v146 = vld [vmem:[#allocation7 + $0x300] sm:$0xff]
    %v147 = vld [vmem:[#allocation7 + $0x308] sm:$0xff]
    %v148 = vld [vmem:[#allocation7 + $0x310] sm:$0xff]
    %v149 = vld [vmem:[#allocation7 + $0x318] sm:$0xff]
    %v150 = vld [vmem:[#allocation7 + $0x320] sm:$0xff]
    %v151 = vld [vmem:[#allocation7 + $0x328] sm:$0xff]
    %v152 = vld [vmem:[#allocation7 + $0x330] sm:$0xff]
    %v153 = vld [vmem:[#allocation7 + $0x338] sm:$0xff]
    %v154 = vld [vmem:[#allocation7 + $0x340] sm:$0xff]
    %v155 = vld [vmem:[#allocation7 + $0x348] sm:$0xff]
    %v156 = vld [vmem:[#allocation7 + $0x350] sm:$0xff]
    %v157 = vld [vmem:[#allocation7 + $0x358] sm:$0xff]
    %v158 = vld [vmem:[#allocation7 + $0x360] sm:$0xff]
    %v159 = vld [vmem:[#allocation7 + $0x368] sm:$0xff]
    %v160 = vld [vmem:[#allocation7 + $0x370] sm:$0xff]
    %v161 = vld [vmem:[#allocation7 + $0x378] sm:$0xff]
    %v162 = vld [vmem:[#allocation7 + $0x380] sm:$0xff]
    %v163 = vld [vmem:[#allocation7 + $0x388] sm:$0xff]
    %v164 = vld [vmem:[#allocation7 + $0x390] sm:$0xff]
    %v165 = vld [vmem:[#allocation7 + $0x398] sm:$0xff]
    %v166 = vld [vmem:[#allocation7 + $0x3a0] sm:$0xff]
    %v167 = vld [vmem:[#allocation7 + $0x3a8] sm:$0xff]
    %v168 = vld [vmem:[#allocation7 + $0x3b0] sm:$0xff]
    %v169 = vld [vmem:[#allocation7 + $0x3b8] sm:$0xff]
    %v170 = vld [vmem:[#allocation7 + $0x3c0] sm:$0xff]
    %v171 = vld [vmem:[#allocation7 + $0x3c8] sm:$0xff]
    %v172 = vld [vmem:[#allocation7 + $0x3d0] sm:$0xff]
    %v173 = vld [vmem:[#allocation7 + $0x3d8] sm:$0xff]
    %v174 = vld [vmem:[#allocation7 + $0x3e0] sm:$0xff]
    %v175 = vld [vmem:[#allocation7 + $0x3e8] sm:$0xff]
    %v176 = vld [vmem:[#allocation7 + $0x3f0] sm:$0xff]
    %v177 = vld [vmem:[#allocation7 + $0x3f8] sm:$0xff]
    %v178 = vld [vmem:[#allocation2] sm:$0xf]
    %v179 = vld [vmem:[#allocation3] sm:$0xf]
    %v180 = vld [vmem:[#allocation4] sm:$0xff]
    %v181 = vld [vmem:[#allocation4 + $0x8] sm:$0xff]
    %183 = vst [vmem:[#allocation1] ss:$4 sm:$0xff] %v178
    %v184 = vld.sshfl [vmem:[#allocation1] sm:$0xff pattern:$0x73625140]
    %v185 = vld.sshfl [vmem:[#allocation1 + $0x8] sm:$0xff pattern:$0x73625140]
    %v188 = vpack.c.bf16 %v184, %v184
    %v189 = vpack.c.bf16 %v185, %v185
    %v318 = vunpack.c.l.b16 %v50
    %v319 = vunpack.c.h.b16 %v50
    %v320 = vunpack.c.l.b16 %v51
    %v321 = vunpack.c.h.b16 %v51
    %v322 = vunpack.c.l.b16 %v52
    %v323 = vunpack.c.h.b16 %v52
    %v324 = vunpack.c.l.b16 %v53
    %v325 = vunpack.c.h.b16 %v53
    %v326 = vunpack.c.l.b16 %v54
    %v327 = vunpack.c.h.b16 %v54
    %v328 = vunpack.c.l.b16 %v55
    %v329 = vunpack.c.h.b16 %v55
    %v330 = vunpack.c.l.b16 %v56
    %v331 = vunpack.c.h.b16 %v56
    %v332 = vunpack.c.l.b16 %v57
    %v333 = vunpack.c.h.b16 %v57
    %v334 = vunpack.c.l.b16 %v58
    %v335 = vunpack.c.h.b16 %v58
    %v336 = vunpack.c.l.b16 %v59
    %v337 = vunpack.c.h.b16 %v59
    %v338 = vunpack.c.l.b16 %v60
    %v339 = vunpack.c.h.b16 %v60
    %v340 = vunpack.c.l.b16 %v61
    %v341 = vunpack.c.h.b16 %v61
    %v342 = vunpack.c.l.b16 %v62
    %v343 = vunpack.c.h.b16 %v62
    %v344 = vunpack.c.l.b16 %v63
    %v345 = vunpack.c.h.b16 %v63
    %v346 = vunpack.c.l.b16 %v64
    %v347 = vunpack.c.h.b16 %v64
    %v348 = vunpack.c.l.b16 %v65
    %v349 = vunpack.c.h.b16 %v65
    %v350 = vunpack.c.l.b16 %v66
    %v351 = vunpack.c.h.b16 %v66
    %v352 = vunpack.c.l.b16 %v67
    %v353 = vunpack.c.h.b16 %v67
    %v354 = vunpack.c.l.b16 %v68
    %v355 = vunpack.c.h.b16 %v68
    %v356 = vunpack.c.l.b16 %v69
    %v357 = vunpack.c.h.b16 %v69
    %v358 = vunpack.c.l.b16 %v70
    %v359 = vunpack.c.h.b16 %v70
    %v360 = vunpack.c.l.b16 %v71
    %v361 = vunpack.c.h.b16 %v71
    %v362 = vunpack.c.l.b16 %v72
    %v363 = vunpack.c.h.b16 %v72
    %v364 = vunpack.c.l.b16 %v73
    %v365 = vunpack.c.h.b16 %v73
    %v366 = vunpack.c.l.b16 %v74
    %v367 = vunpack.c.h.b16 %v74
    %v368 = vunpack.c.l.b16 %v75
    %v369 = vunpack.c.h.b16 %v75
    %v370 = vunpack.c.l.b16 %v76
    %v371 = vunpack.c.h.b16 %v76
    %v372 = vunpack.c.l.b16 %v77
    %v373 = vunpack.c.h.b16 %v77
    %v374 = vunpack.c.l.b16 %v78
    %v375 = vunpack.c.h.b16 %v78
    %v376 = vunpack.c.l.b16 %v79
    %v377 = vunpack.c.h.b16 %v79
    %v378 = vunpack.c.l.b16 %v80
    %v379 = vunpack.c.h.b16 %v80
    %v380 = vunpack.c.l.b16 %v81
    %v381 = vunpack.c.h.b16 %v81
    %v382 = vunpack.c.l.b16 %v82
    %v383 = vunpack.c.h.b16 %v82
    %v384 = vunpack.c.l.b16 %v83
    %v385 = vunpack.c.h.b16 %v83
    %v386 = vunpack.c.l.b16 %v84
    %v387 = vunpack.c.h.b16 %v84
    %v388 = vunpack.c.l.b16 %v85
    %v389 = vunpack.c.h.b16 %v85
    %v390 = vunpack.c.l.b16 %v86
    %v391 = vunpack.c.h.b16 %v86
    %v392 = vunpack.c.l.b16 %v87
    %v393 = vunpack.c.h.b16 %v87
    %v394 = vunpack.c.l.b16 %v88
    %v395 = vunpack.c.h.b16 %v88
    %v396 = vunpack.c.l.b16 %v89
    %v397 = vunpack.c.h.b16 %v89
    %v398 = vunpack.c.l.b16 %v90
    %v399 = vunpack.c.h.b16 %v90
    %v400 = vunpack.c.l.b16 %v91
    %v401 = vunpack.c.h.b16 %v91
    %v402 = vunpack.c.l.b16 %v92
    %v403 = vunpack.c.h.b16 %v92
    %v404 = vunpack.c.l.b16 %v93
    %v405 = vunpack.c.h.b16 %v93
    %v406 = vunpack.c.l.b16 %v94
    %v407 = vunpack.c.h.b16 %v94
    %v408 = vunpack.c.l.b16 %v95
    %v409 = vunpack.c.h.b16 %v95
    %v410 = vunpack.c.l.b16 %v96
    %v411 = vunpack.c.h.b16 %v96
    %v412 = vunpack.c.l.b16 %v97
    %v413 = vunpack.c.h.b16 %v97
    %v414 = vunpack.c.l.b16 %v98
    %v415 = vunpack.c.h.b16 %v98
    %v416 = vunpack.c.l.b16 %v99
    %v417 = vunpack.c.h.b16 %v99
    %v418 = vunpack.c.l.b16 %v100
    %v419 = vunpack.c.h.b16 %v100
    %v420 = vunpack.c.l.b16 %v101
    %v421 = vunpack.c.h.b16 %v101
    %v422 = vunpack.c.l.b16 %v102
    %v423 = vunpack.c.h.b16 %v102
    %v424 = vunpack.c.l.b16 %v103
    %v425 = vunpack.c.h.b16 %v103
    %v426 = vunpack.c.l.b16 %v104
    %v427 = vunpack.c.h.b16 %v104
    %v428 = vunpack.c.l.b16 %v105
    %v429 = vunpack.c.h.b16 %v105
    %v430 = vunpack.c.l.b16 %v106
    %v431 = vunpack.c.h.b16 %v106
    %v432 = vunpack.c.l.b16 %v107
    %v433 = vunpack.c.h.b16 %v107
    %v434 = vunpack.c.l.b16 %v108
    %v435 = vunpack.c.h.b16 %v108
    %v436 = vunpack.c.l.b16 %v109
    %v437 = vunpack.c.h.b16 %v109
    %v438 = vunpack.c.l.b16 %v110
    %v439 = vunpack.c.h.b16 %v110
    %v440 = vunpack.c.l.b16 %v111
    %v441 = vunpack.c.h.b16 %v111
    %v442 = vunpack.c.l.b16 %v112
    %v443 = vunpack.c.h.b16 %v112
    %v444 = vunpack.c.l.b16 %v113
    %v445 = vunpack.c.h.b16 %v113
    %v446 = vunpack.c.l.b16 %v114
    %v447 = vunpack.c.h.b16 %v114
    %v448 = vunpack.c.l.b16 %v115
    %v449 = vunpack.c.h.b16 %v115
    %v450 = vunpack.c.l.b16 %v116
    %v451 = vunpack.c.h.b16 %v116
    %v452 = vunpack.c.l.b16 %v117
    %v453 = vunpack.c.h.b16 %v117
    %v454 = vunpack.c.l.b16 %v118
    %v455 = vunpack.c.h.b16 %v118
    %v456 = vunpack.c.l.b16 %v119
    %v457 = vunpack.c.h.b16 %v119
    %v458 = vunpack.c.l.b16 %v120
    %v459 = vunpack.c.h.b16 %v120
    %v460 = vunpack.c.l.b16 %v121
    %v461 = vunpack.c.h.b16 %v121
    %v462 = vunpack.c.l.b16 %v122
    %v463 = vunpack.c.h.b16 %v122
    %v464 = vunpack.c.l.b16 %v123
    %v465 = vunpack.c.h.b16 %v123
    %v466 = vunpack.c.l.b16 %v124
    %v467 = vunpack.c.h.b16 %v124
    %v468 = vunpack.c.l.b16 %v125
    %v469 = vunpack.c.h.b16 %v125
    %v470 = vunpack.c.l.b16 %v126
    %v471 = vunpack.c.h.b16 %v126
    %v472 = vunpack.c.l.b16 %v127
    %v473 = vunpack.c.h.b16 %v127
    %v474 = vunpack.c.l.b16 %v128
    %v475 = vunpack.c.h.b16 %v128
    %v476 = vunpack.c.l.b16 %v129
    %v477 = vunpack.c.h.b16 %v129
    %v478 = vunpack.c.l.b16 %v130
    %v479 = vunpack.c.h.b16 %v130
    %v480 = vunpack.c.l.b16 %v131
    %v481 = vunpack.c.h.b16 %v131
    %v482 = vunpack.c.l.b16 %v132
    %v483 = vunpack.c.h.b16 %v132
    %v484 = vunpack.c.l.b16 %v133
    %v485 = vunpack.c.h.b16 %v133
    %v486 = vunpack.c.l.b16 %v134
    %v487 = vunpack.c.h.b16 %v134
    %v488 = vunpack.c.l.b16 %v135
    %v489 = vunpack.c.h.b16 %v135
    %v490 = vunpack.c.l.b16 %v136
    %v491 = vunpack.c.h.b16 %v136
    %v492 = vunpack.c.l.b16 %v137
    %v493 = vunpack.c.h.b16 %v137
    %v494 = vunpack.c.l.b16 %v138
    %v495 = vunpack.c.h.b16 %v138
    %v496 = vunpack.c.l.b16 %v139
    %v497 = vunpack.c.h.b16 %v139
    %v498 = vunpack.c.l.b16 %v140
    %v499 = vunpack.c.h.b16 %v140
    %v500 = vunpack.c.l.b16 %v141
    %v501 = vunpack.c.h.b16 %v141
    %v502 = vunpack.c.l.b16 %v142
    %v503 = vunpack.c.h.b16 %v142
    %v504 = vunpack.c.l.b16 %v143
    %v505 = vunpack.c.h.b16 %v143
    %v506 = vunpack.c.l.b16 %v144
    %v507 = vunpack.c.h.b16 %v144
    %v508 = vunpack.c.l.b16 %v145
    %v509 = vunpack.c.h.b16 %v145
    %v510 = vunpack.c.l.b16 %v146
    %v511 = vunpack.c.h.b16 %v146
    %v512 = vunpack.c.l.b16 %v147
    %v513 = vunpack.c.h.b16 %v147
    %v514 = vunpack.c.l.b16 %v148
    %v515 = vunpack.c.h.b16 %v148
    %v516 = vunpack.c.l.b16 %v149
    %v517 = vunpack.c.h.b16 %v149
    %v518 = vunpack.c.l.b16 %v150
    %v519 = vunpack.c.h.b16 %v150
    %v520 = vunpack.c.l.b16 %v151
    %v521 = vunpack.c.h.b16 %v151
    %v522 = vunpack.c.l.b16 %v152
    %v523 = vunpack.c.h.b16 %v152
    %v524 = vunpack.c.l.b16 %v153
    %v525 = vunpack.c.h.b16 %v153
    %v526 = vunpack.c.l.b16 %v154
    %v527 = vunpack.c.h.b16 %v154
    %v528 = vunpack.c.l.b16 %v155
    %v529 = vunpack.c.h.b16 %v155
    %v530 = vunpack.c.l.b16 %v156
    %v531 = vunpack.c.h.b16 %v156
    %v532 = vunpack.c.l.b16 %v157
    %v533 = vunpack.c.h.b16 %v157
    %v534 = vunpack.c.l.b16 %v158
    %v535 = vunpack.c.h.b16 %v158
    %v536 = vunpack.c.l.b16 %v159
    %v537 = vunpack.c.h.b16 %v159
    %v538 = vunpack.c.l.b16 %v160
    %v539 = vunpack.c.h.b16 %v160
    %v540 = vunpack.c.l.b16 %v161
    %v541 = vunpack.c.h.b16 %v161
    %v542 = vunpack.c.l.b16 %v162
    %v543 = vunpack.c.h.b16 %v162
    %v544 = vunpack.c.l.b16 %v163
    %v545 = vunpack.c.h.b16 %v163
    %v546 = vunpack.c.l.b16 %v164
    %v547 = vunpack.c.h.b16 %v164
    %v548 = vunpack.c.l.b16 %v165
    %v549 = vunpack.c.h.b16 %v165
    %v550 = vunpack.c.l.b16 %v166
    %v551 = vunpack.c.h.b16 %v166
    %v552 = vunpack.c.l.b16 %v167
    %v553 = vunpack.c.h.b16 %v167
    %v554 = vunpack.c.l.b16 %v168
    %v555 = vunpack.c.h.b16 %v168
    %v556 = vunpack.c.l.b16 %v169
    %v557 = vunpack.c.h.b16 %v169
    %v558 = vunpack.c.l.b16 %v170
    %v559 = vunpack.c.h.b16 %v170
    %v560 = vunpack.c.l.b16 %v171
    %v561 = vunpack.c.h.b16 %v171
    %v562 = vunpack.c.l.b16 %v172
    %v563 = vunpack.c.h.b16 %v172
    %v564 = vunpack.c.l.b16 %v173
    %v565 = vunpack.c.h.b16 %v173
    %v566 = vunpack.c.l.b16 %v174
    %v567 = vunpack.c.h.b16 %v174
    %v568 = vunpack.c.l.b16 %v175
    %v569 = vunpack.c.h.b16 %v175
    %v570 = vunpack.c.l.b16 %v176
    %v571 = vunpack.c.h.b16 %v176
    %v572 = vunpack.c.l.b16 %v177
    %v573 = vunpack.c.h.b16 %v177
    %v574 = vpack.c.b16 %v326, %v318
    %v575 = vpack.c.b16 %v327, %v319
    %v576 = vpack.c.b16 %v328, %v320
    %v577 = vpack.c.b16 %v329, %v321
    %v578 = vpack.c.b16 %v330, %v322
    %v579 = vpack.c.b16 %v331, %v323
    %v580 = vpack.c.b16 %v332, %v324
    %v581 = vpack.c.b16 %v333, %v325
    %v582 = vpack.c.b16 %v342, %v334
    %v583 = vpack.c.b16 %v343, %v335
    %v584 = vpack.c.b16 %v344, %v336
    %v585 = vpack.c.b16 %v345, %v337
    %v586 = vpack.c.b16 %v346, %v338
    %v587 = vpack.c.b16 %v347, %v339
    %v588 = vpack.c.b16 %v348, %v340
    %v589 = vpack.c.b16 %v349, %v341
    %v590 = vpack.c.b16 %v358, %v350
    %v591 = vpack.c.b16 %v359, %v351
    %v592 = vpack.c.b16 %v360, %v352
    %v593 = vpack.c.b16 %v361, %v353
    %v594 = vpack.c.b16 %v362, %v354
    %v595 = vpack.c.b16 %v363, %v355
    %v596 = vpack.c.b16 %v364, %v356
    %v597 = vpack.c.b16 %v365, %v357
    %v598 = vpack.c.b16 %v374, %v366
    %v599 = vpack.c.b16 %v375, %v367
    %v600 = vpack.c.b16 %v376, %v368
    %v601 = vpack.c.b16 %v377, %v369
    %v602 = vpack.c.b16 %v378, %v370
    %v603 = vpack.c.b16 %v379, %v371
    %v604 = vpack.c.b16 %v380, %v372
    %v605 = vpack.c.b16 %v381, %v373
    %v606 = vpack.c.b16 %v390, %v382
    %v607 = vpack.c.b16 %v391, %v383
    %v608 = vpack.c.b16 %v392, %v384
    %v609 = vpack.c.b16 %v393, %v385
    %v610 = vpack.c.b16 %v394, %v386
    %v611 = vpack.c.b16 %v395, %v387
    %v612 = vpack.c.b16 %v396, %v388
    %v613 = vpack.c.b16 %v397, %v389
    %v614 = vpack.c.b16 %v406, %v398
    %v615 = vpack.c.b16 %v407, %v399
    %v616 = vpack.c.b16 %v408, %v400
    %v617 = vpack.c.b16 %v409, %v401
    %v618 = vpack.c.b16 %v410, %v402
    %v619 = vpack.c.b16 %v411, %v403
    %v620 = vpack.c.b16 %v412, %v404
    %v621 = vpack.c.b16 %v413, %v405
    %v622 = vpack.c.b16 %v422, %v414
    %v623 = vpack.c.b16 %v423, %v415
    %v624 = vpack.c.b16 %v424, %v416
    %v625 = vpack.c.b16 %v425, %v417
    %v626 = vpack.c.b16 %v426, %v418
    %v627 = vpack.c.b16 %v427, %v419
    %v628 = vpack.c.b16 %v428, %v420
    %v629 = vpack.c.b16 %v429, %v421
    %v630 = vpack.c.b16 %v438, %v430
    %v631 = vpack.c.b16 %v439, %v431
    %v632 = vpack.c.b16 %v440, %v432
    %v633 = vpack.c.b16 %v441, %v433
    %v634 = vpack.c.b16 %v442, %v434
    %v635 = vpack.c.b16 %v443, %v435
    %v636 = vpack.c.b16 %v444, %v436
    %v637 = vpack.c.b16 %v445, %v437
    %v638 = vpack.c.b16 %v454, %v446
    %v639 = vpack.c.b16 %v455, %v447
    %v640 = vpack.c.b16 %v456, %v448
    %v641 = vpack.c.b16 %v457, %v449
    %v642 = vpack.c.b16 %v458, %v450
    %v643 = vpack.c.b16 %v459, %v451
    %v644 = vpack.c.b16 %v460, %v452
    %v645 = vpack.c.b16 %v461, %v453
    %v646 = vpack.c.b16 %v470, %v462
    %v647 = vpack.c.b16 %v471, %v463
    %v648 = vpack.c.b16 %v472, %v464
    %v649 = vpack.c.b16 %v473, %v465
    %v650 = vpack.c.b16 %v474, %v466
    %v651 = vpack.c.b16 %v475, %v467
    %v652 = vpack.c.b16 %v476, %v468
    %v653 = vpack.c.b16 %v477, %v469
    %v654 = vpack.c.b16 %v486, %v478
    %v655 = vpack.c.b16 %v487, %v479
    %v656 = vpack.c.b16 %v488, %v480
    %v657 = vpack.c.b16 %v489, %v481
    %v658 = vpack.c.b16 %v490, %v482
    %v659 = vpack.c.b16 %v491, %v483
    %v660 = vpack.c.b16 %v492, %v484
    %v661 = vpack.c.b16 %v493, %v485
    %v662 = vpack.c.b16 %v502, %v494
    %v663 = vpack.c.b16 %v503, %v495
    %v664 = vpack.c.b16 %v504, %v496
    %v665 = vpack.c.b16 %v505, %v497
    %v666 = vpack.c.b16 %v506, %v498
    %v667 = vpack.c.b16 %v507, %v499
    %v668 = vpack.c.b16 %v508, %v500
    %v669 = vpack.c.b16 %v509, %v501
    %v670 = vpack.c.b16 %v518, %v510
    %v671 = vpack.c.b16 %v519, %v511
    %v672 = vpack.c.b16 %v520, %v512
    %v673 = vpack.c.b16 %v521, %v513
    %v674 = vpack.c.b16 %v522, %v514
    %v675 = vpack.c.b16 %v523, %v515
    %v676 = vpack.c.b16 %v524, %v516
    %v677 = vpack.c.b16 %v525, %v517
    %v678 = vpack.c.b16 %v534, %v526
    %v679 = vpack.c.b16 %v535, %v527
    %v680 = vpack.c.b16 %v536, %v528
    %v681 = vpack.c.b16 %v537, %v529
    %v682 = vpack.c.b16 %v538, %v530
    %v683 = vpack.c.b16 %v539, %v531
    %v684 = vpack.c.b16 %v540, %v532
    %v685 = vpack.c.b16 %v541, %v533
    %v686 = vpack.c.b16 %v550, %v542
    %v687 = vpack.c.b16 %v551, %v543
    %v688 = vpack.c.b16 %v552, %v544
    %v689 = vpack.c.b16 %v553, %v545
    %v690 = vpack.c.b16 %v554, %v546
    %v691 = vpack.c.b16 %v555, %v547
    %v692 = vpack.c.b16 %v556, %v548
    %v693 = vpack.c.b16 %v557, %v549
    %v694 = vpack.c.b16 %v566, %v558
    %v695 = vpack.c.b16 %v567, %v559
    %v696 = vpack.c.b16 %v568, %v560
    %v697 = vpack.c.b16 %v569, %v561
    %v698 = vpack.c.b16 %v570, %v562
    %v699 = vpack.c.b16 %v571, %v563
    %v700 = vpack.c.b16 %v572, %v564
    %v701 = vpack.c.b16 %v573, %v565
    %830 = vmatpush.bf16.msra.mxu0 %v630
    %831 = vmatpush.bf16.msra.mxu0 %v622
    %832 = vmatpush.bf16.msra.mxu0 %v614
    %833 = vmatpush.bf16.msra.mxu0 %v606
    %834 = vmatpush.bf16.msra.mxu0 %v598
    %835 = vmatpush.bf16.msra.mxu0 %v590
    %836 = vmatpush.bf16.msra.mxu0 %v582
    %837 = vmatpush.bf16.msra.mxu0 %v574
    %838 = vmatmul.bf16.gmra.mxu0 %v188
    %v839 = vpop.f32.mrf.mxu0
    %v840 = vadd.f32 0.0, %v839
    %v841 = vpop.f32.mrf.mxu0
    %842 = vdwg.mxu0
    %843 = vmatpush.bf16.msra.mxu0 %v694
    %844 = vmatpush.bf16.msra.mxu0 %v686
    %845 = vmatpush.bf16.msra.mxu0 %v678
    %846 = vmatpush.bf16.msra.mxu0 %v670
    %847 = vmatpush.bf16.msra.mxu0 %v662
    %848 = vmatpush.bf16.msra.mxu0 %v654
    %849 = vmatpush.bf16.msra.mxu0 %v646
    %850 = vmatpush.bf16.msra.mxu0 %v638
    %851 = vmatmul.bf16.gmra.mxu0 %v189
    %v852 = vpop.f32.mrf.mxu0
    %v853 = vadd.f32 %v840, %v852
    %v854 = vpop.f32.mrf.mxu0
    %855 = vdwg.mxu0
    %856 = vmatpush.bf16.msra.mxu0 %v631
    %857 = vmatpush.bf16.msra.mxu0 %v623
    %858 = vmatpush.bf16.msra.mxu0 %v615
    %859 = vmatpush.bf16.msra.mxu0 %v607
    %860 = vmatpush.bf16.msra.mxu0 %v599
    %861 = vmatpush.bf16.msra.mxu0 %v591
    %862 = vmatpush.bf16.msra.mxu0 %v583
    %863 = vmatpush.bf16.msra.mxu0 %v575
    %864 = vmatmul.bf16.gmra.mxu0 %v188
    %v865 = vpop.f32.mrf.mxu0
    %v866 = vadd.f32 0.0, %v865
    %v867 = vpop.f32.mrf.mxu0
    %868 = vdwg.mxu0
    %869 = vmatpush.bf16.msra.mxu0 %v695
    %870 = vmatpush.bf16.msra.mxu0 %v687
    %871 = vmatpush.bf16.msra.mxu0 %v679
    %872 = vmatpush.bf16.msra.mxu0 %v671
    %873 = vmatpush.bf16.msra.mxu0 %v663
    %874 = vmatpush.bf16.msra.mxu0 %v655
    %875 = vmatpush.bf16.msra.mxu0 %v647
    %876 = vmatpush.bf16.msra.mxu0 %v639
    %877 = vmatmul.bf16.gmra.mxu0 %v189
    %v878 = vpop.f32.mrf.mxu0
    %v879 = vadd.f32 %v866, %v878
    %v880 = vpop.f32.mrf.mxu0
    %881 = vdwg.mxu0
    %882 = vmatpush.bf16.msra.mxu0 %v632
    %883 = vmatpush.bf16.msra.mxu0 %v624
    %884 = vmatpush.bf16.msra.mxu0 %v616
    %885 = vmatpush.bf16.msra.mxu0 %v608
    %886 = vmatpush.bf16.msra.mxu0 %v600
    %887 = vmatpush.bf16.msra.mxu0 %v592
    %888 = vmatpush.bf16.msra.mxu0 %v584
    %889 = vmatpush.bf16.msra.mxu0 %v576
    %890 = vmatmul.bf16.gmra.mxu0 %v188
    %v891 = vpop.f32.mrf.mxu0
    %v892 = vadd.f32 0.0, %v891
    %v893 = vpop.f32.mrf.mxu0
    %894 = vdwg.mxu0
    %895 = vmatpush.bf16.msra.mxu0 %v696
    %896 = vmatpush.bf16.msra.mxu0 %v688
    %897 = vmatpush.bf16.msra.mxu0 %v680
    %898 = vmatpush.bf16.msra.mxu0 %v672
    %899 = vmatpush.bf16.msra.mxu0 %v664
    %900 = vmatpush.bf16.msra.mxu0 %v656
    %901 = vmatpush.bf16.msra.mxu0 %v648
    %902 = vmatpush.bf16.msra.mxu0 %v640
    %903 = vmatmul.bf16.gmra.mxu0 %v189
    %v904 = vpop.f32.mrf.mxu0
    %v905 = vadd.f32 %v892, %v904
    %v906 = vpop.f32.mrf.mxu0
    %907 = vdwg.mxu0
    %908 = vmatpush.bf16.msra.mxu0 %v633
    %909 = vmatpush.bf16.msra.mxu0 %v625
    %910 = vmatpush.bf16.msra.mxu0 %v617
    %911 = vmatpush.bf16.msra.mxu0 %v609
    %912 = vmatpush.bf16.msra.mxu0 %v601
    %913 = vmatpush.bf16.msra.mxu0 %v593
    %914 = vmatpush.bf16.msra.mxu0 %v585
    %915 = vmatpush.bf16.msra.mxu0 %v577
    %916 = vmatmul.bf16.gmra.mxu0 %v188
    %v917 = vpop.f32.mrf.mxu0
    %v918 = vadd.f32 0.0, %v917
    %v919 = vpop.f32.mrf.mxu0
    %920 = vdwg.mxu0
    %921 = vmatpush.bf16.msra.mxu0 %v697
    %922 = vmatpush.bf16.msra.mxu0 %v689
    %923 = vmatpush.bf16.msra.mxu0 %v681
    %924 = vmatpush.bf16.msra.mxu0 %v673
    %925 = vmatpush.bf16.msra.mxu0 %v665
    %926 = vmatpush.bf16.msra.mxu0 %v657
    %927 = vmatpush.bf16.msra.mxu0 %v649
    %928 = vmatpush.bf16.msra.mxu0 %v641
    %929 = vmatmul.bf16.gmra.mxu0 %v189
    %v930 = vpop.f32.mrf.mxu0
    %v931 = vadd.f32 %v918, %v930
    %v932 = vpop.f32.mrf.mxu0
    %933 = vdwg.mxu0
    %934 = vmatpush.bf16.msra.mxu0 %v634
    %935 = vmatpush.bf16.msra.mxu0 %v626
    %936 = vmatpush.bf16.msra.mxu0 %v618
    %937 = vmatpush.bf16.msra.mxu0 %v610
    %938 = vmatpush.bf16.msra.mxu0 %v602
    %939 = vmatpush.bf16.msra.mxu0 %v594
    %940 = vmatpush.bf16.msra.mxu0 %v586
    %941 = vmatpush.bf16.msra.mxu0 %v578
    %942 = vmatmul.bf16.gmra.mxu0 %v188
    %v943 = vpop.f32.mrf.mxu0
    %v944 = vadd.f32 0.0, %v943
    %v945 = vpop.f32.mrf.mxu0
    %946 = vdwg.mxu0
    %947 = vmatpush.bf16.msra.mxu0 %v698
    %948 = vmatpush.bf16.msra.mxu0 %v690
    %949 = vmatpush.bf16.msra.mxu0 %v682
    %950 = vmatpush.bf16.msra.mxu0 %v674
    %951 = vmatpush.bf16.msra.mxu0 %v666
    %952 = vmatpush.bf16.msra.mxu0 %v658
    %953 = vmatpush.bf16.msra.mxu0 %v650
    %954 = vmatpush.bf16.msra.mxu0 %v642
    %955 = vmatmul.bf16.gmra.mxu0 %v189
    %v956 = vpop.f32.mrf.mxu0
    %v957 = vadd.f32 %v944, %v956
    %v958 = vpop.f32.mrf.mxu0
    %959 = vdwg.mxu0
    %960 = vmatpush.bf16.msra.mxu0 %v635
    %961 = vmatpush.bf16.msra.mxu0 %v627
    %962 = vmatpush.bf16.msra.mxu0 %v619
    %963 = vmatpush.bf16.msra.mxu0 %v611
    %964 = vmatpush.bf16.msra.mxu0 %v603
    %965 = vmatpush.bf16.msra.mxu0 %v595
    %966 = vmatpush.bf16.msra.mxu0 %v587
    %967 = vmatpush.bf16.msra.mxu0 %v579
    %968 = vmatmul.bf16.gmra.mxu0 %v188
    %v969 = vpop.f32.mrf.mxu0
    %v970 = vadd.f32 0.0, %v969
    %v971 = vpop.f32.mrf.mxu0
    %972 = vdwg.mxu0
    %973 = vmatpush.bf16.msra.mxu0 %v699
    %974 = vmatpush.bf16.msra.mxu0 %v691
    %975 = vmatpush.bf16.msra.mxu0 %v683
    %976 = vmatpush.bf16.msra.mxu0 %v675
    %977 = vmatpush.bf16.msra.mxu0 %v667
    %978 = vmatpush.bf16.msra.mxu0 %v659
    %979 = vmatpush.bf16.msra.mxu0 %v651
    %980 = vmatpush.bf16.msra.mxu0 %v643
    %981 = vmatmul.bf16.gmra.mxu0 %v189
    %v982 = vpop.f32.mrf.mxu0
    %v983 = vadd.f32 %v970, %v982
    %v984 = vpop.f32.mrf.mxu0
    %985 = vdwg.mxu0
    %986 = vmatpush.bf16.msra.mxu0 %v636
    %987 = vmatpush.bf16.msra.mxu0 %v628
    %988 = vmatpush.bf16.msra.mxu0 %v620
    %989 = vmatpush.bf16.msra.mxu0 %v612
    %990 = vmatpush.bf16.msra.mxu0 %v604
    %991 = vmatpush.bf16.msra.mxu0 %v596
    %992 = vmatpush.bf16.msra.mxu0 %v588
    %993 = vmatpush.bf16.msra.mxu0 %v580
    %994 = vmatmul.bf16.gmra.mxu0 %v188
    %v995 = vpop.f32.mrf.mxu0
    %v996 = vadd.f32 0.0, %v995
    %v997 = vpop.f32.mrf.mxu0
    %998 = vdwg.mxu0
    %999 = vmatpush.bf16.msra.mxu0 %v700
    %1000 = vmatpush.bf16.msra.mxu0 %v692
    %1001 = vmatpush.bf16.msra.mxu0 %v684
    %1002 = vmatpush.bf16.msra.mxu0 %v676
    %1003 = vmatpush.bf16.msra.mxu0 %v668
    %1004 = vmatpush.bf16.msra.mxu0 %v660
    %1005 = vmatpush.bf16.msra.mxu0 %v652
    %1006 = vmatpush.bf16.msra.mxu0 %v644
    %1007 = vmatmul.bf16.gmra.mxu0 %v189
    %v1008 = vpop.f32.mrf.mxu0
    %v1009 = vadd.f32 %v996, %v1008
    %v1010 = vpop.f32.mrf.mxu0
    %1011 = vdwg.mxu0
    %1012 = vmatpush.bf16.msra.mxu0 %v637
    %1013 = vmatpush.bf16.msra.mxu0 %v629
    %1014 = vmatpush.bf16.msra.mxu0 %v621
    %1015 = vmatpush.bf16.msra.mxu0 %v613
    %1016 = vmatpush.bf16.msra.mxu0 %v605
    %1017 = vmatpush.bf16.msra.mxu0 %v597
    %1018 = vmatpush.bf16.msra.mxu0 %v589
    %1019 = vmatpush.bf16.msra.mxu0 %v581
    %1020 = vmatmul.bf16.gmra.mxu0 %v188
    %v1021 = vpop.f32.mrf.mxu0
    %v1022 = vadd.f32 0.0, %v1021
    %v1023 = vpop.f32.mrf.mxu0
    %1024 = vdwg.mxu0
    %1025 = vmatpush.bf16.msra.mxu0 %v701
    %1026 = vmatpush.bf16.msra.mxu0 %v693
    %1027 = vmatpush.bf16.msra.mxu0 %v685
    %1028 = vmatpush.bf16.msra.mxu0 %v677
    %1029 = vmatpush.bf16.msra.mxu0 %v669
    %1030 = vmatpush.bf16.msra.mxu0 %v661
    %1031 = vmatpush.bf16.msra.mxu0 %v653
    %1032 = vmatpush.bf16.msra.mxu0 %v645
    %1033 = vmatmul.bf16.gmra.mxu0 %v189
    %v1034 = vpop.f32.mrf.mxu0
    %v1035 = vadd.f32 %v1022, %v1034
    %v1036 = vpop.f32.mrf.mxu0
    %1037 = vdwg.mxu0
    %v1046 = vrot.slane %v879, 6
    %v1047 = vrot.slane %v905, 4
    %v1048 = vrot.slane %v931, 2
    %v1049 = vrot.slane %v983, 6
    %v1050 = vrot.slane %v1009, 4
    %v1051 = vrot.slane %v1035, 2
    %vm1052 = vcmask 1041408
    %v1053 = vsel %vm1052, %v853, %v1046
    %vm1054 = vcmask 1045508
    %v1055 = vsel %vm1054, %v1047, %v1048
    %vm1056 = vcmask 1043456
    %v1057 = vsel %vm1056, %v1053, %v1055
    %v1058 = vsel %vm1052, %v957, %v1049
    %v1059 = vsel %vm1054, %v1050, %v1051
    %v1060 = vsel %vm1056, %v1058, %v1059
    %v1063 = vadd.f32 %v180, %v1057
    %v1064 = vadd.f32 %v181, %v1060
    %v1065 = vxor.u32 %v1063, 2147483648
    %v1066 = vmul.f32 %v1065, 1.442695
    %v1067 = vpow.pop %v1066
    %v1068 = vadd.f32 %v1067, 1.0
    %v1069 = vrcp.pop %v1068
    %v1070 = vmul.f32 %v1068, %v1069
    %v1071 = vsub.f32 1.0, %v1070
    %v1072 = vmul.f32 %v1069, %v1071
    %v1073 = vadd.f32 %v1069, %v1072
    %vm1074 = vweird.f32 %v1068
    %vm1075 = vweird.f32 %v1069
    %vm1076 = vmor %vm1074, %vm1075
    %v1077 = vsel %vm1076, %v1069, %v1073
    %v1078 = vand.u32 2147483647, %v1068
    %vm1079 = vcmp.eq.f32.partialorder %v1078, 8.507059e+37
    %v1080 = vand.u32 %v1068, 2147483648
    %v1081 = vor.u32 1.1754944e-38, %v1080
    %v1082 = vsel %vm1079, %v1081, %v1077
    %v1083 = vmul.f32 1.0, %v1082
    %v1085 = vrot.slane %v1063, 4
    %v1087 = vxor.u32 %v1085, 2147483648
    %v1088 = vmul.f32 %v1087, 1.442695
    %v1089 = vpow.pop %v1088
    %v1090 = vadd.f32 %v1089, 1.0
    %v1091 = vrcp.pop %v1090
    %v1092 = vmul.f32 %v1090, %v1091
    %v1093 = vsub.f32 1.0, %v1092
    %v1094 = vmul.f32 %v1091, %v1093
    %v1095 = vadd.f32 %v1091, %v1094
    %vm1096 = vweird.f32 %v1090
    %vm1097 = vweird.f32 %v1091
    %vm1098 = vmor %vm1096, %vm1097
    %v1099 = vsel %vm1098, %v1091, %v1095
    %v1100 = vand.u32 2147483647, %v1090
    %vm1101 = vcmp.eq.f32.partialorder %v1100, 8.507059e+37
    %v1102 = vand.u32 %v1090, 2147483648
    %v1103 = vor.u32 1.1754944e-38, %v1102
    %v1104 = vsel %vm1101, %v1103, %v1099
    %v1105 = vmul.f32 1.0, %v1104
    %v1106 = vtanh.pop %v1064
    %v1108 = vrot.slane %v1064, 4
    %v1110 = vxor.u32 %v1108, 2147483648
    %v1111 = vmul.f32 %v1110, 1.442695
    %v1112 = vpow.pop %v1111
    %v1113 = vadd.f32 %v1112, 1.0
    %v1114 = vrcp.pop %v1113
    %v1115 = vmul.f32 %v1113, %v1114
    %v1116 = vsub.f32 1.0, %v1115
    %v1117 = vmul.f32 %v1114, %v1116
    %v1118 = vadd.f32 %v1114, %v1117
    %vm1119 = vweird.f32 %v1113
    %vm1120 = vweird.f32 %v1114
    %vm1121 = vmor %vm1119, %vm1120
    %v1122 = vsel %vm1121, %v1114, %v1118
    %v1123 = vand.u32 2147483647, %v1113
    %vm1124 = vcmp.eq.f32.partialorder %v1123, 8.507059e+37
    %v1125 = vand.u32 %v1113, 2147483648
    %v1126 = vor.u32 1.1754944e-38, %v1125
    %v1127 = vsel %vm1124, %v1126, %v1122
    %v1128 = vmul.f32 1.0, %v1127
    %v1129 = vmul.f32 %v1105, %v179
    %v1130 = vmul.f32 %v1083, %v1106
    %v1131 = vadd.f32 %v1129, %v1130
    %v1132 = vtanh.pop %v1131
    %v1133 = vmul.f32 %v1128, %v1132
    %s1134 = scalar_lea.vmem [#allocation4], 16
    %v1135 = vld [vmem:[%s1134] sm:$0xff]
    %v1136 = vld [vmem:[%s1134 + $0x8] sm:$0xff]
    %1138 = vst [vmem:[#allocation1] ss:$4 sm:$0xff] %v1133
    %v1139 = vld.sshfl [vmem:[#allocation1] sm:$0xff pattern:$0x73625140]
    %v1140 = vld.sshfl [vmem:[#allocation1 + $0x8] sm:$0xff pattern:$0x73625140]
    %v1143 = vpack.c.bf16 %v1139, %v1139
    %v1144 = vpack.c.bf16 %v1140, %v1140
    %1145 = vmatpush.bf16.msra.mxu0 %v630
    %1146 = vmatpush.bf16.msra.mxu0 %v622
    %1147 = vmatpush.bf16.msra.mxu0 %v614
    %1148 = vmatpush.bf16.msra.mxu0 %v606
    %1149 = vmatpush.bf16.msra.mxu0 %v598
    %1150 = vmatpush.bf16.msra.mxu0 %v590
    %1151 = vmatpush.bf16.msra.mxu0 %v582
    %1152 = vmatpush.bf16.msra.mxu0 %v574
    %1153 = vmatmul.bf16.gmra.mxu0 %v1143
    %v1154 = vpop.f32.mrf.mxu0
    %v1155 = vadd.f32 0.0, %v1154
    %v1156 = vpop.f32.mrf.mxu0
    %1157 = vdwg.mxu0
    %1158 = vmatpush.bf16.msra.mxu0 %v694
    %1159 = vmatpush.bf16.msra.mxu0 %v686
    %1160 = vmatpush.bf16.msra.mxu0 %v678
    %1161 = vmatpush.bf16.msra.mxu0 %v670
    %1162 = vmatpush.bf16.msra.mxu0 %v662
    %1163 = vmatpush.bf16.msra.mxu0 %v654
    %1164 = vmatpush.bf16.msra.mxu0 %v646
    %1165 = vmatpush.bf16.msra.mxu0 %v638
    %1166 = vmatmul.bf16.gmra.mxu0 %v1144
    %v1167 = vpop.f32.mrf.mxu0
    %v1168 = vadd.f32 %v1155, %v1167
    %v1169 = vpop.f32.mrf.mxu0
    %1170 = vdwg.mxu0
    %1171 = vmatpush.bf16.msra.mxu0 %v631
    %1172 = vmatpush.bf16.msra.mxu0 %v623
    %1173 = vmatpush.bf16.msra.mxu0 %v615
    %1174 = vmatpush.bf16.msra.mxu0 %v607
    %1175 = vmatpush.bf16.msra.mxu0 %v599
    %1176 = vmatpush.bf16.msra.mxu0 %v591
    %1177 = vmatpush.bf16.msra.mxu0 %v583
    %1178 = vmatpush.bf16.msra.mxu0 %v575
    %1179 = vmatmul.bf16.gmra.mxu0 %v1143
    %v1180 = vpop.f32.mrf.mxu0
    %v1181 = vadd.f32 0.0, %v1180
    %v1182 = vpop.f32.mrf.mxu0
    %1183 = vdwg.mxu0
    %1184 = vmatpush.bf16.msra.mxu0 %v695
    %1185 = vmatpush.bf16.msra.mxu0 %v687
    %1186 = vmatpush.bf16.msra.mxu0 %v679
    %1187 = vmatpush.bf16.msra.mxu0 %v671
    %1188 = vmatpush.bf16.msra.mxu0 %v663
    %1189 = vmatpush.bf16.msra.mxu0 %v655
    %1190 = vmatpush.bf16.msra.mxu0 %v647
    %1191 = vmatpush.bf16.msra.mxu0 %v639
    %1192 = vmatmul.bf16.gmra.mxu0 %v1144
    %v1193 = vpop.f32.mrf.mxu0
    %v1194 = vadd.f32 %v1181, %v1193
    %v1195 = vpop.f32.mrf.mxu0
    %1196 = vdwg.mxu0
    %1197 = vmatpush.bf16.msra.mxu0 %v632
    %1198 = vmatpush.bf16.msra.mxu0 %v624
    %1199 = vmatpush.bf16.msra.mxu0 %v616
    %1200 = vmatpush.bf16.msra.mxu0 %v608
    %1201 = vmatpush.bf16.msra.mxu0 %v600
    %1202 = vmatpush.bf16.msra.mxu0 %v592
    %1203 = vmatpush.bf16.msra.mxu0 %v584
    %1204 = vmatpush.bf16.msra.mxu0 %v576
    %1205 = vmatmul.bf16.gmra.mxu0 %v1143
    %v1206 = vpop.f32.mrf.mxu0
    %v1207 = vadd.f32 0.0, %v1206
    %v1208 = vpop.f32.mrf.mxu0
    %1209 = vdwg.mxu0
    %1210 = vmatpush.bf16.msra.mxu0 %v696
    %1211 = vmatpush.bf16.msra.mxu0 %v688
    %1212 = vmatpush.bf16.msra.mxu0 %v680
    %1213 = vmatpush.bf16.msra.mxu0 %v672
    %1214 = vmatpush.bf16.msra.mxu0 %v664
    %1215 = vmatpush.bf16.msra.mxu0 %v656
    %1216 = vmatpush.bf16.msra.mxu0 %v648
    %1217 = vmatpush.bf16.msra.mxu0 %v640
    %1218 = vmatmul.bf16.gmra.mxu0 %v1144
    %v1219 = vpop.f32.mrf.mxu0
    %v1220 = vadd.f32 %v1207, %v1219
    %v1221 = vpop.f32.mrf.mxu0
    %1222 = vdwg.mxu0
    %1223 = vmatpush.bf16.msra.mxu0 %v633
    %1224 = vmatpush.bf16.msra.mxu0 %v625
    %1225 = vmatpush.bf16.msra.mxu0 %v617
    %1226 = vmatpush.bf16.msra.mxu0 %v609
    %1227 = vmatpush.bf16.msra.mxu0 %v601
    %1228 = vmatpush.bf16.msra.mxu0 %v593
    %1229 = vmatpush.bf16.msra.mxu0 %v585
    %1230 = vmatpush.bf16.msra.mxu0 %v577
    %1231 = vmatmul.bf16.gmra.mxu0 %v1143
    %v1232 = vpop.f32.mrf.mxu0
    %v1233 = vadd.f32 0.0, %v1232
    %v1234 = vpop.f32.mrf.mxu0
    %1235 = vdwg.mxu0
    %1236 = vmatpush.bf16.msra.mxu0 %v697
    %1237 = vmatpush.bf16.msra.mxu0 %v689
    %1238 = vmatpush.bf16.msra.mxu0 %v681
    %1239 = vmatpush.bf16.msra.mxu0 %v673
    %1240 = vmatpush.bf16.msra.mxu0 %v665
    %1241 = vmatpush.bf16.msra.mxu0 %v657
    %1242 = vmatpush.bf16.msra.mxu0 %v649
    %1243 = vmatpush.bf16.msra.mxu0 %v641
    %1244 = vmatmul.bf16.gmra.mxu0 %v1144
    %v1245 = vpop.f32.mrf.mxu0
    %v1246 = vadd.f32 %v1233, %v1245
    %v1247 = vpop.f32.mrf.mxu0
    %1248 = vdwg.mxu0
    %1249 = vmatpush.bf16.msra.mxu0 %v634
    %1250 = vmatpush.bf16.msra.mxu0 %v626
    %1251 = vmatpush.bf16.msra.mxu0 %v618
    %1252 = vmatpush.bf16.msra.mxu0 %v610
    %1253 = vmatpush.bf16.msra.mxu0 %v602
    %1254 = vmatpush.bf16.msra.mxu0 %v594
    %1255 = vmatpush.bf16.msra.mxu0 %v586
    %1256 = vmatpush.bf16.msra.mxu0 %v578
    %1257 = vmatmul.bf16.gmra.mxu0 %v1143
    %v1258 = vpop.f32.mrf.mxu0
    %v1259 = vadd.f32 0.0, %v1258
    %v1260 = vpop.f32.mrf.mxu0
    %1261 = vdwg.mxu0
    %1262 = vmatpush.bf16.msra.mxu0 %v698
    %1263 = vmatpush.bf16.msra.mxu0 %v690
    %1264 = vmatpush.bf16.msra.mxu0 %v682
    %1265 = vmatpush.bf16.msra.mxu0 %v674
    %1266 = vmatpush.bf16.msra.mxu0 %v666
    %1267 = vmatpush.bf16.msra.mxu0 %v658
    %1268 = vmatpush.bf16.msra.mxu0 %v650
    %1269 = vmatpush.bf16.msra.mxu0 %v642
    %1270 = vmatmul.bf16.gmra.mxu0 %v1144
    %v1271 = vpop.f32.mrf.mxu0
    %v1272 = vadd.f32 %v1259, %v1271
    %v1273 = vpop.f32.mrf.mxu0
    %1274 = vdwg.mxu0
    %1275 = vmatpush.bf16.msra.mxu0 %v635
    %1276 = vmatpush.bf16.msra.mxu0 %v627
    %1277 = vmatpush.bf16.msra.mxu0 %v619
    %1278 = vmatpush.bf16.msra.mxu0 %v611
    %1279 = vmatpush.bf16.msra.mxu0 %v603
    %1280 = vmatpush.bf16.msra.mxu0 %v595
    %1281 = vmatpush.bf16.msra.mxu0 %v587
    %1282 = vmatpush.bf16.msra.mxu0 %v579
    %1283 = vmatmul.bf16.gmra.mxu0 %v1143
    %v1284 = vpop.f32.mrf.mxu0
    %v1285 = vadd.f32 0.0, %v1284
    %v1286 = vpop.f32.mrf.mxu0
    %1287 = vdwg.mxu0
    %1288 = vmatpush.bf16.msra.mxu0 %v699
    %1289 = vmatpush.bf16.msra.mxu0 %v691
    %1290 = vmatpush.bf16.msra.mxu0 %v683
    %1291 = vmatpush.bf16.msra.mxu0 %v675
    %1292 = vmatpush.bf16.msra.mxu0 %v667
    %1293 = vmatpush.bf16.msra.mxu0 %v659
    %1294 = vmatpush.bf16.msra.mxu0 %v651
    %1295 = vmatpush.bf16.msra.mxu0 %v643
    %1296 = vmatmul.bf16.gmra.mxu0 %v1144
    %v1297 = vpop.f32.mrf.mxu0
    %v1298 = vadd.f32 %v1285, %v1297
    %v1299 = vpop.f32.mrf.mxu0
    %1300 = vdwg.mxu0
    %1301 = vmatpush.bf16.msra.mxu0 %v636
    %1302 = vmatpush.bf16.msra.mxu0 %v628
    %1303 = vmatpush.bf16.msra.mxu0 %v620
    %1304 = vmatpush.bf16.msra.mxu0 %v612
    %1305 = vmatpush.bf16.msra.mxu0 %v604
    %1306 = vmatpush.bf16.msra.mxu0 %v596
    %1307 = vmatpush.bf16.msra.mxu0 %v588
    %1308 = vmatpush.bf16.msra.mxu0 %v580
    %1309 = vmatmul.bf16.gmra.mxu0 %v1143
    %v1310 = vpop.f32.mrf.mxu0
    %v1311 = vadd.f32 0.0, %v1310
    %v1312 = vpop.f32.mrf.mxu0
    %1313 = vdwg.mxu0
    %1314 = vmatpush.bf16.msra.mxu0 %v700
    %1315 = vmatpush.bf16.msra.mxu0 %v692
    %1316 = vmatpush.bf16.msra.mxu0 %v684
    %1317 = vmatpush.bf16.msra.mxu0 %v676
    %1318 = vmatpush.bf16.msra.mxu0 %v668
    %1319 = vmatpush.bf16.msra.mxu0 %v660
    %1320 = vmatpush.bf16.msra.mxu0 %v652
    %1321 = vmatpush.bf16.msra.mxu0 %v644
    %1322 = vmatmul.bf16.gmra.mxu0 %v1144
    %v1323 = vpop.f32.mrf.mxu0
    %v1324 = vadd.f32 %v1311, %v1323
    %v1325 = vpop.f32.mrf.mxu0
    %1326 = vdwg.mxu0
    %1327 = vmatpush.bf16.msra.mxu0 %v637
    %1328 = vmatpush.bf16.msra.mxu0 %v629
    %1329 = vmatpush.bf16.msra.mxu0 %v621
    %1330 = vmatpush.bf16.msra.mxu0 %v613
    %1331 = vmatpush.bf16.msra.mxu0 %v605
    %1332 = vmatpush.bf16.msra.mxu0 %v597
    %1333 = vmatpush.bf16.msra.mxu0 %v589
    %1334 = vmatpush.bf16.msra.mxu0 %v581
    %1335 = vmatmul.bf16.gmra.mxu0 %v1143
    %v1336 = vpop.f32.mrf.mxu0
    %v1337 = vadd.f32 0.0, %v1336
    %v1338 = vpop.f32.mrf.mxu0
    %1339 = vdwg.mxu0
    %1340 = vmatpush.bf16.msra.mxu0 %v701
    %1341 = vmatpush.bf16.msra.mxu0 %v693
    %1342 = vmatpush.bf16.msra.mxu0 %v685
    %1343 = vmatpush.bf16.msra.mxu0 %v677
    %1344 = vmatpush.bf16.msra.mxu0 %v669
    %1345 = vmatpush.bf16.msra.mxu0 %v661
    %1346 = vmatpush.bf16.msra.mxu0 %v653
    %1347 = vmatpush.bf16.msra.mxu0 %v645
    %1348 = vmatmul.bf16.gmra.mxu0 %v1144
    %v1349 = vpop.f32.mrf.mxu0
    %v1350 = vadd.f32 %v1337, %v1349
    %v1351 = vpop.f32.mrf.mxu0
    %1352 = vdwg.mxu0
    %v1361 = vrot.slane %v1194, 6
    %v1362 = vrot.slane %v1220, 4
    %v1363 = vrot.slane %v1246, 2
    %v1364 = vrot.slane %v1298, 6
    %v1365 = vrot.slane %v1324, 4
    %v1366 = vrot.slane %v1350, 2
    %v1367 = vsel %vm1052, %v1168, %v1361
    %v1368 = vsel %vm1054, %v1362, %v1363
    %v1369 = vsel %vm1056, %v1367, %v1368
    %v1370 = vsel %vm1052, %v1272, %v1364
    %v1371 = vsel %vm1054, %v1365, %v1366
    %v1372 = vsel %vm1056, %v1370, %v1371
    %v1375 = vadd.f32 %v1135, %v1369
    %v1376 = vadd.f32 %v1136, %v1372
    %v1377 = vxor.u32 %v1375, 2147483648
    %v1378 = vmul.f32 %v1377, 1.442695
    %v1379 = vpow.pop %v1378
    %v1380 = vadd.f32 %v1379, 1.0
    %v1381 = vrcp.pop %v1380
    %v1382 = vmul.f32 %v1380, %v1381
    %v1383 = vsub.f32 1.0, %v1382
    %v1384 = vmul.f32 %v1381, %v1383
    %v1385 = vadd.f32 %v1381, %v1384
    %vm1386 = vweird.f32 %v1380
    %vm1387 = vweird.f32 %v1381
    %vm1388 = vmor %vm1386, %vm1387
    %v1389 = vsel %vm1388, %v1381, %v1385
    %v1390 = vand.u32 2147483647, %v1380
    %vm1391 = vcmp.eq.f32.partialorder %v1390, 8.507059e+37
    %v1392 = vand.u32 %v1380, 2147483648
    %v1393 = vor.u32 1.1754944e-38, %v1392
    %v1394 = vsel %vm1391, %v1393, %v1389
    %v1395 = vmul.f32 1.0, %v1394
    %v1397 = vrot.slane %v1375, 4
    %v1399 = vxor.u32 %v1397, 2147483648
    %v1400 = vmul.f32 %v1399, 1.442695
    %v1401 = vpow.pop %v1400
    %v1402 = vadd.f32 %v1401, 1.0
    %v1403 = vrcp.pop %v1402
    %v1404 = vmul.f32 %v1402, %v1403
    %v1405 = vsub.f32 1.0, %v1404
    %v1406 = vmul.f32 %v1403, %v1405
    %v1407 = vadd.f32 %v1403, %v1406
    %vm1408 = vweird.f32 %v1402
    %vm1409 = vweird.f32 %v1403
    %vm1410 = vmor %vm1408, %vm1409
    %v1411 = vsel %vm1410, %v1403, %v1407
    %v1412 = vand.u32 2147483647, %v1402
    %vm1413 = vcmp.eq.f32.partialorder %v1412, 8.507059e+37
    %v1414 = vand.u32 %v1402, 2147483648
    %v1415 = vor.u32 1.1754944e-38, %v1414
    %v1416 = vsel %vm1413, %v1415, %v1411
    %v1417 = vmul.f32 1.0, %v1416
    %v1418 = vtanh.pop %v1376
    %v1420 = vrot.slane %v1376, 4
    %v1422 = vxor.u32 %v1420, 2147483648
    %v1423 = vmul.f32 %v1422, 1.442695
    %v1424 = vpow.pop %v1423
    %v1425 = vadd.f32 %v1424, 1.0
    %v1426 = vrcp.pop %v1425
    %v1427 = vmul.f32 %v1425, %v1426
    %v1428 = vsub.f32 1.0, %v1427
    %v1429 = vmul.f32 %v1426, %v1428
    %v1430 = vadd.f32 %v1426, %v1429
    %vm1431 = vweird.f32 %v1425
    %vm1432 = vweird.f32 %v1426
    %vm1433 = vmor %vm1431, %vm1432
    %v1434 = vsel %vm1433, %v1426, %v1430
    %v1435 = vand.u32 2147483647, %v1425
    %vm1436 = vcmp.eq.f32.partialorder %v1435, 8.507059e+37
    %v1437 = vand.u32 %v1425, 2147483648
    %v1438 = vor.u32 1.1754944e-38, %v1437
    %v1439 = vsel %vm1436, %v1438, %v1434
    %v1440 = vmul.f32 1.0, %v1439
    %v1441 = vmul.f32 %v1417, %v1131
    %v1442 = vmul.f32 %v1395, %v1418
    %v1443 = vadd.f32 %v1441, %v1442
    %v1444 = vtanh.pop %v1443
    %v1445 = vmul.f32 %v1440, %v1444
    %s1446 = scalar_lea.vmem [#allocation4], 32
    %v1447 = vld [vmem:[%s1446] sm:$0xff]
    %v1448 = vld [vmem:[%s1446 + $0x8] sm:$0xff]
    %1450 = vst [vmem:[#allocation1] ss:$4 sm:$0xff] %v1445
    %v1451 = vld.sshfl [vmem:[#allocation1] sm:$0xff pattern:$0x73625140]
    %v1452 = vld.sshfl [vmem:[#allocation1 + $0x8] sm:$0xff pattern:$0x73625140]
    %v1455 = vpack.c.bf16 %v1451, %v1451
    %v1456 = vpack.c.bf16 %v1452, %v1452
    %1457 = vmatpush.bf16.msra.mxu0 %v630
    %1458 = vmatpush.bf16.msra.mxu0 %v622
    %1459 = vmatpush.bf16.msra.mxu0 %v614
    %1460 = vmatpush.bf16.msra.mxu0 %v606
    %1461 = vmatpush.bf16.msra.mxu0 %v598
    %1462 = vmatpush.bf16.msra.mxu0 %v590
    %1463 = vmatpush.bf16.msra.mxu0 %v582
    %1464 = vmatpush.bf16.msra.mxu0 %v574
    %1465 = vmatmul.bf16.gmra.mxu0 %v1455
    %v1466 = vpop.f32.mrf.mxu0
    %v1467 = vadd.f32 0.0, %v1466
    %v1468 = vpop.f32.mrf.mxu0
    %1469 = vdwg.mxu0
    %1470 = vmatpush.bf16.msra.mxu0 %v694
    %1471 = vmatpush.bf16.msra.mxu0 %v686
    %1472 = vmatpush.bf16.msra.mxu0 %v678
    %1473 = vmatpush.bf16.msra.mxu0 %v670
    %1474 = vmatpush.bf16.msra.mxu0 %v662
    %1475 = vmatpush.bf16.msra.mxu0 %v654
    %1476 = vmatpush.bf16.msra.mxu0 %v646
    %1477 = vmatpush.bf16.msra.mxu0 %v638
    %1478 = vmatmul.bf16.gmra.mxu0 %v1456
    %v1479 = vpop.f32.mrf.mxu0
    %v1480 = vadd.f32 %v1467, %v1479
    %v1481 = vpop.f32.mrf.mxu0
    %1482 = vdwg.mxu0
    %1483 = vmatpush.bf16.msra.mxu0 %v631
    %1484 = vmatpush.bf16.msra.mxu0 %v623
    %1485 = vmatpush.bf16.msra.mxu0 %v615
    %1486 = vmatpush.bf16.msra.mxu0 %v607
    %1487 = vmatpush.bf16.msra.mxu0 %v599
    %1488 = vmatpush.bf16.msra.mxu0 %v591
    %1489 = vmatpush.bf16.msra.mxu0 %v583
    %1490 = vmatpush.bf16.msra.mxu0 %v575
    %1491 = vmatmul.bf16.gmra.mxu0 %v1455
    %v1492 = vpop.f32.mrf.mxu0
    %v1493 = vadd.f32 0.0, %v1492
    %v1494 = vpop.f32.mrf.mxu0
    %1495 = vdwg.mxu0
    %1496 = vmatpush.bf16.msra.mxu0 %v695
    %1497 = vmatpush.bf16.msra.mxu0 %v687
    %1498 = vmatpush.bf16.msra.mxu0 %v679
    %1499 = vmatpush.bf16.msra.mxu0 %v671
    %1500 = vmatpush.bf16.msra.mxu0 %v663
    %1501 = vmatpush.bf16.msra.mxu0 %v655
    %1502 = vmatpush.bf16.msra.mxu0 %v647
    %1503 = vmatpush.bf16.msra.mxu0 %v639
    %1504 = vmatmul.bf16.gmra.mxu0 %v1456
    %v1505 = vpop.f32.mrf.mxu0
    %v1506 = vadd.f32 %v1493, %v1505
    %v1507 = vpop.f32.mrf.mxu0
    %1508 = vdwg.mxu0
    %1509 = vmatpush.bf16.msra.mxu0 %v632
    %1510 = vmatpush.bf16.msra.mxu0 %v624
    %1511 = vmatpush.bf16.msra.mxu0 %v616
    %1512 = vmatpush.bf16.msra.mxu0 %v608
    %1513 = vmatpush.bf16.msra.mxu0 %v600
    %1514 = vmatpush.bf16.msra.mxu0 %v592
    %1515 = vmatpush.bf16.msra.mxu0 %v584
    %1516 = vmatpush.bf16.msra.mxu0 %v576
    %1517 = vmatmul.bf16.gmra.mxu0 %v1455
    %v1518 = vpop.f32.mrf.mxu0
    %v1519 = vadd.f32 0.0, %v1518
    %v1520 = vpop.f32.mrf.mxu0
    %1521 = vdwg.mxu0
    %1522 = vmatpush.bf16.msra.mxu0 %v696
    %1523 = vmatpush.bf16.msra.mxu0 %v688
    %1524 = vmatpush.bf16.msra.mxu0 %v680
    %1525 = vmatpush.bf16.msra.mxu0 %v672
    %1526 = vmatpush.bf16.msra.mxu0 %v664
    %1527 = vmatpush.bf16.msra.mxu0 %v656
    %1528 = vmatpush.bf16.msra.mxu0 %v648
    %1529 = vmatpush.bf16.msra.mxu0 %v640
    %1530 = vmatmul.bf16.gmra.mxu0 %v1456
    %v1531 = vpop.f32.mrf.mxu0
    %v1532 = vadd.f32 %v1519, %v1531
    %v1533 = vpop.f32.mrf.mxu0
    %1534 = vdwg.mxu0
    %1535 = vmatpush.bf16.msra.mxu0 %v633
    %1536 = vmatpush.bf16.msra.mxu0 %v625
    %1537 = vmatpush.bf16.msra.mxu0 %v617
    %1538 = vmatpush.bf16.msra.mxu0 %v609
    %1539 = vmatpush.bf16.msra.mxu0 %v601
    %1540 = vmatpush.bf16.msra.mxu0 %v593
    %1541 = vmatpush.bf16.msra.mxu0 %v585
    %1542 = vmatpush.bf16.msra.mxu0 %v577
    %1543 = vmatmul.bf16.gmra.mxu0 %v1455
    %v1544 = vpop.f32.mrf.mxu0
    %v1545 = vadd.f32 0.0, %v1544
    %v1546 = vpop.f32.mrf.mxu0
    %1547 = vdwg.mxu0
    %1548 = vmatpush.bf16.msra.mxu0 %v697
    %1549 = vmatpush.bf16.msra.mxu0 %v689
    %1550 = vmatpush.bf16.msra.mxu0 %v681
    %1551 = vmatpush.bf16.msra.mxu0 %v673
    %1552 = vmatpush.bf16.msra.mxu0 %v665
    %1553 = vmatpush.bf16.msra.mxu0 %v657
    %1554 = vmatpush.bf16.msra.mxu0 %v649
    %1555 = vmatpush.bf16.msra.mxu0 %v641
    %1556 = vmatmul.bf16.gmra.mxu0 %v1456
    %v1557 = vpop.f32.mrf.mxu0
    %v1558 = vadd.f32 %v1545, %v1557
    %v1559 = vpop.f32.mrf.mxu0
    %1560 = vdwg.mxu0
    %1561 = vmatpush.bf16.msra.mxu0 %v634
    %1562 = vmatpush.bf16.msra.mxu0 %v626
    %1563 = vmatpush.bf16.msra.mxu0 %v618
    %1564 = vmatpush.bf16.msra.mxu0 %v610
    %1565 = vmatpush.bf16.msra.mxu0 %v602
    %1566 = vmatpush.bf16.msra.mxu0 %v594
    %1567 = vmatpush.bf16.msra.mxu0 %v586
    %1568 = vmatpush.bf16.msra.mxu0 %v578
    %1569 = vmatmul.bf16.gmra.mxu0 %v1455
    %v1570 = vpop.f32.mrf.mxu0
    %v1571 = vadd.f32 0.0, %v1570
    %v1572 = vpop.f32.mrf.mxu0
    %1573 = vdwg.mxu0
    %1574 = vmatpush.bf16.msra.mxu0 %v698
    %1575 = vmatpush.bf16.msra.mxu0 %v690
    %1576 = vmatpush.bf16.msra.mxu0 %v682
    %1577 = vmatpush.bf16.msra.mxu0 %v674
    %1578 = vmatpush.bf16.msra.mxu0 %v666
    %1579 = vmatpush.bf16.msra.mxu0 %v658
    %1580 = vmatpush.bf16.msra.mxu0 %v650
    %1581 = vmatpush.bf16.msra.mxu0 %v642
    %1582 = vmatmul.bf16.gmra.mxu0 %v1456
    %v1583 = vpop.f32.mrf.mxu0
    %v1584 = vadd.f32 %v1571, %v1583
    %v1585 = vpop.f32.mrf.mxu0
    %1586 = vdwg.mxu0
    %1587 = vmatpush.bf16.msra.mxu0 %v635
    %1588 = vmatpush.bf16.msra.mxu0 %v627
    %1589 = vmatpush.bf16.msra.mxu0 %v619
    %1590 = vmatpush.bf16.msra.mxu0 %v611
    %1591 = vmatpush.bf16.msra.mxu0 %v603
    %1592 = vmatpush.bf16.msra.mxu0 %v595
    %1593 = vmatpush.bf16.msra.mxu0 %v587
    %1594 = vmatpush.bf16.msra.mxu0 %v579
    %1595 = vmatmul.bf16.gmra.mxu0 %v1455
    %v1596 = vpop.f32.mrf.mxu0
    %v1597 = vadd.f32 0.0, %v1596
    %v1598 = vpop.f32.mrf.mxu0
    %1599 = vdwg.mxu0
    %1600 = vmatpush.bf16.msra.mxu0 %v699
    %1601 = vmatpush.bf16.msra.mxu0 %v691
    %1602 = vmatpush.bf16.msra.mxu0 %v683
    %1603 = vmatpush.bf16.msra.mxu0 %v675
    %1604 = vmatpush.bf16.msra.mxu0 %v667
    %1605 = vmatpush.bf16.msra.mxu0 %v659
    %1606 = vmatpush.bf16.msra.mxu0 %v651
    %1607 = vmatpush.bf16.msra.mxu0 %v643
    %1608 = vmatmul.bf16.gmra.mxu0 %v1456
    %v1609 = vpop.f32.mrf.mxu0
    %v1610 = vadd.f32 %v1597, %v1609
    %v1611 = vpop.f32.mrf.mxu0
    %1612 = vdwg.mxu0
    %1613 = vmatpush.bf16.msra.mxu0 %v636
    %1614 = vmatpush.bf16.msra.mxu0 %v628
    %1615 = vmatpush.bf16.msra.mxu0 %v620
    %1616 = vmatpush.bf16.msra.mxu0 %v612
    %1617 = vmatpush.bf16.msra.mxu0 %v604
    %1618 = vmatpush.bf16.msra.mxu0 %v596
    %1619 = vmatpush.bf16.msra.mxu0 %v588
    %1620 = vmatpush.bf16.msra.mxu0 %v580
    %1621 = vmatmul.bf16.gmra.mxu0 %v1455
    %v1622 = vpop.f32.mrf.mxu0
    %v1623 = vadd.f32 0.0, %v1622
    %v1624 = vpop.f32.mrf.mxu0
    %1625 = vdwg.mxu0
    %1626 = vmatpush.bf16.msra.mxu0 %v700
    %1627 = vmatpush.bf16.msra.mxu0 %v692
    %1628 = vmatpush.bf16.msra.mxu0 %v684
    %1629 = vmatpush.bf16.msra.mxu0 %v676
    %1630 = vmatpush.bf16.msra.mxu0 %v668
    %1631 = vmatpush.bf16.msra.mxu0 %v660
    %1632 = vmatpush.bf16.msra.mxu0 %v652
    %1633 = vmatpush.bf16.msra.mxu0 %v644
    %1634 = vmatmul.bf16.gmra.mxu0 %v1456
    %v1635 = vpop.f32.mrf.mxu0
    %v1636 = vadd.f32 %v1623, %v1635
    %v1637 = vpop.f32.mrf.mxu0
    %1638 = vdwg.mxu0
    %1639 = vmatpush.bf16.msra.mxu0 %v637
    %1640 = vmatpush.bf16.msra.mxu0 %v629
    %1641 = vmatpush.bf16.msra.mxu0 %v621
    %1642 = vmatpush.bf16.msra.mxu0 %v613
    %1643 = vmatpush.bf16.msra.mxu0 %v605
    %1644 = vmatpush.bf16.msra.mxu0 %v597
    %1645 = vmatpush.bf16.msra.mxu0 %v589
    %1646 = vmatpush.bf16.msra.mxu0 %v581
    %1647 = vmatmul.bf16.gmra.mxu0 %v1455
    %v1648 = vpop.f32.mrf.mxu0
    %v1649 = vadd.f32 0.0, %v1648
    %v1650 = vpop.f32.mrf.mxu0
    %1651 = vdwg.mxu0
    %1652 = vmatpush.bf16.msra.mxu0 %v701
    %1653 = vmatpush.bf16.msra.mxu0 %v693
    %1654 = vmatpush.bf16.msra.mxu0 %v685
    %1655 = vmatpush.bf16.msra.mxu0 %v677
    %1656 = vmatpush.bf16.msra.mxu0 %v669
    %1657 = vmatpush.bf16.msra.mxu0 %v661
    %1658 = vmatpush.bf16.msra.mxu0 %v653
    %1659 = vmatpush.bf16.msra.mxu0 %v645
    %1660 = vmatmul.bf16.gmra.mxu0 %v1456
    %v1661 = vpop.f32.mrf.mxu0
    %v1662 = vadd.f32 %v1649, %v1661
    %v1663 = vpop.f32.mrf.mxu0
    %1664 = vdwg.mxu0
    %v1673 = vrot.slane %v1506, 6
    %v1674 = vrot.slane %v1532, 4
    %v1675 = vrot.slane %v1558, 2
    %v1676 = vrot.slane %v1610, 6
    %v1677 = vrot.slane %v1636, 4
    %v1678 = vrot.slane %v1662, 2
    %v1679 = vsel %vm1052, %v1480, %v1673
    %v1680 = vsel %vm1054, %v1674, %v1675
    %v1681 = vsel %vm1056, %v1679, %v1680
    %v1682 = vsel %vm1052, %v1584, %v1676
    %v1683 = vsel %vm1054, %v1677, %v1678
    %v1684 = vsel %vm1056, %v1682, %v1683
    %v1687 = vadd.f32 %v1447, %v1681
    %v1688 = vadd.f32 %v1448, %v1684
    %v1689 = vxor.u32 %v1687, 2147483648
    %v1690 = vmul.f32 %v1689, 1.442695
    %v1691 = vpow.pop %v1690
    %v1692 = vadd.f32 %v1691, 1.0
    %v1693 = vrcp.pop %v1692
    %v1694 = vmul.f32 %v1692, %v1693
    %v1695 = vsub.f32 1.0, %v1694
    %v1696 = vmul.f32 %v1693, %v1695
    %v1697 = vadd.f32 %v1693, %v1696
    %vm1698 = vweird.f32 %v1692
    %vm1699 = vweird.f32 %v1693
    %vm1700 = vmor %vm1698, %vm1699
    %v1701 = vsel %vm1700, %v1693, %v1697
    %v1702 = vand.u32 2147483647, %v1692
    %vm1703 = vcmp.eq.f32.partialorder %v1702, 8.507059e+37
    %v1704 = vand.u32 %v1692, 2147483648
    %v1705 = vor.u32 1.1754944e-38, %v1704
    %v1706 = vsel %vm1703, %v1705, %v1701
    %v1707 = vmul.f32 1.0, %v1706
    %v1709 = vrot.slane %v1687, 4
    %v1711 = vxor.u32 %v1709, 2147483648
    %v1712 = vmul.f32 %v1711, 1.442695
    %v1713 = vpow.pop %v1712
    %v1714 = vadd.f32 %v1713, 1.0
    %v1715 = vrcp.pop %v1714
    %v1716 = vmul.f32 %v1714, %v1715
    %v1717 = vsub.f32 1.0, %v1716
    %v1718 = vmul.f32 %v1715, %v1717
    %v1719 = vadd.f32 %v1715, %v1718
    %vm1720 = vweird.f32 %v1714
    %vm1721 = vweird.f32 %v1715
    %vm1722 = vmor %vm1720, %vm1721
    %v1723 = vsel %vm1722, %v1715, %v1719
    %v1724 = vand.u32 2147483647, %v1714
    %vm1725 = vcmp.eq.f32.partialorder %v1724, 8.507059e+37
    %v1726 = vand.u32 %v1714, 2147483648
    %v1727 = vor.u32 1.1754944e-38, %v1726
    %v1728 = vsel %vm1725, %v1727, %v1723
    %v1729 = vmul.f32 1.0, %v1728
    %v1730 = vtanh.pop %v1688
    %v1732 = vrot.slane %v1688, 4
    %v1734 = vxor.u32 %v1732, 2147483648
    %v1735 = vmul.f32 %v1734, 1.442695
    %v1736 = vpow.pop %v1735
    %v1737 = vadd.f32 %v1736, 1.0
    %v1738 = vrcp.pop %v1737
    %v1739 = vmul.f32 %v1737, %v1738
    %v1740 = vsub.f32 1.0, %v1739
    %v1741 = vmul.f32 %v1738, %v1740
    %v1742 = vadd.f32 %v1738, %v1741
    %vm1743 = vweird.f32 %v1737
    %vm1744 = vweird.f32 %v1738
    %vm1745 = vmor %vm1743, %vm1744
    %v1746 = vsel %vm1745, %v1738, %v1742
    %v1747 = vand.u32 2147483647, %v1737
    %vm1748 = vcmp.eq.f32.partialorder %v1747, 8.507059e+37
    %v1749 = vand.u32 %v1737, 2147483648
    %v1750 = vor.u32 1.1754944e-38, %v1749
    %v1751 = vsel %vm1748, %v1750, %v1746
    %v1752 = vmul.f32 1.0, %v1751
    %v1753 = vmul.f32 %v1729, %v1443
    %v1754 = vmul.f32 %v1707, %v1730
    %v1755 = vadd.f32 %v1753, %v1754
    %v1756 = vtanh.pop %v1755
    %v1757 = vmul.f32 %v1752, %v1756
    %s1758 = scalar_lea.vmem [#allocation4], 48
    %v1759 = vld [vmem:[%s1758] sm:$0xff]
    %v1760 = vld [vmem:[%s1758 + $0x8] sm:$0xff]
    %1762 = vst [vmem:[#allocation1] ss:$4 sm:$0xff] %v1757
    %v1763 = vld.sshfl [vmem:[#allocation1] sm:$0xff pattern:$0x73625140]
    %v1764 = vld.sshfl [vmem:[#allocation1 + $0x8] sm:$0xff pattern:$0x73625140]
    %v1767 = vpack.c.bf16 %v1763, %v1763
    %v1768 = vpack.c.bf16 %v1764, %v1764
    %1769 = vmatpush.bf16.msra.mxu0 %v630
    %1770 = vmatpush.bf16.msra.mxu0 %v622
    %1771 = vmatpush.bf16.msra.mxu0 %v614
    %1772 = vmatpush.bf16.msra.mxu0 %v606
    %1773 = vmatpush.bf16.msra.mxu0 %v598
    %1774 = vmatpush.bf16.msra.mxu0 %v590
    %1775 = vmatpush.bf16.msra.mxu0 %v582
    %1776 = vmatpush.bf16.msra.mxu0 %v574
    %1777 = vmatmul.bf16.gmra.mxu0 %v1767
    %v1778 = vpop.f32.mrf.mxu0
    %v1779 = vadd.f32 0.0, %v1778
    %v1780 = vpop.f32.mrf.mxu0
    %1781 = vdwg.mxu0
    %1782 = vmatpush.bf16.msra.mxu0 %v694
    %1783 = vmatpush.bf16.msra.mxu0 %v686
    %1784 = vmatpush.bf16.msra.mxu0 %v678
    %1785 = vmatpush.bf16.msra.mxu0 %v670
    %1786 = vmatpush.bf16.msra.mxu0 %v662
    %1787 = vmatpush.bf16.msra.mxu0 %v654
    %1788 = vmatpush.bf16.msra.mxu0 %v646
    %1789 = vmatpush.bf16.msra.mxu0 %v638
    %1790 = vmatmul.bf16.gmra.mxu0 %v1768
    %v1791 = vpop.f32.mrf.mxu0
    %v1792 = vadd.f32 %v1779, %v1791
    %v1793 = vpop.f32.mrf.mxu0
    %1794 = vdwg.mxu0
    %1795 = vmatpush.bf16.msra.mxu0 %v631
    %1796 = vmatpush.bf16.msra.mxu0 %v623
    %1797 = vmatpush.bf16.msra.mxu0 %v615
    %1798 = vmatpush.bf16.msra.mxu0 %v607
    %1799 = vmatpush.bf16.msra.mxu0 %v599
    %1800 = vmatpush.bf16.msra.mxu0 %v591
    %1801 = vmatpush.bf16.msra.mxu0 %v583
    %1802 = vmatpush.bf16.msra.mxu0 %v575
    %1803 = vmatmul.bf16.gmra.mxu0 %v1767
    %v1804 = vpop.f32.mrf.mxu0
    %v1805 = vadd.f32 0.0, %v1804
    %v1806 = vpop.f32.mrf.mxu0
    %1807 = vdwg.mxu0
    %1808 = vmatpush.bf16.msra.mxu0 %v695
    %1809 = vmatpush.bf16.msra.mxu0 %v687
    %1810 = vmatpush.bf16.msra.mxu0 %v679
    %1811 = vmatpush.bf16.msra.mxu0 %v671
    %1812 = vmatpush.bf16.msra.mxu0 %v663
    %1813 = vmatpush.bf16.msra.mxu0 %v655
    %1814 = vmatpush.bf16.msra.mxu0 %v647
    %1815 = vmatpush.bf16.msra.mxu0 %v639
    %1816 = vmatmul.bf16.gmra.mxu0 %v1768
    %v1817 = vpop.f32.mrf.mxu0
    %v1818 = vadd.f32 %v1805, %v1817
    %v1819 = vpop.f32.mrf.mxu0
    %1820 = vdwg.mxu0
    %1821 = vmatpush.bf16.msra.mxu0 %v632
    %1822 = vmatpush.bf16.msra.mxu0 %v624
    %1823 = vmatpush.bf16.msra.mxu0 %v616
    %1824 = vmatpush.bf16.msra.mxu0 %v608
    %1825 = vmatpush.bf16.msra.mxu0 %v600
    %1826 = vmatpush.bf16.msra.mxu0 %v592
    %1827 = vmatpush.bf16.msra.mxu0 %v584
    %1828 = vmatpush.bf16.msra.mxu0 %v576
    %1829 = vmatmul.bf16.gmra.mxu0 %v1767
    %v1830 = vpop.f32.mrf.mxu0
    %v1831 = vadd.f32 0.0, %v1830
    %v1832 = vpop.f32.mrf.mxu0
    %1833 = vdwg.mxu0
    %1834 = vmatpush.bf16.msra.mxu0 %v696
    %1835 = vmatpush.bf16.msra.mxu0 %v688
    %1836 = vmatpush.bf16.msra.mxu0 %v680
    %1837 = vmatpush.bf16.msra.mxu0 %v672
    %1838 = vmatpush.bf16.msra.mxu0 %v664
    %1839 = vmatpush.bf16.msra.mxu0 %v656
    %1840 = vmatpush.bf16.msra.mxu0 %v648
    %1841 = vmatpush.bf16.msra.mxu0 %v640
    %1842 = vmatmul.bf16.gmra.mxu0 %v1768
    %v1843 = vpop.f32.mrf.mxu0
    %v1844 = vadd.f32 %v1831, %v1843
    %v1845 = vpop.f32.mrf.mxu0
    %1846 = vdwg.mxu0
    %1847 = vmatpush.bf16.msra.mxu0 %v633
    %1848 = vmatpush.bf16.msra.mxu0 %v625
    %1849 = vmatpush.bf16.msra.mxu0 %v617
    %1850 = vmatpush.bf16.msra.mxu0 %v609
    %1851 = vmatpush.bf16.msra.mxu0 %v601
    %1852 = vmatpush.bf16.msra.mxu0 %v593
    %1853 = vmatpush.bf16.msra.mxu0 %v585
    %1854 = vmatpush.bf16.msra.mxu0 %v577
    %1855 = vmatmul.bf16.gmra.mxu0 %v1767
    %v1856 = vpop.f32.mrf.mxu0
    %v1857 = vadd.f32 0.0, %v1856
    %v1858 = vpop.f32.mrf.mxu0
    %1859 = vdwg.mxu0
    %1860 = vmatpush.bf16.msra.mxu0 %v697
    %1861 = vmatpush.bf16.msra.mxu0 %v689
    %1862 = vmatpush.bf16.msra.mxu0 %v681
    %1863 = vmatpush.bf16.msra.mxu0 %v673
    %1864 = vmatpush.bf16.msra.mxu0 %v665
    %1865 = vmatpush.bf16.msra.mxu0 %v657
    %1866 = vmatpush.bf16.msra.mxu0 %v649
    %1867 = vmatpush.bf16.msra.mxu0 %v641
    %1868 = vmatmul.bf16.gmra.mxu0 %v1768
    %v1869 = vpop.f32.mrf.mxu0
    %v1870 = vadd.f32 %v1857, %v1869
    %v1871 = vpop.f32.mrf.mxu0
    %1872 = vdwg.mxu0
    %1873 = vmatpush.bf16.msra.mxu0 %v634
    %1874 = vmatpush.bf16.msra.mxu0 %v626
    %1875 = vmatpush.bf16.msra.mxu0 %v618
    %1876 = vmatpush.bf16.msra.mxu0 %v610
    %1877 = vmatpush.bf16.msra.mxu0 %v602
    %1878 = vmatpush.bf16.msra.mxu0 %v594
    %1879 = vmatpush.bf16.msra.mxu0 %v586
    %1880 = vmatpush.bf16.msra.mxu0 %v578
    %1881 = vmatmul.bf16.gmra.mxu0 %v1767
    %v1882 = vpop.f32.mrf.mxu0
    %v1883 = vadd.f32 0.0, %v1882
    %v1884 = vpop.f32.mrf.mxu0
    %1885 = vdwg.mxu0
    %1886 = vmatpush.bf16.msra.mxu0 %v698
    %1887 = vmatpush.bf16.msra.mxu0 %v690
    %1888 = vmatpush.bf16.msra.mxu0 %v682
    %1889 = vmatpush.bf16.msra.mxu0 %v674
    %1890 = vmatpush.bf16.msra.mxu0 %v666
    %1891 = vmatpush.bf16.msra.mxu0 %v658
    %1892 = vmatpush.bf16.msra.mxu0 %v650
    %1893 = vmatpush.bf16.msra.mxu0 %v642
    %1894 = vmatmul.bf16.gmra.mxu0 %v1768
    %v1895 = vpop.f32.mrf.mxu0
    %v1896 = vadd.f32 %v1883, %v1895
    %v1897 = vpop.f32.mrf.mxu0
    %1898 = vdwg.mxu0
    %1899 = vmatpush.bf16.msra.mxu0 %v635
    %1900 = vmatpush.bf16.msra.mxu0 %v627
    %1901 = vmatpush.bf16.msra.mxu0 %v619
    %1902 = vmatpush.bf16.msra.mxu0 %v611
    %1903 = vmatpush.bf16.msra.mxu0 %v603
    %1904 = vmatpush.bf16.msra.mxu0 %v595
    %1905 = vmatpush.bf16.msra.mxu0 %v587
    %1906 = vmatpush.bf16.msra.mxu0 %v579
    %1907 = vmatmul.bf16.gmra.mxu0 %v1767
    %v1908 = vpop.f32.mrf.mxu0
    %v1909 = vadd.f32 0.0, %v1908
    %v1910 = vpop.f32.mrf.mxu0
    %1911 = vdwg.mxu0
    %1912 = vmatpush.bf16.msra.mxu0 %v699
    %1913 = vmatpush.bf16.msra.mxu0 %v691
    %1914 = vmatpush.bf16.msra.mxu0 %v683
    %1915 = vmatpush.bf16.msra.mxu0 %v675
    %1916 = vmatpush.bf16.msra.mxu0 %v667
    %1917 = vmatpush.bf16.msra.mxu0 %v659
    %1918 = vmatpush.bf16.msra.mxu0 %v651
    %1919 = vmatpush.bf16.msra.mxu0 %v643
    %1920 = vmatmul.bf16.gmra.mxu0 %v1768
    %v1921 = vpop.f32.mrf.mxu0
    %v1922 = vadd.f32 %v1909, %v1921
    %v1923 = vpop.f32.mrf.mxu0
    %1924 = vdwg.mxu0
    %1925 = vmatpush.bf16.msra.mxu0 %v636
    %1926 = vmatpush.bf16.msra.mxu0 %v628
    %1927 = vmatpush.bf16.msra.mxu0 %v620
    %1928 = vmatpush.bf16.msra.mxu0 %v612
    %1929 = vmatpush.bf16.msra.mxu0 %v604
    %1930 = vmatpush.bf16.msra.mxu0 %v596
    %1931 = vmatpush.bf16.msra.mxu0 %v588
    %1932 = vmatpush.bf16.msra.mxu0 %v580
    %1933 = vmatmul.bf16.gmra.mxu0 %v1767
    %v1934 = vpop.f32.mrf.mxu0
    %v1935 = vadd.f32 0.0, %v1934
    %v1936 = vpop.f32.mrf.mxu0
    %1937 = vdwg.mxu0
    %1938 = vmatpush.bf16.msra.mxu0 %v700
    %1939 = vmatpush.bf16.msra.mxu0 %v692
    %1940 = vmatpush.bf16.msra.mxu0 %v684
    %1941 = vmatpush.bf16.msra.mxu0 %v676
    %1942 = vmatpush.bf16.msra.mxu0 %v668
    %1943 = vmatpush.bf16.msra.mxu0 %v660
    %1944 = vmatpush.bf16.msra.mxu0 %v652
    %1945 = vmatpush.bf16.msra.mxu0 %v644
    %1946 = vmatmul.bf16.gmra.mxu0 %v1768
    %v1947 = vpop.f32.mrf.mxu0
    %v1948 = vadd.f32 %v1935, %v1947
    %v1949 = vpop.f32.mrf.mxu0
    %1950 = vdwg.mxu0
    %1951 = vmatpush.bf16.msra.mxu0 %v637
    %1952 = vmatpush.bf16.msra.mxu0 %v629
    %1953 = vmatpush.bf16.msra.mxu0 %v621
    %1954 = vmatpush.bf16.msra.mxu0 %v613
    %1955 = vmatpush.bf16.msra.mxu0 %v605
    %1956 = vmatpush.bf16.msra.mxu0 %v597
    %1957 = vmatpush.bf16.msra.mxu0 %v589
    %1958 = vmatpush.bf16.msra.mxu0 %v581
    %1959 = vmatmul.bf16.gmra.mxu0 %v1767
    %v1960 = vpop.f32.mrf.mxu0
    %v1961 = vadd.f32 0.0, %v1960
    %v1962 = vpop.f32.mrf.mxu0
    %1963 = vdwg.mxu0
    %1964 = vmatpush.bf16.msra.mxu0 %v701
    %1965 = vmatpush.bf16.msra.mxu0 %v693
    %1966 = vmatpush.bf16.msra.mxu0 %v685
    %1967 = vmatpush.bf16.msra.mxu0 %v677
    %1968 = vmatpush.bf16.msra.mxu0 %v669
    %1969 = vmatpush.bf16.msra.mxu0 %v661
    %1970 = vmatpush.bf16.msra.mxu0 %v653
    %1971 = vmatpush.bf16.msra.mxu0 %v645
    %1972 = vmatmul.bf16.gmra.mxu0 %v1768
    %v1973 = vpop.f32.mrf.mxu0
    %v1974 = vadd.f32 %v1961, %v1973
    %v1975 = vpop.f32.mrf.mxu0
    %1976 = vdwg.mxu0
    %v1985 = vrot.slane %v1818, 6
    %v1986 = vrot.slane %v1844, 4
    %v1987 = vrot.slane %v1870, 2
    %v1988 = vrot.slane %v1922, 6
    %v1989 = vrot.slane %v1948, 4
    %v1990 = vrot.slane %v1974, 2
    %v1991 = vsel %vm1052, %v1792, %v1985
    %v1992 = vsel %vm1054, %v1986, %v1987
    %v1993 = vsel %vm1056, %v1991, %v1992
    %v1994 = vsel %vm1052, %v1896, %v1988
    %v1995 = vsel %vm1054, %v1989, %v1990
    %v1996 = vsel %vm1056, %v1994, %v1995
    %v1999 = vadd.f32 %v1759, %v1993
    %v2000 = vadd.f32 %v1760, %v1996
    %v2001 = vxor.u32 %v1999, 2147483648
    %v2002 = vmul.f32 %v2001, 1.442695
    %v2003 = vpow.pop %v2002
    %v2004 = vadd.f32 %v2003, 1.0
    %v2005 = vrcp.pop %v2004
    %v2006 = vmul.f32 %v2004, %v2005
    %v2007 = vsub.f32 1.0, %v2006
    %v2008 = vmul.f32 %v2005, %v2007
    %v2009 = vadd.f32 %v2005, %v2008
    %vm2010 = vweird.f32 %v2004
    %vm2011 = vweird.f32 %v2005
    %vm2012 = vmor %vm2010, %vm2011
    %v2013 = vsel %vm2012, %v2005, %v2009
    %v2014 = vand.u32 2147483647, %v2004
    %vm2015 = vcmp.eq.f32.partialorder %v2014, 8.507059e+37
    %v2016 = vand.u32 %v2004, 2147483648
    %v2017 = vor.u32 1.1754944e-38, %v2016
    %v2018 = vsel %vm2015, %v2017, %v2013
    %v2019 = vmul.f32 1.0, %v2018
    %v2021 = vrot.slane %v1999, 4
    %v2023 = vxor.u32 %v2021, 2147483648
    %v2024 = vmul.f32 %v2023, 1.442695
    %v2025 = vpow.pop %v2024
    %v2026 = vadd.f32 %v2025, 1.0
    %v2027 = vrcp.pop %v2026
    %v2028 = vmul.f32 %v2026, %v2027
    %v2029 = vsub.f32 1.0, %v2028
    %v2030 = vmul.f32 %v2027, %v2029
    %v2031 = vadd.f32 %v2027, %v2030
    %vm2032 = vweird.f32 %v2026
    %vm2033 = vweird.f32 %v2027
    %vm2034 = vmor %vm2032, %vm2033
    %v2035 = vsel %vm2034, %v2027, %v2031
    %v2036 = vand.u32 2147483647, %v2026
    %vm2037 = vcmp.eq.f32.partialorder %v2036, 8.507059e+37
    %v2038 = vand.u32 %v2026, 2147483648
    %v2039 = vor.u32 1.1754944e-38, %v2038
    %v2040 = vsel %vm2037, %v2039, %v2035
    %v2041 = vmul.f32 1.0, %v2040
    %v2042 = vtanh.pop %v2000
    %v2044 = vrot.slane %v2000, 4
    %v2046 = vxor.u32 %v2044, 2147483648
    %v2047 = vmul.f32 %v2046, 1.442695
    %v2048 = vpow.pop %v2047
    %v2049 = vadd.f32 %v2048, 1.0
    %v2050 = vrcp.pop %v2049
    %v2051 = vmul.f32 %v2049, %v2050
    %v2052 = vsub.f32 1.0, %v2051
    %v2053 = vmul.f32 %v2050, %v2052
    %v2054 = vadd.f32 %v2050, %v2053
    %vm2055 = vweird.f32 %v2049
    %vm2056 = vweird.f32 %v2050
    %vm2057 = vmor %vm2055, %vm2056
    %v2058 = vsel %vm2057, %v2050, %v2054
    %v2059 = vand.u32 2147483647, %v2049
    %vm2060 = vcmp.eq.f32.partialorder %v2059, 8.507059e+37
    %v2061 = vand.u32 %v2049, 2147483648
    %v2062 = vor.u32 1.1754944e-38, %v2061
    %v2063 = vsel %vm2060, %v2062, %v2058
    %v2064 = vmul.f32 1.0, %v2063
    %v2065 = vmul.f32 %v2041, %v1755
    %v2066 = vmul.f32 %v2019, %v2042
    %v2067 = vadd.f32 %v2065, %v2066
    %v2068 = vtanh.pop %v2067
    %v2069 = vmul.f32 %v2064, %v2068
    %s2070 = scalar_lea.vmem [#allocation4], 64
    %v2071 = vld [vmem:[%s2070] sm:$0xff]
    %v2072 = vld [vmem:[%s2070 + $0x8] sm:$0xff]
    %2074 = vst [vmem:[#allocation1] ss:$4 sm:$0xff] %v2069
    %v2075 = vld.sshfl [vmem:[#allocation1] sm:$0xff pattern:$0x73625140]
    %v2076 = vld.sshfl [vmem:[#allocation1 + $0x8] sm:$0xff pattern:$0x73625140]
    %v2079 = vpack.c.bf16 %v2075, %v2075
    %v2080 = vpack.c.bf16 %v2076, %v2076
    %2081 = vmatpush.bf16.msra.mxu0 %v630
    %2082 = vmatpush.bf16.msra.mxu0 %v622
    %2083 = vmatpush.bf16.msra.mxu0 %v614
    %2084 = vmatpush.bf16.msra.mxu0 %v606
    %2085 = vmatpush.bf16.msra.mxu0 %v598
    %2086 = vmatpush.bf16.msra.mxu0 %v590
    %2087 = vmatpush.bf16.msra.mxu0 %v582
    %2088 = vmatpush.bf16.msra.mxu0 %v574
    %2089 = vmatmul.bf16.gmra.mxu0 %v2079
    %v2090 = vpop.f32.mrf.mxu0
    %v2091 = vadd.f32 0.0, %v2090
    %v2092 = vpop.f32.mrf.mxu0
    %2093 = vdwg.mxu0
    %2094 = vmatpush.bf16.msra.mxu0 %v694
    %2095 = vmatpush.bf16.msra.mxu0 %v686
    %2096 = vmatpush.bf16.msra.mxu0 %v678
    %2097 = vmatpush.bf16.msra.mxu0 %v670
    %2098 = vmatpush.bf16.msra.mxu0 %v662
    %2099 = vmatpush.bf16.msra.mxu0 %v654
    %2100 = vmatpush.bf16.msra.mxu0 %v646
    %2101 = vmatpush.bf16.msra.mxu0 %v638
    %2102 = vmatmul.bf16.gmra.mxu0 %v2080
    %v2103 = vpop.f32.mrf.mxu0
    %v2104 = vadd.f32 %v2091, %v2103
    %v2105 = vpop.f32.mrf.mxu0
    %2106 = vdwg.mxu0
    %2107 = vmatpush.bf16.msra.mxu0 %v631
    %2108 = vmatpush.bf16.msra.mxu0 %v623
    %2109 = vmatpush.bf16.msra.mxu0 %v615
    %2110 = vmatpush.bf16.msra.mxu0 %v607
    %2111 = vmatpush.bf16.msra.mxu0 %v599
    %2112 = vmatpush.bf16.msra.mxu0 %v591
    %2113 = vmatpush.bf16.msra.mxu0 %v583
    %2114 = vmatpush.bf16.msra.mxu0 %v575
    %2115 = vmatmul.bf16.gmra.mxu0 %v2079
    %v2116 = vpop.f32.mrf.mxu0
    %v2117 = vadd.f32 0.0, %v2116
    %v2118 = vpop.f32.mrf.mxu0
    %2119 = vdwg.mxu0
    %2120 = vmatpush.bf16.msra.mxu0 %v695
    %2121 = vmatpush.bf16.msra.mxu0 %v687
    %2122 = vmatpush.bf16.msra.mxu0 %v679
    %2123 = vmatpush.bf16.msra.mxu0 %v671
    %2124 = vmatpush.bf16.msra.mxu0 %v663
    %2125 = vmatpush.bf16.msra.mxu0 %v655
    %2126 = vmatpush.bf16.msra.mxu0 %v647
    %2127 = vmatpush.bf16.msra.mxu0 %v639
    %2128 = vmatmul.bf16.gmra.mxu0 %v2080
    %v2129 = vpop.f32.mrf.mxu0
    %v2130 = vadd.f32 %v2117, %v2129
    %v2131 = vpop.f32.mrf.mxu0
    %2132 = vdwg.mxu0
    %2133 = vmatpush.bf16.msra.mxu0 %v632
    %2134 = vmatpush.bf16.msra.mxu0 %v624
    %2135 = vmatpush.bf16.msra.mxu0 %v616
    %2136 = vmatpush.bf16.msra.mxu0 %v608
    %2137 = vmatpush.bf16.msra.mxu0 %v600
    %2138 = vmatpush.bf16.msra.mxu0 %v592
    %2139 = vmatpush.bf16.msra.mxu0 %v584
    %2140 = vmatpush.bf16.msra.mxu0 %v576
    %2141 = vmatmul.bf16.gmra.mxu0 %v2079
    %v2142 = vpop.f32.mrf.mxu0
    %v2143 = vadd.f32 0.0, %v2142
    %v2144 = vpop.f32.mrf.mxu0
    %2145 = vdwg.mxu0
    %2146 = vmatpush.bf16.msra.mxu0 %v696
    %2147 = vmatpush.bf16.msra.mxu0 %v688
    %2148 = vmatpush.bf16.msra.mxu0 %v680
    %2149 = vmatpush.bf16.msra.mxu0 %v672
    %2150 = vmatpush.bf16.msra.mxu0 %v664
    %2151 = vmatpush.bf16.msra.mxu0 %v656
    %2152 = vmatpush.bf16.msra.mxu0 %v648
    %2153 = vmatpush.bf16.msra.mxu0 %v640
    %2154 = vmatmul.bf16.gmra.mxu0 %v2080
    %v2155 = vpop.f32.mrf.mxu0
    %v2156 = vadd.f32 %v2143, %v2155
    %v2157 = vpop.f32.mrf.mxu0
    %2158 = vdwg.mxu0
    %2159 = vmatpush.bf16.msra.mxu0 %v633
    %2160 = vmatpush.bf16.msra.mxu0 %v625
    %2161 = vmatpush.bf16.msra.mxu0 %v617
    %2162 = vmatpush.bf16.msra.mxu0 %v609
    %2163 = vmatpush.bf16.msra.mxu0 %v601
    %2164 = vmatpush.bf16.msra.mxu0 %v593
    %2165 = vmatpush.bf16.msra.mxu0 %v585
    %2166 = vmatpush.bf16.msra.mxu0 %v577
    %2167 = vmatmul.bf16.gmra.mxu0 %v2079
    %v2168 = vpop.f32.mrf.mxu0
    %v2169 = vadd.f32 0.0, %v2168
    %v2170 = vpop.f32.mrf.mxu0
    %2171 = vdwg.mxu0
    %2172 = vmatpush.bf16.msra.mxu0 %v697
    %2173 = vmatpush.bf16.msra.mxu0 %v689
    %2174 = vmatpush.bf16.msra.mxu0 %v681
    %2175 = vmatpush.bf16.msra.mxu0 %v673
    %2176 = vmatpush.bf16.msra.mxu0 %v665
    %2177 = vmatpush.bf16.msra.mxu0 %v657
    %2178 = vmatpush.bf16.msra.mxu0 %v649
    %2179 = vmatpush.bf16.msra.mxu0 %v641
    %2180 = vmatmul.bf16.gmra.mxu0 %v2080
    %v2181 = vpop.f32.mrf.mxu0
    %v2182 = vadd.f32 %v2169, %v2181
    %v2183 = vpop.f32.mrf.mxu0
    %2184 = vdwg.mxu0
    %2185 = vmatpush.bf16.msra.mxu0 %v634
    %2186 = vmatpush.bf16.msra.mxu0 %v626
    %2187 = vmatpush.bf16.msra.mxu0 %v618
    %2188 = vmatpush.bf16.msra.mxu0 %v610
    %2189 = vmatpush.bf16.msra.mxu0 %v602
    %2190 = vmatpush.bf16.msra.mxu0 %v594
    %2191 = vmatpush.bf16.msra.mxu0 %v586
    %2192 = vmatpush.bf16.msra.mxu0 %v578
    %2193 = vmatmul.bf16.gmra.mxu0 %v2079
    %v2194 = vpop.f32.mrf.mxu0
    %v2195 = vadd.f32 0.0, %v2194
    %v2196 = vpop.f32.mrf.mxu0
    %2197 = vdwg.mxu0
    %2198 = vmatpush.bf16.msra.mxu0 %v698
    %2199 = vmatpush.bf16.msra.mxu0 %v690
    %2200 = vmatpush.bf16.msra.mxu0 %v682
    %2201 = vmatpush.bf16.msra.mxu0 %v674
    %2202 = vmatpush.bf16.msra.mxu0 %v666
    %2203 = vmatpush.bf16.msra.mxu0 %v658
    %2204 = vmatpush.bf16.msra.mxu0 %v650
    %2205 = vmatpush.bf16.msra.mxu0 %v642
    %2206 = vmatmul.bf16.gmra.mxu0 %v2080
    %v2207 = vpop.f32.mrf.mxu0
    %v2208 = vadd.f32 %v2195, %v2207
    %v2209 = vpop.f32.mrf.mxu0
    %2210 = vdwg.mxu0
    %2211 = vmatpush.bf16.msra.mxu0 %v635
    %2212 = vmatpush.bf16.msra.mxu0 %v627
    %2213 = vmatpush.bf16.msra.mxu0 %v619
    %2214 = vmatpush.bf16.msra.mxu0 %v611
    %2215 = vmatpush.bf16.msra.mxu0 %v603
    %2216 = vmatpush.bf16.msra.mxu0 %v595
    %2217 = vmatpush.bf16.msra.mxu0 %v587
    %2218 = vmatpush.bf16.msra.mxu0 %v579
    %2219 = vmatmul.bf16.gmra.mxu0 %v2079
    %v2220 = vpop.f32.mrf.mxu0
    %v2221 = vadd.f32 0.0, %v2220
    %v2222 = vpop.f32.mrf.mxu0
    %2223 = vdwg.mxu0
    %2224 = vmatpush.bf16.msra.mxu0 %v699
    %2225 = vmatpush.bf16.msra.mxu0 %v691
    %2226 = vmatpush.bf16.msra.mxu0 %v683
    %2227 = vmatpush.bf16.msra.mxu0 %v675
    %2228 = vmatpush.bf16.msra.mxu0 %v667
    %2229 = vmatpush.bf16.msra.mxu0 %v659
    %2230 = vmatpush.bf16.msra.mxu0 %v651
    %2231 = vmatpush.bf16.msra.mxu0 %v643
    %2232 = vmatmul.bf16.gmra.mxu0 %v2080
    %v2233 = vpop.f32.mrf.mxu0
    %v2234 = vadd.f32 %v2221, %v2233
    %v2235 = vpop.f32.mrf.mxu0
    %2236 = vdwg.mxu0
    %2237 = vmatpush.bf16.msra.mxu0 %v636
    %2238 = vmatpush.bf16.msra.mxu0 %v628
    %2239 = vmatpush.bf16.msra.mxu0 %v620
    %2240 = vmatpush.bf16.msra.mxu0 %v612
    %2241 = vmatpush.bf16.msra.mxu0 %v604
    %2242 = vmatpush.bf16.msra.mxu0 %v596
    %2243 = vmatpush.bf16.msra.mxu0 %v588
    %2244 = vmatpush.bf16.msra.mxu0 %v580
    %2245 = vmatmul.bf16.gmra.mxu0 %v2079
    %v2246 = vpop.f32.mrf.mxu0
    %v2247 = vadd.f32 0.0, %v2246
    %v2248 = vpop.f32.mrf.mxu0
    %2249 = vdwg.mxu0
    %2250 = vmatpush.bf16.msra.mxu0 %v700
    %2251 = vmatpush.bf16.msra.mxu0 %v692
    %2252 = vmatpush.bf16.msra.mxu0 %v684
    %2253 = vmatpush.bf16.msra.mxu0 %v676
    %2254 = vmatpush.bf16.msra.mxu0 %v668
    %2255 = vmatpush.bf16.msra.mxu0 %v660
    %2256 = vmatpush.bf16.msra.mxu0 %v652
    %2257 = vmatpush.bf16.msra.mxu0 %v644
    %2258 = vmatmul.bf16.gmra.mxu0 %v2080
    %v2259 = vpop.f32.mrf.mxu0
    %v2260 = vadd.f32 %v2247, %v2259
    %v2261 = vpop.f32.mrf.mxu0
    %2262 = vdwg.mxu0
    %2263 = vmatpush.bf16.msra.mxu0 %v637
    %2264 = vmatpush.bf16.msra.mxu0 %v629
    %2265 = vmatpush.bf16.msra.mxu0 %v621
    %2266 = vmatpush.bf16.msra.mxu0 %v613
    %2267 = vmatpush.bf16.msra.mxu0 %v605
    %2268 = vmatpush.bf16.msra.mxu0 %v597
    %2269 = vmatpush.bf16.msra.mxu0 %v589
    %2270 = vmatpush.bf16.msra.mxu0 %v581
    %2271 = vmatmul.bf16.gmra.mxu0 %v2079
    %v2272 = vpop.f32.mrf.mxu0
    %v2273 = vadd.f32 0.0, %v2272
    %v2274 = vpop.f32.mrf.mxu0
    %2275 = vdwg.mxu0
    %2276 = vmatpush.bf16.msra.mxu0 %v701
    %2277 = vmatpush.bf16.msra.mxu0 %v693
    %2278 = vmatpush.bf16.msra.mxu0 %v685
    %2279 = vmatpush.bf16.msra.mxu0 %v677
    %2280 = vmatpush.bf16.msra.mxu0 %v669
    %2281 = vmatpush.bf16.msra.mxu0 %v661
    %2282 = vmatpush.bf16.msra.mxu0 %v653
    %2283 = vmatpush.bf16.msra.mxu0 %v645
    %2284 = vmatmul.bf16.gmra.mxu0 %v2080
    %v2285 = vpop.f32.mrf.mxu0
    %v2286 = vadd.f32 %v2273, %v2285
    %v2287 = vpop.f32.mrf.mxu0
    %2288 = vdwg.mxu0
    %v2297 = vrot.slane %v2130, 6
    %v2298 = vrot.slane %v2156, 4
    %v2299 = vrot.slane %v2182, 2
    %v2300 = vrot.slane %v2234, 6
    %v2301 = vrot.slane %v2260, 4
    %v2302 = vrot.slane %v2286, 2
    %v2303 = vsel %vm1052, %v2104, %v2297
    %v2304 = vsel %vm1054, %v2298, %v2299
    %v2305 = vsel %vm1056, %v2303, %v2304
    %v2306 = vsel %vm1052, %v2208, %v2300
    %v2307 = vsel %vm1054, %v2301, %v2302
    %v2308 = vsel %vm1056, %v2306, %v2307
    %v2311 = vadd.f32 %v2071, %v2305
    %v2312 = vadd.f32 %v2072, %v2308
    %v2313 = vxor.u32 %v2311, 2147483648
    %v2314 = vmul.f32 %v2313, 1.442695
    %v2315 = vpow.pop %v2314
    %v2316 = vadd.f32 %v2315, 1.0
    %v2317 = vrcp.pop %v2316
    %v2318 = vmul.f32 %v2316, %v2317
    %v2319 = vsub.f32 1.0, %v2318
    %v2320 = vmul.f32 %v2317, %v2319
    %v2321 = vadd.f32 %v2317, %v2320
    %vm2322 = vweird.f32 %v2316
    %vm2323 = vweird.f32 %v2317
    %vm2324 = vmor %vm2322, %vm2323
    %v2325 = vsel %vm2324, %v2317, %v2321
    %v2326 = vand.u32 2147483647, %v2316
    %vm2327 = vcmp.eq.f32.partialorder %v2326, 8.507059e+37
    %v2328 = vand.u32 %v2316, 2147483648
    %v2329 = vor.u32 1.1754944e-38, %v2328
    %v2330 = vsel %vm2327, %v2329, %v2325
    %v2331 = vmul.f32 1.0, %v2330
    %v2333 = vrot.slane %v2311, 4
    %v2335 = vxor.u32 %v2333, 2147483648
    %v2336 = vmul.f32 %v2335, 1.442695
    %v2337 = vpow.pop %v2336
    %v2338 = vadd.f32 %v2337, 1.0
    %v2339 = vrcp.pop %v2338
    %v2340 = vmul.f32 %v2338, %v2339
    %v2341 = vsub.f32 1.0, %v2340
    %v2342 = vmul.f32 %v2339, %v2341
    %v2343 = vadd.f32 %v2339, %v2342
    %vm2344 = vweird.f32 %v2338
    %vm2345 = vweird.f32 %v2339
    %vm2346 = vmor %vm2344, %vm2345
    %v2347 = vsel %vm2346, %v2339, %v2343
    %v2348 = vand.u32 2147483647, %v2338
    %vm2349 = vcmp.eq.f32.partialorder %v2348, 8.507059e+37
    %v2350 = vand.u32 %v2338, 2147483648
    %v2351 = vor.u32 1.1754944e-38, %v2350
    %v2352 = vsel %vm2349, %v2351, %v2347
    %v2353 = vmul.f32 1.0, %v2352
    %v2354 = vtanh.pop %v2312
    %v2356 = vrot.slane %v2312, 4
    %v2358 = vxor.u32 %v2356, 2147483648
    %v2359 = vmul.f32 %v2358, 1.442695
    %v2360 = vpow.pop %v2359
    %v2361 = vadd.f32 %v2360, 1.0
    %v2362 = vrcp.pop %v2361
    %v2363 = vmul.f32 %v2361, %v2362
    %v2364 = vsub.f32 1.0, %v2363
    %v2365 = vmul.f32 %v2362, %v2364
    %v2366 = vadd.f32 %v2362, %v2365
    %vm2367 = vweird.f32 %v2361
    %vm2368 = vweird.f32 %v2362
    %vm2369 = vmor %vm2367, %vm2368
    %v2370 = vsel %vm2369, %v2362, %v2366
    %v2371 = vand.u32 2147483647, %v2361
    %vm2372 = vcmp.eq.f32.partialorder %v2371, 8.507059e+37
    %v2373 = vand.u32 %v2361, 2147483648
    %v2374 = vor.u32 1.1754944e-38, %v2373
    %v2375 = vsel %vm2372, %v2374, %v2370
    %v2376 = vmul.f32 1.0, %v2375
    %v2377 = vmul.f32 %v2353, %v2067
    %v2378 = vmul.f32 %v2331, %v2354
    %v2379 = vadd.f32 %v2377, %v2378
    %v2380 = vtanh.pop %v2379
    %v2381 = vmul.f32 %v2376, %v2380
    %s2382 = scalar_lea.vmem [#allocation4], 80
    %v2383 = vld [vmem:[%s2382] sm:$0xff]
    %v2384 = vld [vmem:[%s2382 + $0x8] sm:$0xff]
    %2386 = vst [vmem:[#allocation1] ss:$4 sm:$0xff] %v2381
    %v2387 = vld.sshfl [vmem:[#allocation1] sm:$0xff pattern:$0x73625140]
    %v2388 = vld.sshfl [vmem:[#allocation1 + $0x8] sm:$0xff pattern:$0x73625140]
    %v2391 = vpack.c.bf16 %v2387, %v2387
    %v2392 = vpack.c.bf16 %v2388, %v2388
    %2393 = vmatpush.bf16.msra.mxu0 %v630
    %2394 = vmatpush.bf16.msra.mxu0 %v622
    %2395 = vmatpush.bf16.msra.mxu0 %v614
    %2396 = vmatpush.bf16.msra.mxu0 %v606
    %2397 = vmatpush.bf16.msra.mxu0 %v598
    %2398 = vmatpush.bf16.msra.mxu0 %v590
    %2399 = vmatpush.bf16.msra.mxu0 %v582
    %2400 = vmatpush.bf16.msra.mxu0 %v574
    %2401 = vmatmul.bf16.gmra.mxu0 %v2391
    %v2402 = vpop.f32.mrf.mxu0
    %v2403 = vadd.f32 0.0, %v2402
    %v2404 = vpop.f32.mrf.mxu0
    %2405 = vdwg.mxu0
    %2406 = vmatpush.bf16.msra.mxu0 %v694
    %2407 = vmatpush.bf16.msra.mxu0 %v686
    %2408 = vmatpush.bf16.msra.mxu0 %v678
    %2409 = vmatpush.bf16.msra.mxu0 %v670
    %2410 = vmatpush.bf16.msra.mxu0 %v662
    %2411 = vmatpush.bf16.msra.mxu0 %v654
    %2412 = vmatpush.bf16.msra.mxu0 %v646
    %2413 = vmatpush.bf16.msra.mxu0 %v638
    %2414 = vmatmul.bf16.gmra.mxu0 %v2392
    %v2415 = vpop.f32.mrf.mxu0
    %v2416 = vadd.f32 %v2403, %v2415
    %v2417 = vpop.f32.mrf.mxu0
    %2418 = vdwg.mxu0
    %2419 = vmatpush.bf16.msra.mxu0 %v631
    %2420 = vmatpush.bf16.msra.mxu0 %v623
    %2421 = vmatpush.bf16.msra.mxu0 %v615
    %2422 = vmatpush.bf16.msra.mxu0 %v607
    %2423 = vmatpush.bf16.msra.mxu0 %v599
    %2424 = vmatpush.bf16.msra.mxu0 %v591
    %2425 = vmatpush.bf16.msra.mxu0 %v583
    %2426 = vmatpush.bf16.msra.mxu0 %v575
    %2427 = vmatmul.bf16.gmra.mxu0 %v2391
    %v2428 = vpop.f32.mrf.mxu0
    %v2429 = vadd.f32 0.0, %v2428
    %v2430 = vpop.f32.mrf.mxu0
    %2431 = vdwg.mxu0
    %2432 = vmatpush.bf16.msra.mxu0 %v695
    %2433 = vmatpush.bf16.msra.mxu0 %v687
    %2434 = vmatpush.bf16.msra.mxu0 %v679
    %2435 = vmatpush.bf16.msra.mxu0 %v671
    %2436 = vmatpush.bf16.msra.mxu0 %v663
    %2437 = vmatpush.bf16.msra.mxu0 %v655
    %2438 = vmatpush.bf16.msra.mxu0 %v647
    %2439 = vmatpush.bf16.msra.mxu0 %v639
    %2440 = vmatmul.bf16.gmra.mxu0 %v2392
    %v2441 = vpop.f32.mrf.mxu0
    %v2442 = vadd.f32 %v2429, %v2441
    %v2443 = vpop.f32.mrf.mxu0
    %2444 = vdwg.mxu0
    %2445 = vmatpush.bf16.msra.mxu0 %v632
    %2446 = vmatpush.bf16.msra.mxu0 %v624
    %2447 = vmatpush.bf16.msra.mxu0 %v616
    %2448 = vmatpush.bf16.msra.mxu0 %v608
    %2449 = vmatpush.bf16.msra.mxu0 %v600
    %2450 = vmatpush.bf16.msra.mxu0 %v592
    %2451 = vmatpush.bf16.msra.mxu0 %v584
    %2452 = vmatpush.bf16.msra.mxu0 %v576
    %2453 = vmatmul.bf16.gmra.mxu0 %v2391
    %v2454 = vpop.f32.mrf.mxu0
    %v2455 = vadd.f32 0.0, %v2454
    %v2456 = vpop.f32.mrf.mxu0
    %2457 = vdwg.mxu0
    %2458 = vmatpush.bf16.msra.mxu0 %v696
    %2459 = vmatpush.bf16.msra.mxu0 %v688
    %2460 = vmatpush.bf16.msra.mxu0 %v680
    %2461 = vmatpush.bf16.msra.mxu0 %v672
    %2462 = vmatpush.bf16.msra.mxu0 %v664
    %2463 = vmatpush.bf16.msra.mxu0 %v656
    %2464 = vmatpush.bf16.msra.mxu0 %v648
    %2465 = vmatpush.bf16.msra.mxu0 %v640
    %2466 = vmatmul.bf16.gmra.mxu0 %v2392
    %v2467 = vpop.f32.mrf.mxu0
    %v2468 = vadd.f32 %v2455, %v2467
    %v2469 = vpop.f32.mrf.mxu0
    %2470 = vdwg.mxu0
    %2471 = vmatpush.bf16.msra.mxu0 %v633
    %2472 = vmatpush.bf16.msra.mxu0 %v625
    %2473 = vmatpush.bf16.msra.mxu0 %v617
    %2474 = vmatpush.bf16.msra.mxu0 %v609
    %2475 = vmatpush.bf16.msra.mxu0 %v601
    %2476 = vmatpush.bf16.msra.mxu0 %v593
    %2477 = vmatpush.bf16.msra.mxu0 %v585
    %2478 = vmatpush.bf16.msra.mxu0 %v577
    %2479 = vmatmul.bf16.gmra.mxu0 %v2391
    %v2480 = vpop.f32.mrf.mxu0
    %v2481 = vadd.f32 0.0, %v2480
    %v2482 = vpop.f32.mrf.mxu0
    %2483 = vdwg.mxu0
    %2484 = vmatpush.bf16.msra.mxu0 %v697
    %2485 = vmatpush.bf16.msra.mxu0 %v689
    %2486 = vmatpush.bf16.msra.mxu0 %v681
    %2487 = vmatpush.bf16.msra.mxu0 %v673
    %2488 = vmatpush.bf16.msra.mxu0 %v665
    %2489 = vmatpush.bf16.msra.mxu0 %v657
    %2490 = vmatpush.bf16.msra.mxu0 %v649
    %2491 = vmatpush.bf16.msra.mxu0 %v641
    %2492 = vmatmul.bf16.gmra.mxu0 %v2392
    %v2493 = vpop.f32.mrf.mxu0
    %v2494 = vadd.f32 %v2481, %v2493
    %v2495 = vpop.f32.mrf.mxu0
    %2496 = vdwg.mxu0
    %2497 = vmatpush.bf16.msra.mxu0 %v634
    %2498 = vmatpush.bf16.msra.mxu0 %v626
    %2499 = vmatpush.bf16.msra.mxu0 %v618
    %2500 = vmatpush.bf16.msra.mxu0 %v610
    %2501 = vmatpush.bf16.msra.mxu0 %v602
    %2502 = vmatpush.bf16.msra.mxu0 %v594
    %2503 = vmatpush.bf16.msra.mxu0 %v586
    %2504 = vmatpush.bf16.msra.mxu0 %v578
    %2505 = vmatmul.bf16.gmra.mxu0 %v2391
    %v2506 = vpop.f32.mrf.mxu0
    %v2507 = vadd.f32 0.0, %v2506
    %v2508 = vpop.f32.mrf.mxu0
    %2509 = vdwg.mxu0
    %2510 = vmatpush.bf16.msra.mxu0 %v698
    %2511 = vmatpush.bf16.msra.mxu0 %v690
    %2512 = vmatpush.bf16.msra.mxu0 %v682
    %2513 = vmatpush.bf16.msra.mxu0 %v674
    %2514 = vmatpush.bf16.msra.mxu0 %v666
    %2515 = vmatpush.bf16.msra.mxu0 %v658
    %2516 = vmatpush.bf16.msra.mxu0 %v650
    %2517 = vmatpush.bf16.msra.mxu0 %v642
    %2518 = vmatmul.bf16.gmra.mxu0 %v2392
    %v2519 = vpop.f32.mrf.mxu0
    %v2520 = vadd.f32 %v2507, %v2519
    %v2521 = vpop.f32.mrf.mxu0
    %2522 = vdwg.mxu0
    %2523 = vmatpush.bf16.msra.mxu0 %v635
    %2524 = vmatpush.bf16.msra.mxu0 %v627
    %2525 = vmatpush.bf16.msra.mxu0 %v619
    %2526 = vmatpush.bf16.msra.mxu0 %v611
    %2527 = vmatpush.bf16.msra.mxu0 %v603
    %2528 = vmatpush.bf16.msra.mxu0 %v595
    %2529 = vmatpush.bf16.msra.mxu0 %v587
    %2530 = vmatpush.bf16.msra.mxu0 %v579
    %2531 = vmatmul.bf16.gmra.mxu0 %v2391
    %v2532 = vpop.f32.mrf.mxu0
    %v2533 = vadd.f32 0.0, %v2532
    %v2534 = vpop.f32.mrf.mxu0
    %2535 = vdwg.mxu0
    %2536 = vmatpush.bf16.msra.mxu0 %v699
    %2537 = vmatpush.bf16.msra.mxu0 %v691
    %2538 = vmatpush.bf16.msra.mxu0 %v683
    %2539 = vmatpush.bf16.msra.mxu0 %v675
    %2540 = vmatpush.bf16.msra.mxu0 %v667
    %2541 = vmatpush.bf16.msra.mxu0 %v659
    %2542 = vmatpush.bf16.msra.mxu0 %v651
    %2543 = vmatpush.bf16.msra.mxu0 %v643
    %2544 = vmatmul.bf16.gmra.mxu0 %v2392
    %v2545 = vpop.f32.mrf.mxu0
    %v2546 = vadd.f32 %v2533, %v2545
    %v2547 = vpop.f32.mrf.mxu0
    %2548 = vdwg.mxu0
    %2549 = vmatpush.bf16.msra.mxu0 %v636
    %2550 = vmatpush.bf16.msra.mxu0 %v628
    %2551 = vmatpush.bf16.msra.mxu0 %v620
    %2552 = vmatpush.bf16.msra.mxu0 %v612
    %2553 = vmatpush.bf16.msra.mxu0 %v604
    %2554 = vmatpush.bf16.msra.mxu0 %v596
    %2555 = vmatpush.bf16.msra.mxu0 %v588
    %2556 = vmatpush.bf16.msra.mxu0 %v580
    %2557 = vmatmul.bf16.gmra.mxu0 %v2391
    %v2558 = vpop.f32.mrf.mxu0
    %v2559 = vadd.f32 0.0, %v2558
    %v2560 = vpop.f32.mrf.mxu0
    %2561 = vdwg.mxu0
    %2562 = vmatpush.bf16.msra.mxu0 %v700
    %2563 = vmatpush.bf16.msra.mxu0 %v692
    %2564 = vmatpush.bf16.msra.mxu0 %v684
    %2565 = vmatpush.bf16.msra.mxu0 %v676
    %2566 = vmatpush.bf16.msra.mxu0 %v668
    %2567 = vmatpush.bf16.msra.mxu0 %v660
    %2568 = vmatpush.bf16.msra.mxu0 %v652
    %2569 = vmatpush.bf16.msra.mxu0 %v644
    %2570 = vmatmul.bf16.gmra.mxu0 %v2392
    %v2571 = vpop.f32.mrf.mxu0
    %v2572 = vadd.f32 %v2559, %v2571
    %v2573 = vpop.f32.mrf.mxu0
    %2574 = vdwg.mxu0
    %2575 = vmatpush.bf16.msra.mxu0 %v637
    %2576 = vmatpush.bf16.msra.mxu0 %v629
    %2577 = vmatpush.bf16.msra.mxu0 %v621
    %2578 = vmatpush.bf16.msra.mxu0 %v613
    %2579 = vmatpush.bf16.msra.mxu0 %v605
    %2580 = vmatpush.bf16.msra.mxu0 %v597
    %2581 = vmatpush.bf16.msra.mxu0 %v589
    %2582 = vmatpush.bf16.msra.mxu0 %v581
    %2583 = vmatmul.bf16.gmra.mxu0 %v2391
    %v2584 = vpop.f32.mrf.mxu0
    %v2585 = vadd.f32 0.0, %v2584
    %v2586 = vpop.f32.mrf.mxu0
    %2587 = vdwg.mxu0
    %2588 = vmatpush.bf16.msra.mxu0 %v701
    %2589 = vmatpush.bf16.msra.mxu0 %v693
    %2590 = vmatpush.bf16.msra.mxu0 %v685
    %2591 = vmatpush.bf16.msra.mxu0 %v677
    %2592 = vmatpush.bf16.msra.mxu0 %v669
    %2593 = vmatpush.bf16.msra.mxu0 %v661
    %2594 = vmatpush.bf16.msra.mxu0 %v653
    %2595 = vmatpush.bf16.msra.mxu0 %v645
    %2596 = vmatmul.bf16.gmra.mxu0 %v2392
    %v2597 = vpop.f32.mrf.mxu0
    %v2598 = vadd.f32 %v2585, %v2597
    %v2599 = vpop.f32.mrf.mxu0
    %2600 = vdwg.mxu0
    %v2609 = vrot.slane %v2442, 6
    %v2610 = vrot.slane %v2468, 4
    %v2611 = vrot.slane %v2494, 2
    %v2612 = vrot.slane %v2546, 6
    %v2613 = vrot.slane %v2572, 4
    %v2614 = vrot.slane %v2598, 2
    %v2615 = vsel %vm1052, %v2416, %v2609
    %v2616 = vsel %vm1054, %v2610, %v2611
    %v2617 = vsel %vm1056, %v2615, %v2616
    %v2618 = vsel %vm1052, %v2520, %v2612
    %v2619 = vsel %vm1054, %v2613, %v2614
    %v2620 = vsel %vm1056, %v2618, %v2619
    %v2623 = vadd.f32 %v2383, %v2617
    %v2624 = vadd.f32 %v2384, %v2620
    %v2625 = vxor.u32 %v2623, 2147483648
    %v2626 = vmul.f32 %v2625, 1.442695
    %v2627 = vpow.pop %v2626
    %v2628 = vadd.f32 %v2627, 1.0
    %v2629 = vrcp.pop %v2628
    %v2630 = vmul.f32 %v2628, %v2629
    %v2631 = vsub.f32 1.0, %v2630
    %v2632 = vmul.f32 %v2629, %v2631
    %v2633 = vadd.f32 %v2629, %v2632
    %vm2634 = vweird.f32 %v2628
    %vm2635 = vweird.f32 %v2629
    %vm2636 = vmor %vm2634, %vm2635
    %v2637 = vsel %vm2636, %v2629, %v2633
    %v2638 = vand.u32 2147483647, %v2628
    %vm2639 = vcmp.eq.f32.partialorder %v2638, 8.507059e+37
    %v2640 = vand.u32 %v2628, 2147483648
    %v2641 = vor.u32 1.1754944e-38, %v2640
    %v2642 = vsel %vm2639, %v2641, %v2637
    %v2643 = vmul.f32 1.0, %v2642
    %v2645 = vrot.slane %v2623, 4
    %v2647 = vxor.u32 %v2645, 2147483648
    %v2648 = vmul.f32 %v2647, 1.442695
    %v2649 = vpow.pop %v2648
    %v2650 = vadd.f32 %v2649, 1.0
    %v2651 = vrcp.pop %v2650
    %v2652 = vmul.f32 %v2650, %v2651
    %v2653 = vsub.f32 1.0, %v2652
    %v2654 = vmul.f32 %v2651, %v2653
    %v2655 = vadd.f32 %v2651, %v2654
    %vm2656 = vweird.f32 %v2650
    %vm2657 = vweird.f32 %v2651
    %vm2658 = vmor %vm2656, %vm2657
    %v2659 = vsel %vm2658, %v2651, %v2655
    %v2660 = vand.u32 2147483647, %v2650
    %vm2661 = vcmp.eq.f32.partialorder %v2660, 8.507059e+37
    %v2662 = vand.u32 %v2650, 2147483648
    %v2663 = vor.u32 1.1754944e-38, %v2662
    %v2664 = vsel %vm2661, %v2663, %v2659
    %v2665 = vmul.f32 1.0, %v2664
    %v2666 = vtanh.pop %v2624
    %v2668 = vrot.slane %v2624, 4
    %v2670 = vxor.u32 %v2668, 2147483648
    %v2671 = vmul.f32 %v2670, 1.442695
    %v2672 = vpow.pop %v2671
    %v2673 = vadd.f32 %v2672, 1.0
    %v2674 = vrcp.pop %v2673
    %v2675 = vmul.f32 %v2673, %v2674
    %v2676 = vsub.f32 1.0, %v2675
    %v2677 = vmul.f32 %v2674, %v2676
    %v2678 = vadd.f32 %v2674, %v2677
    %vm2679 = vweird.f32 %v2673
    %vm2680 = vweird.f32 %v2674
    %vm2681 = vmor %vm2679, %vm2680
    %v2682 = vsel %vm2681, %v2674, %v2678
    %v2683 = vand.u32 2147483647, %v2673
    %vm2684 = vcmp.eq.f32.partialorder %v2683, 8.507059e+37
    %v2685 = vand.u32 %v2673, 2147483648
    %v2686 = vor.u32 1.1754944e-38, %v2685
    %v2687 = vsel %vm2684, %v2686, %v2682
    %v2688 = vmul.f32 1.0, %v2687
    %v2689 = vmul.f32 %v2665, %v2379
    %v2690 = vmul.f32 %v2643, %v2666
    %v2691 = vadd.f32 %v2689, %v2690
    %v2692 = vtanh.pop %v2691
    %v2693 = vmul.f32 %v2688, %v2692
    %s2694 = scalar_lea.vmem [#allocation4], 96
    %v2695 = vld [vmem:[%s2694] sm:$0xff]
    %v2696 = vld [vmem:[%s2694 + $0x8] sm:$0xff]
    %2698 = vst [vmem:[#allocation1] ss:$4 sm:$0xff] %v2693
    %v2699 = vld.sshfl [vmem:[#allocation1] sm:$0xff pattern:$0x73625140]
    %v2700 = vld.sshfl [vmem:[#allocation1 + $0x8] sm:$0xff pattern:$0x73625140]
    %v2703 = vpack.c.bf16 %v2699, %v2699
    %v2704 = vpack.c.bf16 %v2700, %v2700
    %2705 = vmatpush.bf16.msra.mxu0 %v630
    %2706 = vmatpush.bf16.msra.mxu0 %v622
    %2707 = vmatpush.bf16.msra.mxu0 %v614
    %2708 = vmatpush.bf16.msra.mxu0 %v606
    %2709 = vmatpush.bf16.msra.mxu0 %v598
    %2710 = vmatpush.bf16.msra.mxu0 %v590
    %2711 = vmatpush.bf16.msra.mxu0 %v582
    %2712 = vmatpush.bf16.msra.mxu0 %v574
    %2713 = vmatmul.bf16.gmra.mxu0 %v2703
    %v2714 = vpop.f32.mrf.mxu0
    %v2715 = vadd.f32 0.0, %v2714
    %v2716 = vpop.f32.mrf.mxu0
    %2717 = vdwg.mxu0
    %2718 = vmatpush.bf16.msra.mxu0 %v694
    %2719 = vmatpush.bf16.msra.mxu0 %v686
    %2720 = vmatpush.bf16.msra.mxu0 %v678
    %2721 = vmatpush.bf16.msra.mxu0 %v670
    %2722 = vmatpush.bf16.msra.mxu0 %v662
    %2723 = vmatpush.bf16.msra.mxu0 %v654
    %2724 = vmatpush.bf16.msra.mxu0 %v646
    %2725 = vmatpush.bf16.msra.mxu0 %v638
    %2726 = vmatmul.bf16.gmra.mxu0 %v2704
    %v2727 = vpop.f32.mrf.mxu0
    %v2728 = vadd.f32 %v2715, %v2727
    %v2729 = vpop.f32.mrf.mxu0
    %2730 = vdwg.mxu0
    %2731 = vmatpush.bf16.msra.mxu0 %v631
    %2732 = vmatpush.bf16.msra.mxu0 %v623
    %2733 = vmatpush.bf16.msra.mxu0 %v615
    %2734 = vmatpush.bf16.msra.mxu0 %v607
    %2735 = vmatpush.bf16.msra.mxu0 %v599
    %2736 = vmatpush.bf16.msra.mxu0 %v591
    %2737 = vmatpush.bf16.msra.mxu0 %v583
    %2738 = vmatpush.bf16.msra.mxu0 %v575
    %2739 = vmatmul.bf16.gmra.mxu0 %v2703
    %v2740 = vpop.f32.mrf.mxu0
    %v2741 = vadd.f32 0.0, %v2740
    %v2742 = vpop.f32.mrf.mxu0
    %2743 = vdwg.mxu0
    %2744 = vmatpush.bf16.msra.mxu0 %v695
    %2745 = vmatpush.bf16.msra.mxu0 %v687
    %2746 = vmatpush.bf16.msra.mxu0 %v679
    %2747 = vmatpush.bf16.msra.mxu0 %v671
    %2748 = vmatpush.bf16.msra.mxu0 %v663
    %2749 = vmatpush.bf16.msra.mxu0 %v655
    %2750 = vmatpush.bf16.msra.mxu0 %v647
    %2751 = vmatpush.bf16.msra.mxu0 %v639
    %2752 = vmatmul.bf16.gmra.mxu0 %v2704
    %v2753 = vpop.f32.mrf.mxu0
    %v2754 = vadd.f32 %v2741, %v2753
    %v2755 = vpop.f32.mrf.mxu0
    %2756 = vdwg.mxu0
    %2757 = vmatpush.bf16.msra.mxu0 %v632
    %2758 = vmatpush.bf16.msra.mxu0 %v624
    %2759 = vmatpush.bf16.msra.mxu0 %v616
    %2760 = vmatpush.bf16.msra.mxu0 %v608
    %2761 = vmatpush.bf16.msra.mxu0 %v600
    %2762 = vmatpush.bf16.msra.mxu0 %v592
    %2763 = vmatpush.bf16.msra.mxu0 %v584
    %2764 = vmatpush.bf16.msra.mxu0 %v576
    %2765 = vmatmul.bf16.gmra.mxu0 %v2703
    %v2766 = vpop.f32.mrf.mxu0
    %v2767 = vadd.f32 0.0, %v2766
    %v2768 = vpop.f32.mrf.mxu0
    %2769 = vdwg.mxu0
    %2770 = vmatpush.bf16.msra.mxu0 %v696
    %2771 = vmatpush.bf16.msra.mxu0 %v688
    %2772 = vmatpush.bf16.msra.mxu0 %v680
    %2773 = vmatpush.bf16.msra.mxu0 %v672
    %2774 = vmatpush.bf16.msra.mxu0 %v664
    %2775 = vmatpush.bf16.msra.mxu0 %v656
    %2776 = vmatpush.bf16.msra.mxu0 %v648
    %2777 = vmatpush.bf16.msra.mxu0 %v640
    %2778 = vmatmul.bf16.gmra.mxu0 %v2704
    %v2779 = vpop.f32.mrf.mxu0
    %v2780 = vadd.f32 %v2767, %v2779
    %v2781 = vpop.f32.mrf.mxu0
    %2782 = vdwg.mxu0
    %2783 = vmatpush.bf16.msra.mxu0 %v633
    %2784 = vmatpush.bf16.msra.mxu0 %v625
    %2785 = vmatpush.bf16.msra.mxu0 %v617
    %2786 = vmatpush.bf16.msra.mxu0 %v609
    %2787 = vmatpush.bf16.msra.mxu0 %v601
    %2788 = vmatpush.bf16.msra.mxu0 %v593
    %2789 = vmatpush.bf16.msra.mxu0 %v585
    %2790 = vmatpush.bf16.msra.mxu0 %v577
    %2791 = vmatmul.bf16.gmra.mxu0 %v2703
    %v2792 = vpop.f32.mrf.mxu0
    %v2793 = vadd.f32 0.0, %v2792
    %v2794 = vpop.f32.mrf.mxu0
    %2795 = vdwg.mxu0
    %2796 = vmatpush.bf16.msra.mxu0 %v697
    %2797 = vmatpush.bf16.msra.mxu0 %v689
    %2798 = vmatpush.bf16.msra.mxu0 %v681
    %2799 = vmatpush.bf16.msra.mxu0 %v673
    %2800 = vmatpush.bf16.msra.mxu0 %v665
    %2801 = vmatpush.bf16.msra.mxu0 %v657
    %2802 = vmatpush.bf16.msra.mxu0 %v649
    %2803 = vmatpush.bf16.msra.mxu0 %v641
    %2804 = vmatmul.bf16.gmra.mxu0 %v2704
    %v2805 = vpop.f32.mrf.mxu0
    %v2806 = vadd.f32 %v2793, %v2805
    %v2807 = vpop.f32.mrf.mxu0
    %2808 = vdwg.mxu0
    %2809 = vmatpush.bf16.msra.mxu0 %v634
    %2810 = vmatpush.bf16.msra.mxu0 %v626
    %2811 = vmatpush.bf16.msra.mxu0 %v618
    %2812 = vmatpush.bf16.msra.mxu0 %v610
    %2813 = vmatpush.bf16.msra.mxu0 %v602
    %2814 = vmatpush.bf16.msra.mxu0 %v594
    %2815 = vmatpush.bf16.msra.mxu0 %v586
    %2816 = vmatpush.bf16.msra.mxu0 %v578
    %2817 = vmatmul.bf16.gmra.mxu0 %v2703
    %v2818 = vpop.f32.mrf.mxu0
    %v2819 = vadd.f32 0.0, %v2818
    %v2820 = vpop.f32.mrf.mxu0
    %2821 = vdwg.mxu0
    %2822 = vmatpush.bf16.msra.mxu0 %v698
    %2823 = vmatpush.bf16.msra.mxu0 %v690
    %2824 = vmatpush.bf16.msra.mxu0 %v682
    %2825 = vmatpush.bf16.msra.mxu0 %v674
    %2826 = vmatpush.bf16.msra.mxu0 %v666
    %2827 = vmatpush.bf16.msra.mxu0 %v658
    %2828 = vmatpush.bf16.msra.mxu0 %v650
    %2829 = vmatpush.bf16.msra.mxu0 %v642
    %2830 = vmatmul.bf16.gmra.mxu0 %v2704
    %v2831 = vpop.f32.mrf.mxu0
    %v2832 = vadd.f32 %v2819, %v2831
    %v2833 = vpop.f32.mrf.mxu0
    %2834 = vdwg.mxu0
    %2835 = vmatpush.bf16.msra.mxu0 %v635
    %2836 = vmatpush.bf16.msra.mxu0 %v627
    %2837 = vmatpush.bf16.msra.mxu0 %v619
    %2838 = vmatpush.bf16.msra.mxu0 %v611
    %2839 = vmatpush.bf16.msra.mxu0 %v603
    %2840 = vmatpush.bf16.msra.mxu0 %v595
    %2841 = vmatpush.bf16.msra.mxu0 %v587
    %2842 = vmatpush.bf16.msra.mxu0 %v579
    %2843 = vmatmul.bf16.gmra.mxu0 %v2703
    %v2844 = vpop.f32.mrf.mxu0
    %v2845 = vadd.f32 0.0, %v2844
    %v2846 = vpop.f32.mrf.mxu0
    %2847 = vdwg.mxu0
    %2848 = vmatpush.bf16.msra.mxu0 %v699
    %2849 = vmatpush.bf16.msra.mxu0 %v691
    %2850 = vmatpush.bf16.msra.mxu0 %v683
    %2851 = vmatpush.bf16.msra.mxu0 %v675
    %2852 = vmatpush.bf16.msra.mxu0 %v667
    %2853 = vmatpush.bf16.msra.mxu0 %v659
    %2854 = vmatpush.bf16.msra.mxu0 %v651
    %2855 = vmatpush.bf16.msra.mxu0 %v643
    %2856 = vmatmul.bf16.gmra.mxu0 %v2704
    %v2857 = vpop.f32.mrf.mxu0
    %v2858 = vadd.f32 %v2845, %v2857
    %v2859 = vpop.f32.mrf.mxu0
    %2860 = vdwg.mxu0
    %2861 = vmatpush.bf16.msra.mxu0 %v636
    %2862 = vmatpush.bf16.msra.mxu0 %v628
    %2863 = vmatpush.bf16.msra.mxu0 %v620
    %2864 = vmatpush.bf16.msra.mxu0 %v612
    %2865 = vmatpush.bf16.msra.mxu0 %v604
    %2866 = vmatpush.bf16.msra.mxu0 %v596
    %2867 = vmatpush.bf16.msra.mxu0 %v588
    %2868 = vmatpush.bf16.msra.mxu0 %v580
    %2869 = vmatmul.bf16.gmra.mxu0 %v2703
    %v2870 = vpop.f32.mrf.mxu0
    %v2871 = vadd.f32 0.0, %v2870
    %v2872 = vpop.f32.mrf.mxu0
    %2873 = vdwg.mxu0
    %2874 = vmatpush.bf16.msra.mxu0 %v700
    %2875 = vmatpush.bf16.msra.mxu0 %v692
    %2876 = vmatpush.bf16.msra.mxu0 %v684
    %2877 = vmatpush.bf16.msra.mxu0 %v676
    %2878 = vmatpush.bf16.msra.mxu0 %v668
    %2879 = vmatpush.bf16.msra.mxu0 %v660
    %2880 = vmatpush.bf16.msra.mxu0 %v652
    %2881 = vmatpush.bf16.msra.mxu0 %v644
    %2882 = vmatmul.bf16.gmra.mxu0 %v2704
    %v2883 = vpop.f32.mrf.mxu0
    %v2884 = vadd.f32 %v2871, %v2883
    %v2885 = vpop.f32.mrf.mxu0
    %2886 = vdwg.mxu0
    %2887 = vmatpush.bf16.msra.mxu0 %v637
    %2888 = vmatpush.bf16.msra.mxu0 %v629
    %2889 = vmatpush.bf16.msra.mxu0 %v621
    %2890 = vmatpush.bf16.msra.mxu0 %v613
    %2891 = vmatpush.bf16.msra.mxu0 %v605
    %2892 = vmatpush.bf16.msra.mxu0 %v597
    %2893 = vmatpush.bf16.msra.mxu0 %v589
    %2894 = vmatpush.bf16.msra.mxu0 %v581
    %2895 = vmatmul.bf16.gmra.mxu0 %v2703
    %v2896 = vpop.f32.mrf.mxu0
    %v2897 = vadd.f32 0.0, %v2896
    %v2898 = vpop.f32.mrf.mxu0
    %2899 = vdwg.mxu0
    %2900 = vmatpush.bf16.msra.mxu0 %v701
    %2901 = vmatpush.bf16.msra.mxu0 %v693
    %2902 = vmatpush.bf16.msra.mxu0 %v685
    %2903 = vmatpush.bf16.msra.mxu0 %v677
    %2904 = vmatpush.bf16.msra.mxu0 %v669
    %2905 = vmatpush.bf16.msra.mxu0 %v661
    %2906 = vmatpush.bf16.msra.mxu0 %v653
    %2907 = vmatpush.bf16.msra.mxu0 %v645
    %2908 = vmatmul.bf16.gmra.mxu0 %v2704
    %v2909 = vpop.f32.mrf.mxu0
    %v2910 = vadd.f32 %v2897, %v2909
    %v2911 = vpop.f32.mrf.mxu0
    %2912 = vdwg.mxu0
    %v2921 = vrot.slane %v2754, 6
    %v2922 = vrot.slane %v2780, 4
    %v2923 = vrot.slane %v2806, 2
    %v2924 = vrot.slane %v2858, 6
    %v2925 = vrot.slane %v2884, 4
    %v2926 = vrot.slane %v2910, 2
    %v2927 = vsel %vm1052, %v2728, %v2921
    %v2928 = vsel %vm1054, %v2922, %v2923
    %v2929 = vsel %vm1056, %v2927, %v2928
    %v2930 = vsel %vm1052, %v2832, %v2924
    %v2931 = vsel %vm1054, %v2925, %v2926
    %v2932 = vsel %vm1056, %v2930, %v2931
    %v2935 = vadd.f32 %v2695, %v2929
    %v2936 = vadd.f32 %v2696, %v2932
    %v2937 = vxor.u32 %v2935, 2147483648
    %v2938 = vmul.f32 %v2937, 1.442695
    %v2939 = vpow.pop %v2938
    %v2940 = vadd.f32 %v2939, 1.0
    %v2941 = vrcp.pop %v2940
    %v2942 = vmul.f32 %v2940, %v2941
    %v2943 = vsub.f32 1.0, %v2942
    %v2944 = vmul.f32 %v2941, %v2943
    %v2945 = vadd.f32 %v2941, %v2944
    %vm2946 = vweird.f32 %v2940
    %vm2947 = vweird.f32 %v2941
    %vm2948 = vmor %vm2946, %vm2947
    %v2949 = vsel %vm2948, %v2941, %v2945
    %v2950 = vand.u32 2147483647, %v2940
    %vm2951 = vcmp.eq.f32.partialorder %v2950, 8.507059e+37
    %v2952 = vand.u32 %v2940, 2147483648
    %v2953 = vor.u32 1.1754944e-38, %v2952
    %v2954 = vsel %vm2951, %v2953, %v2949
    %v2955 = vmul.f32 1.0, %v2954
    %v2957 = vrot.slane %v2935, 4
    %v2959 = vxor.u32 %v2957, 2147483648
    %v2960 = vmul.f32 %v2959, 1.442695
    %v2961 = vpow.pop %v2960
    %v2962 = vadd.f32 %v2961, 1.0
    %v2963 = vrcp.pop %v2962
    %v2964 = vmul.f32 %v2962, %v2963
    %v2965 = vsub.f32 1.0, %v2964
    %v2966 = vmul.f32 %v2963, %v2965
    %v2967 = vadd.f32 %v2963, %v2966
    %vm2968 = vweird.f32 %v2962
    %vm2969 = vweird.f32 %v2963
    %vm2970 = vmor %vm2968, %vm2969
    %v2971 = vsel %vm2970, %v2963, %v2967
    %v2972 = vand.u32 2147483647, %v2962
    %vm2973 = vcmp.eq.f32.partialorder %v2972, 8.507059e+37
    %v2974 = vand.u32 %v2962, 2147483648
    %v2975 = vor.u32 1.1754944e-38, %v2974
    %v2976 = vsel %vm2973, %v2975, %v2971
    %v2977 = vmul.f32 1.0, %v2976
    %v2978 = vtanh.pop %v2936
    %v2980 = vrot.slane %v2936, 4
    %v2982 = vxor.u32 %v2980, 2147483648
    %v2983 = vmul.f32 %v2982, 1.442695
    %v2984 = vpow.pop %v2983
    %v2985 = vadd.f32 %v2984, 1.0
    %v2986 = vrcp.pop %v2985
    %v2987 = vmul.f32 %v2985, %v2986
    %v2988 = vsub.f32 1.0, %v2987
    %v2989 = vmul.f32 %v2986, %v2988
    %v2990 = vadd.f32 %v2986, %v2989
    %vm2991 = vweird.f32 %v2985
    %vm2992 = vweird.f32 %v2986
    %vm2993 = vmor %vm2991, %vm2992
    %v2994 = vsel %vm2993, %v2986, %v2990
    %v2995 = vand.u32 2147483647, %v2985
    %vm2996 = vcmp.eq.f32.partialorder %v2995, 8.507059e+37
    %v2997 = vand.u32 %v2985, 2147483648
    %v2998 = vor.u32 1.1754944e-38, %v2997
    %v2999 = vsel %vm2996, %v2998, %v2994
    %v3000 = vmul.f32 1.0, %v2999
    %v3001 = vmul.f32 %v2977, %v2691
    %v3002 = vmul.f32 %v2955, %v2978
    %v3003 = vadd.f32 %v3001, %v3002
    %v3004 = vtanh.pop %v3003
    %v3005 = vmul.f32 %v3000, %v3004
    %s3006 = scalar_lea.vmem [#allocation4], 112
    %v3007 = vld [vmem:[%s3006] sm:$0xff]
    %v3008 = vld [vmem:[%s3006 + $0x8] sm:$0xff]
    %3010 = vst [vmem:[#allocation1] ss:$4 sm:$0xff] %v3005
    %v3011 = vld.sshfl [vmem:[#allocation1] sm:$0xff pattern:$0x73625140]
    %v3012 = vld.sshfl [vmem:[#allocation1 + $0x8] sm:$0xff pattern:$0x73625140]
    %v3015 = vpack.c.bf16 %v3011, %v3011
    %v3016 = vpack.c.bf16 %v3012, %v3012
    %3017 = vmatpush.bf16.msra.mxu0 %v630
    %3018 = vmatpush.bf16.msra.mxu0 %v622
    %3019 = vmatpush.bf16.msra.mxu0 %v614
    %3020 = vmatpush.bf16.msra.mxu0 %v606
    %3021 = vmatpush.bf16.msra.mxu0 %v598
    %3022 = vmatpush.bf16.msra.mxu0 %v590
    %3023 = vmatpush.bf16.msra.mxu0 %v582
    %3024 = vmatpush.bf16.msra.mxu0 %v574
    %3025 = vmatmul.bf16.gmra.mxu0 %v3015
    %v3026 = vpop.f32.mrf.mxu0
    %v3027 = vadd.f32 0.0, %v3026
    %v3028 = vpop.f32.mrf.mxu0
    %3029 = vdwg.mxu0
    %3030 = vmatpush.bf16.msra.mxu0 %v694
    %3031 = vmatpush.bf16.msra.mxu0 %v686
    %3032 = vmatpush.bf16.msra.mxu0 %v678
    %3033 = vmatpush.bf16.msra.mxu0 %v670
    %3034 = vmatpush.bf16.msra.mxu0 %v662
    %3035 = vmatpush.bf16.msra.mxu0 %v654
    %3036 = vmatpush.bf16.msra.mxu0 %v646
    %3037 = vmatpush.bf16.msra.mxu0 %v638
    %3038 = vmatmul.bf16.gmra.mxu0 %v3016
    %v3039 = vpop.f32.mrf.mxu0
    %v3040 = vadd.f32 %v3027, %v3039
    %v3041 = vpop.f32.mrf.mxu0
    %3042 = vdwg.mxu0
    %3043 = vmatpush.bf16.msra.mxu0 %v631
    %3044 = vmatpush.bf16.msra.mxu0 %v623
    %3045 = vmatpush.bf16.msra.mxu0 %v615
    %3046 = vmatpush.bf16.msra.mxu0 %v607
    %3047 = vmatpush.bf16.msra.mxu0 %v599
    %3048 = vmatpush.bf16.msra.mxu0 %v591
    %3049 = vmatpush.bf16.msra.mxu0 %v583
    %3050 = vmatpush.bf16.msra.mxu0 %v575
    %3051 = vmatmul.bf16.gmra.mxu0 %v3015
    %v3052 = vpop.f32.mrf.mxu0
    %v3053 = vadd.f32 0.0, %v3052
    %v3054 = vpop.f32.mrf.mxu0
    %3055 = vdwg.mxu0
    %3056 = vmatpush.bf16.msra.mxu0 %v695
    %3057 = vmatpush.bf16.msra.mxu0 %v687
    %3058 = vmatpush.bf16.msra.mxu0 %v679
    %3059 = vmatpush.bf16.msra.mxu0 %v671
    %3060 = vmatpush.bf16.msra.mxu0 %v663
    %3061 = vmatpush.bf16.msra.mxu0 %v655
    %3062 = vmatpush.bf16.msra.mxu0 %v647
    %3063 = vmatpush.bf16.msra.mxu0 %v639
    %3064 = vmatmul.bf16.gmra.mxu0 %v3016
    %v3065 = vpop.f32.mrf.mxu0
    %v3066 = vadd.f32 %v3053, %v3065
    %v3067 = vpop.f32.mrf.mxu0
    %3068 = vdwg.mxu0
    %3069 = vmatpush.bf16.msra.mxu0 %v632
    %3070 = vmatpush.bf16.msra.mxu0 %v624
    %3071 = vmatpush.bf16.msra.mxu0 %v616
    %3072 = vmatpush.bf16.msra.mxu0 %v608
    %3073 = vmatpush.bf16.msra.mxu0 %v600
    %3074 = vmatpush.bf16.msra.mxu0 %v592
    %3075 = vmatpush.bf16.msra.mxu0 %v584
    %3076 = vmatpush.bf16.msra.mxu0 %v576
    %3077 = vmatmul.bf16.gmra.mxu0 %v3015
    %v3078 = vpop.f32.mrf.mxu0
    %v3079 = vadd.f32 0.0, %v3078
    %v3080 = vpop.f32.mrf.mxu0
    %3081 = vdwg.mxu0
    %3082 = vmatpush.bf16.msra.mxu0 %v696
    %3083 = vmatpush.bf16.msra.mxu0 %v688
    %3084 = vmatpush.bf16.msra.mxu0 %v680
    %3085 = vmatpush.bf16.msra.mxu0 %v672
    %3086 = vmatpush.bf16.msra.mxu0 %v664
    %3087 = vmatpush.bf16.msra.mxu0 %v656
    %3088 = vmatpush.bf16.msra.mxu0 %v648
    %3089 = vmatpush.bf16.msra.mxu0 %v640
    %3090 = vmatmul.bf16.gmra.mxu0 %v3016
    %v3091 = vpop.f32.mrf.mxu0
    %v3092 = vadd.f32 %v3079, %v3091
    %v3093 = vpop.f32.mrf.mxu0
    %3094 = vdwg.mxu0
    %3095 = vmatpush.bf16.msra.mxu0 %v633
    %3096 = vmatpush.bf16.msra.mxu0 %v625
    %3097 = vmatpush.bf16.msra.mxu0 %v617
    %3098 = vmatpush.bf16.msra.mxu0 %v609
    %3099 = vmatpush.bf16.msra.mxu0 %v601
    %3100 = vmatpush.bf16.msra.mxu0 %v593
    %3101 = vmatpush.bf16.msra.mxu0 %v585
    %3102 = vmatpush.bf16.msra.mxu0 %v577
    %3103 = vmatmul.bf16.gmra.mxu0 %v3015
    %v3104 = vpop.f32.mrf.mxu0
    %v3105 = vadd.f32 0.0, %v3104
    %v3106 = vpop.f32.mrf.mxu0
    %3107 = vdwg.mxu0
    %3108 = vmatpush.bf16.msra.mxu0 %v697
    %3109 = vmatpush.bf16.msra.mxu0 %v689
    %3110 = vmatpush.bf16.msra.mxu0 %v681
    %3111 = vmatpush.bf16.msra.mxu0 %v673
    %3112 = vmatpush.bf16.msra.mxu0 %v665
    %3113 = vmatpush.bf16.msra.mxu0 %v657
    %3114 = vmatpush.bf16.msra.mxu0 %v649
    %3115 = vmatpush.bf16.msra.mxu0 %v641
    %3116 = vmatmul.bf16.gmra.mxu0 %v3016
    %v3117 = vpop.f32.mrf.mxu0
    %v3118 = vadd.f32 %v3105, %v3117
    %v3119 = vpop.f32.mrf.mxu0
    %3120 = vdwg.mxu0
    %3121 = vmatpush.bf16.msra.mxu0 %v634
    %3122 = vmatpush.bf16.msra.mxu0 %v626
    %3123 = vmatpush.bf16.msra.mxu0 %v618
    %3124 = vmatpush.bf16.msra.mxu0 %v610
    %3125 = vmatpush.bf16.msra.mxu0 %v602
    %3126 = vmatpush.bf16.msra.mxu0 %v594
    %3127 = vmatpush.bf16.msra.mxu0 %v586
    %3128 = vmatpush.bf16.msra.mxu0 %v578
    %3129 = vmatmul.bf16.gmra.mxu0 %v3015
    %v3130 = vpop.f32.mrf.mxu0
    %v3131 = vadd.f32 0.0, %v3130
    %v3132 = vpop.f32.mrf.mxu0
    %3133 = vdwg.mxu0
    %3134 = vmatpush.bf16.msra.mxu0 %v698
    %3135 = vmatpush.bf16.msra.mxu0 %v690
    %3136 = vmatpush.bf16.msra.mxu0 %v682
    %3137 = vmatpush.bf16.msra.mxu0 %v674
    %3138 = vmatpush.bf16.msra.mxu0 %v666
    %3139 = vmatpush.bf16.msra.mxu0 %v658
    %3140 = vmatpush.bf16.msra.mxu0 %v650
    %3141 = vmatpush.bf16.msra.mxu0 %v642
    %3142 = vmatmul.bf16.gmra.mxu0 %v3016
    %v3143 = vpop.f32.mrf.mxu0
    %v3144 = vadd.f32 %v3131, %v3143
    %v3145 = vpop.f32.mrf.mxu0
    %3146 = vdwg.mxu0
    %3147 = vmatpush.bf16.msra.mxu0 %v635
    %3148 = vmatpush.bf16.msra.mxu0 %v627
    %3149 = vmatpush.bf16.msra.mxu0 %v619
    %3150 = vmatpush.bf16.msra.mxu0 %v611
    %3151 = vmatpush.bf16.msra.mxu0 %v603
    %3152 = vmatpush.bf16.msra.mxu0 %v595
    %3153 = vmatpush.bf16.msra.mxu0 %v587
    %3154 = vmatpush.bf16.msra.mxu0 %v579
    %3155 = vmatmul.bf16.gmra.mxu0 %v3015
    %v3156 = vpop.f32.mrf.mxu0
    %v3157 = vadd.f32 0.0, %v3156
    %v3158 = vpop.f32.mrf.mxu0
    %3159 = vdwg.mxu0
    %3160 = vmatpush.bf16.msra.mxu0 %v699
    %3161 = vmatpush.bf16.msra.mxu0 %v691
    %3162 = vmatpush.bf16.msra.mxu0 %v683
    %3163 = vmatpush.bf16.msra.mxu0 %v675
    %3164 = vmatpush.bf16.msra.mxu0 %v667
    %3165 = vmatpush.bf16.msra.mxu0 %v659
    %3166 = vmatpush.bf16.msra.mxu0 %v651
    %3167 = vmatpush.bf16.msra.mxu0 %v643
    %3168 = vmatmul.bf16.gmra.mxu0 %v3016
    %v3169 = vpop.f32.mrf.mxu0
    %v3170 = vadd.f32 %v3157, %v3169
    %v3171 = vpop.f32.mrf.mxu0
    %3172 = vdwg.mxu0
    %3173 = vmatpush.bf16.msra.mxu0 %v636
    %3174 = vmatpush.bf16.msra.mxu0 %v628
    %3175 = vmatpush.bf16.msra.mxu0 %v620
    %3176 = vmatpush.bf16.msra.mxu0 %v612
    %3177 = vmatpush.bf16.msra.mxu0 %v604
    %3178 = vmatpush.bf16.msra.mxu0 %v596
    %3179 = vmatpush.bf16.msra.mxu0 %v588
    %3180 = vmatpush.bf16.msra.mxu0 %v580
    %3181 = vmatmul.bf16.gmra.mxu0 %v3015
    %v3182 = vpop.f32.mrf.mxu0
    %v3183 = vadd.f32 0.0, %v3182
    %v3184 = vpop.f32.mrf.mxu0
    %3185 = vdwg.mxu0
    %3186 = vmatpush.bf16.msra.mxu0 %v700
    %3187 = vmatpush.bf16.msra.mxu0 %v692
    %3188 = vmatpush.bf16.msra.mxu0 %v684
    %3189 = vmatpush.bf16.msra.mxu0 %v676
    %3190 = vmatpush.bf16.msra.mxu0 %v668
    %3191 = vmatpush.bf16.msra.mxu0 %v660
    %3192 = vmatpush.bf16.msra.mxu0 %v652
    %3193 = vmatpush.bf16.msra.mxu0 %v644
    %3194 = vmatmul.bf16.gmra.mxu0 %v3016
    %v3195 = vpop.f32.mrf.mxu0
    %v3196 = vadd.f32 %v3183, %v3195
    %v3197 = vpop.f32.mrf.mxu0
    %3198 = vdwg.mxu0
    %3199 = vmatpush.bf16.msra.mxu0 %v637
    %3200 = vmatpush.bf16.msra.mxu0 %v629
    %3201 = vmatpush.bf16.msra.mxu0 %v621
    %3202 = vmatpush.bf16.msra.mxu0 %v613
    %3203 = vmatpush.bf16.msra.mxu0 %v605
    %3204 = vmatpush.bf16.msra.mxu0 %v597
    %3205 = vmatpush.bf16.msra.mxu0 %v589
    %3206 = vmatpush.bf16.msra.mxu0 %v581
    %3207 = vmatmul.bf16.gmra.mxu0 %v3015
    %v3208 = vpop.f32.mrf.mxu0
    %v3209 = vadd.f32 0.0, %v3208
    %v3210 = vpop.f32.mrf.mxu0
    %3211 = vdwg.mxu0
    %3212 = vmatpush.bf16.msra.mxu0 %v701
    %3213 = vmatpush.bf16.msra.mxu0 %v693
    %3214 = vmatpush.bf16.msra.mxu0 %v685
    %3215 = vmatpush.bf16.msra.mxu0 %v677
    %3216 = vmatpush.bf16.msra.mxu0 %v669
    %3217 = vmatpush.bf16.msra.mxu0 %v661
    %3218 = vmatpush.bf16.msra.mxu0 %v653
    %3219 = vmatpush.bf16.msra.mxu0 %v645
    %3220 = vmatmul.bf16.gmra.mxu0 %v3016
    %v3221 = vpop.f32.mrf.mxu0
    %v3222 = vadd.f32 %v3209, %v3221
    %v3223 = vpop.f32.mrf.mxu0
    %3224 = vdwg.mxu0
    %v3233 = vrot.slane %v3066, 6
    %v3234 = vrot.slane %v3092, 4
    %v3235 = vrot.slane %v3118, 2
    %v3236 = vrot.slane %v3170, 6
    %v3237 = vrot.slane %v3196, 4
    %v3238 = vrot.slane %v3222, 2
    %v3239 = vsel %vm1052, %v3040, %v3233
    %v3240 = vsel %vm1054, %v3234, %v3235
    %v3241 = vsel %vm1056, %v3239, %v3240
    %v3242 = vsel %vm1052, %v3144, %v3236
    %v3243 = vsel %vm1054, %v3237, %v3238
    %v3244 = vsel %vm1056, %v3242, %v3243
    %v3247 = vadd.f32 %v3007, %v3241
    %v3248 = vadd.f32 %v3008, %v3244
    %v3249 = vxor.u32 %v3247, 2147483648
    %v3250 = vmul.f32 %v3249, 1.442695
    %v3251 = vpow.pop %v3250
    %v3252 = vadd.f32 %v3251, 1.0
    %v3253 = vrcp.pop %v3252
    %v3254 = vmul.f32 %v3252, %v3253
    %v3255 = vsub.f32 1.0, %v3254
    %v3256 = vmul.f32 %v3253, %v3255
    %v3257 = vadd.f32 %v3253, %v3256
    %vm3258 = vweird.f32 %v3252
    %vm3259 = vweird.f32 %v3253
    %vm3260 = vmor %vm3258, %vm3259
    %v3261 = vsel %vm3260, %v3253, %v3257
    %v3262 = vand.u32 2147483647, %v3252
    %vm3263 = vcmp.eq.f32.partialorder %v3262, 8.507059e+37
    %v3264 = vand.u32 %v3252, 2147483648
    %v3265 = vor.u32 1.1754944e-38, %v3264
    %v3266 = vsel %vm3263, %v3265, %v3261
    %v3267 = vmul.f32 1.0, %v3266
    %v3269 = vrot.slane %v3247, 4
    %v3271 = vxor.u32 %v3269, 2147483648
    %v3272 = vmul.f32 %v3271, 1.442695
    %v3273 = vpow.pop %v3272
    %v3274 = vadd.f32 %v3273, 1.0
    %v3275 = vrcp.pop %v3274
    %v3276 = vmul.f32 %v3274, %v3275
    %v3277 = vsub.f32 1.0, %v3276
    %v3278 = vmul.f32 %v3275, %v3277
    %v3279 = vadd.f32 %v3275, %v3278
    %vm3280 = vweird.f32 %v3274
    %vm3281 = vweird.f32 %v3275
    %vm3282 = vmor %vm3280, %vm3281
    %v3283 = vsel %vm3282, %v3275, %v3279
    %v3284 = vand.u32 2147483647, %v3274
    %vm3285 = vcmp.eq.f32.partialorder %v3284, 8.507059e+37
    %v3286 = vand.u32 %v3274, 2147483648
    %v3287 = vor.u32 1.1754944e-38, %v3286
    %v3288 = vsel %vm3285, %v3287, %v3283
    %v3289 = vmul.f32 1.0, %v3288
    %v3290 = vtanh.pop %v3248
    %v3292 = vrot.slane %v3248, 4
    %v3294 = vxor.u32 %v3292, 2147483648
    %v3295 = vmul.f32 %v3294, 1.442695
    %v3296 = vpow.pop %v3295
    %v3297 = vadd.f32 %v3296, 1.0
    %v3298 = vrcp.pop %v3297
    %v3299 = vmul.f32 %v3297, %v3298
    %v3300 = vsub.f32 1.0, %v3299
    %v3301 = vmul.f32 %v3298, %v3300
    %v3302 = vadd.f32 %v3298, %v3301
    %vm3303 = vweird.f32 %v3297
    %vm3304 = vweird.f32 %v3298
    %vm3305 = vmor %vm3303, %vm3304
    %v3306 = vsel %vm3305, %v3298, %v3302
    %v3307 = vand.u32 2147483647, %v3297
    %vm3308 = vcmp.eq.f32.partialorder %v3307, 8.507059e+37
    %v3309 = vand.u32 %v3297, 2147483648
    %v3310 = vor.u32 1.1754944e-38, %v3309
    %v3311 = vsel %vm3308, %v3310, %v3306
    %v3312 = vmul.f32 1.0, %v3311
    %v3313 = vmul.f32 %v3289, %v3003
    %v3314 = vmul.f32 %v3267, %v3290
    %v3315 = vadd.f32 %v3313, %v3314
    %v3316 = vtanh.pop %v3315
    %v3317 = vmul.f32 %v3312, %v3316
    %3318 = vst [vmem:[#allocation2] sm:$0xf] %v3317
    %3319 = vst [vmem:[#allocation3] sm:$0xf] %v3315
    // Predicated region
    $region22: #{tpu_custom_call.1} parent=1 // pred_check
      %p3320 = pneg %p44
    $region23: #{tpu_custom_call.1} parent=1 // pred_check_branch
      %3322 = sbr.rel (%p3320) target = $region25
    $region24: #{tpu_custom_call.1} parent=1 // pred_region
      %3323 = vst [vmem:[#allocation9] sm:$0xf] %v3317
    $region25: #{tpu_custom_call.1} parent=1 // pred_fallthru
      _
    // Predicated region
    $region26: #{tpu_custom_call.1} parent=1 // pred_check
      _
    $region27: #{tpu_custom_call.1} parent=1 // pred_check_branch
      %3325 = sbr.rel (0) target = $region29
    $region28: #{tpu_custom_call.1} parent=1 // pred_region
      %3327 = vsyncadd [#allocation6], 0
      %s3329 = sshll.u32 [#allocation9], 4
      %s3330 = int_to_ptr.vmem [resolvable:$true] %s3329
      %s3331 = sshll.u32 %s2, 4
      %s3332 = int_to_ptr.hbm [resolvable:$true] %s3331
      %3334 = dma.vmem_to_hbm [thread:$0]  %s3330, 64, %s3332, [#allocation6]
    $region29: #{tpu_custom_call.1} parent=1 // pred_fallthru
      _
    // Predicated region
    $region30: #{tpu_custom_call.1} parent=1 // pred_check
      _
    $region31: #{tpu_custom_call.1} parent=1 // pred_check_branch
      %3336 = sbr.rel (0) target = $region33
    $region32: #{tpu_custom_call.1} parent=1 // pred_region
      %3338 = dma.done [#allocation6], 64
    $region33: #{tpu_custom_call.1} parent=1 // pred_fallthru
      _
    %3339 = vsyncpa [#allocation5], 1
    %3340 = vsyncpa [#allocation8], 1
    %3341 = vsyncpa [#allocation6], 1

</llo_original>
